<compile_context>
chip_gen: v5e
topology: v5e:2x2
jax: 0.10.0
libtpu: 0.0.40
codegen_flags: <defaults>
</compile_context>

<pallas_src>
import functools
import math

import jax
import jax.numpy as jnp
from jax import lax
from jax.experimental import pallas as pl
from jax.experimental.pallas import tpu as pltpu

EPS = 1e-6
NEG_INF = -1e9


def _vmem_limit_bytes():
    # ~75% of physical VMEM: ~96 MiB on v5e/v6e (128 MiB), ~48 MiB on v7x (64 MiB).
    try:
        info = pltpu.get_tpu_info()
        cap = int(getattr(info, "vmem_capacity_bytes", 128 * 1024 * 1024))
    except Exception:
        cap = 128 * 1024 * 1024
    return max(32 * 1024 * 1024, (cap * 3) // 4)


def _auto_batch_block(B):
    # v7x has 2 TensorCores per chip: give the "parallel" grid >= 2 steps.
    try:
        kind = jax.devices()[0].device_kind.lower()
    except Exception:
        return B
    if "v7" in kind and B % 2 == 0:
        return B // 2
    return B


# ---------------------------------------------------------------------------
# Pallas kernel: one full decoder layer for a batch group (one grid step).
# ---------------------------------------------------------------------------
def decoder_layer_kernel(
        x_ref, enc_ref, smask_ref, tmask_ref,
        al1_ref, be1_ref, al2_ref, be2_ref, al3_ref, be3_ref,
        wqkv1_ref, bqkv1_ref, wo1_ref, bo1_ref,
        wqkv2_ref, bqkv2_ref, wo2_ref, bo2_ref,
        w1_ref, b1_ref, w2_ref, b2_ref,
        alf_ref, bef_ref,
        out_ref, *, heads, ff_chunk, apply_final_norm):
    nb, S, D = x_ref.shape
    S_src = enc_ref.shape[1]
    H = heads
    dk = D // H
    scale = 1.0 / math.sqrt(dk)
    f32 = jnp.float32
    cd = wqkv1_ref.dtype          # MXU compute dtype (float32 or bfloat16 weights)

    x = x_ref[...].astype(f32)    # residual stream, always f32

    def norm_f(t, a_ref, b_ref):
        # Tutorial Norm: alpha*(x-mean)/(std+eps)+bias, unbiased std.
        d = t.shape[-1]
        mean = jnp.mean(t, axis=-1, keepdims=True)
        var = jnp.sum((t - mean) ** 2, axis=-1, keepdims=True) * (1.0 / (d - 1))
        inv = pl.reciprocal(jnp.sqrt(var) + EPS, approx=True)     # EUP, reduced tensor only
        return a_ref[...].astype(f32) * ((t - mean) * inv) + b_ref[...].astype(f32)

    def softmax_last(s):
        m = jnp.max(s, axis=-1, keepdims=True)
        p = jnp.exp(s - m)
        return p * pl.reciprocal(jnp.sum(p, axis=-1, keepdims=True), approx=True)

    def split_heads(t, Sx):
        # (nb*Sx, D) -> (nb*H, Sx, dk), head-major.  Slices are lane-tile aligned
        # when dk % 128 == 0; the stack axis is major, so no minor-dim relayout.
        t3 = t.reshape(nb, Sx, D)
        th = jnp.stack([t3[:, :, h * dk:(h + 1) * dk] for h in range(H)], axis=1)
        return th.reshape(nb * H, Sx, dk)

    def merge_heads(t, Sq):
        # (nb*H, Sq, dk) -> (nb*Sq, D)
        t4 = t.reshape(nb, H, Sq, dk)
        return jnp.concatenate([t4[:, h] for h in range(H)], axis=-1).reshape(nb * Sq, D)

    def mha(qf, kf, vf, bias, wo_ref, bo_ref, Sq, Sk):
        # qf: (nb*Sq, D) f32; kf/vf: (nb*Sk, D) f32; bias: (nb, Sq, Sk) additive, f32.
        qh = split_heads(qf.astype(cd), Sq)                     # (nb*H, Sq, dk)
        kh = split_heads(kf.astype(cd), Sk)
        vh = split_heads(vf.astype(cd), Sk)
        s = jnp.einsum("bqd,bkd->bqk", qh, kh,
                       preferred_element_type=f32) * scale      # (nb*H, Sq, Sk)
        s = s.reshape(nb, H, Sq, Sk) + bias[:, None, :, :]      # hoisted mask bias
        p = softmax_last(s).reshape(nb * H, Sq, Sk)
        o = jnp.einsum("bqk,bkd->bqd", p.astype(cd), vh,
                       preferred_element_type=f32)              # (nb*H, Sq, dk)
        of = merge_heads(o.astype(cd), Sq)                      # (nb*Sq, D)
        # Single full-depth (K = D) output projection.
        return (jnp.dot(of, wo_ref[...], preferred_element_type=f32)
                + bo_ref[...].astype(f32))

    # ---- Self-attention block (pre-norm + residual) ---------------------------
    tbias = (tmask_ref[...].astype(f32) - 1.0) * 1e9            # 1 -> 0, 0 -> -1e9
    x2 = norm_f(x, al1_ref, be1_ref)
    x2f = x2.reshape(nb * S, D).astype(cd)
    qkv = (jnp.dot(x2f, wqkv1_ref[...], preferred_element_type=f32)
           + bqkv1_ref[...].astype(f32))                        # fused QKV: (M, 3D)
    x = x + mha(qkv[:, 0:D], qkv[:, D:2 * D], qkv[:, 2 * D:3 * D],
                tbias, wo1_ref, bo1_ref, S, S).reshape(nb, S, D)

    # ---- Cross-attention block -------------------------------------------------
    sbias = (smask_ref[...].astype(f32) - 1.0) * 1e9
    x2 = norm_f(x, al2_ref, be2_ref)
    x2f = x2.reshape(nb * S, D).astype(cd)
    encf = enc_ref[...].reshape(nb * S_src, D).astype(cd)
    q = (jnp.dot(x2f, wqkv2_ref[:, 0:D], preferred_element_type=f32)
         + bqkv2_ref[:, 0:D].astype(f32))
    kv = (jnp.dot(encf, wqkv2_ref[:, D:3 * D], preferred_element_type=f32)
          + bqkv2_ref[:, D:3 * D].astype(f32))                  # fused K/V projection
    x = x + mha(q, kv[:, 0:D], kv[:, D:2 * D],
                sbias, wo2_ref, bo2_ref, S, S_src).reshape(nb, S, D)

    # ---- Feed-forward block, chunked along S so `hid` stays bounded -------------
    # Residual stream is staged in the output VMEM block; each chunk is read back,
    # normalized, run through Linear->ReLU->Linear, residual-added (and final-Norm'ed
    # when this is the last layer), then written back in place.
    out_ref[...] = x.astype(out_ref.dtype)
    n_chunks = S // ff_chunk

    def ff_body(c, carry):
        s0 = c * ff_chunk
        if ff_chunk % 8 == 0:
            s0 = pl.multiple_of(s0, 8)
        xc = out_ref[:, pl.ds(s0, ff_chunk), :]                 # (nb, ff_chunk, D) f32
        x3c = norm_f(xc, al3_ref, be3_ref)
        x3f = x3c.reshape(nb * ff_chunk, D).astype(cd)
        hid = jnp.maximum(
            jnp.dot(x3f, w1_ref[...], preferred_element_type=f32)
            + b1_ref[...].astype(f32), 0.0)
        ff = (jnp.dot(hid.astype(cd), w2_ref[...], preferred_element_type=f32)
              + b2_ref[...].astype(f32))
        y = xc + ff.reshape(nb, ff_chunk, D)
        if apply_final_norm:                                    # fused final Decoder Norm
            y = norm_f(y, alf_ref, bef_ref)
        out_ref[:, pl.ds(s0, ff_chunk), :] = y.astype(out_ref.dtype)
        return carry

    lax.fori_loop(0, n_chunks, ff_body, 0)


# ---------------------------------------------------------------------------
# Wrapper for one decoder layer (optionally fusing the final Decoder Norm).
# ---------------------------------------------------------------------------
def decoder_layer(x, e_outputs, src_mask, trg_mask, params, heads, *,
                  batch_block=None, ff_seq_chunk=128, final_norm=None,
                  vmem_limit=None):
    B, S, D = x.shape
    S_src = e_outputs.shape[1]
    d_ff = params["w1"].shape[1]
    assert D % heads == 0

    nb = _auto_batch_block(B) if batch_block is None else batch_block
    assert B % nb == 0
    ff_chunk = ff_seq_chunk if (0 < ff_seq_chunk <= S and S % ff_seq_chunk == 0) else S

    x = x.astype(jnp.float32)
    e_outputs = e_outputs.astype(jnp.float32)
    src_mask = (src_mask != 0).astype(jnp.int8)                 # 4x less mask DMA than f32
    trg_mask = (trg_mask != 0).astype(jnp.int8)

    apply_final = final_norm is not None
    if final_norm is None:
        fa = jnp.ones((1, D), params["wo1"].dtype)
        fb = jnp.zeros((1, D), params["wo1"].dtype)
    else:
        fa, fb = final_norm

    def rep(shape):
        # Replicated (per-grid-step constant) block at the origin; the constant
        # index_map means the block is never re-fetched across grid steps.
        n = len(shape)
        return pl.BlockSpec(shape, lambda g, _n=n: (0,) * _n)

    in_specs = [
        pl.BlockSpec((nb, S, D), lambda g: (g, 0, 0)),          # x
        pl.BlockSpec((nb, S_src, D), lambda g: (g, 0, 0)),      # e_outputs
        pl.BlockSpec((nb, S, S_src), lambda g: (g, 0, 0)),      # src_mask (int8)
        pl.BlockSpec((nb, S, S), lambda g: (g, 0, 0)),          # trg_mask (int8)
        rep((1, D)), rep((1, D)),                               # norm_1 alpha/bias
        rep((1, D)), rep((1, D)),                               # norm_2 alpha/bias
        rep((1, D)), rep((1, D)),                               # norm_3 alpha/bias
        rep((D, 3 * D)), rep((1, 3 * D)), rep((D, D)), rep((1, D)),   # attn_1
        rep((D, 3 * D)), rep((1, 3 * D)), rep((D, D)), rep((1, D)),   # attn_2
        rep((D, d_ff)), rep((1, d_ff)), rep((d_ff, D)), rep((1, D)),  # feed-forward
        rep((1, D)), rep((1, D)),                               # final Norm alpha/bias
    ]

    kernel = functools.partial(decoder_layer_kernel, heads=heads,
                               ff_chunk=ff_chunk, apply_final_norm=apply_final)
    return pl.pallas_call(
        kernel,
        out_shape=jax.ShapeDtypeStruct((B, S, D), jnp.float32),
        grid_spec=pltpu.PrefetchScalarGridSpec(
            num_scalar_prefetch=0,
            grid=(B // nb,),
            in_specs=in_specs,
            out_specs=pl.BlockSpec((nb, S, D), lambda g: (g, 0, 0)),
        ),
        compiler_params=pltpu.CompilerParams(
            dimension_semantics=("parallel",),
            vmem_limit_bytes=vmem_limit if vmem_limit else _vmem_limit_bytes()),
    )(x, e_outputs, src_mask, trg_mask,
      params["alpha1"], params["bias1"],
      params["alpha2"], params["bias2"],
      params["alpha3"], params["bias3"],
      params["wqkv1"], params["bqkv1"], params["wo1"], params["bo1"],
      params["wqkv2"], params["bqkv2"], params["wo2"], params["bo2"],
      params["w1"], params["b1"], params["w2"], params["b2"],
      fa, fb)


def decoder_forward(trg_ids, e_outputs, src_mask, trg_mask, params, heads, *,
                    batch_block=None, ff_seq_chunk=128):
    """Full Decoder forward: embed -> positional encoding -> N layers -> Norm (fused)."""
    D = params["embed"].shape[1]
    S = trg_ids.shape[1]
    assert len(params["layers"]) >= 1
    # TODO(synk): the nn.Embedding vocab gather stays in plain JAX; a dynamic vocab
    # gather has no clean static-BlockSpec expression and is negligible vs. layer compute.
    x = jnp.take(params["embed"], trg_ids, axis=0) * math.sqrt(D)
    x = x + params["pe"][None, :S, :]

    vmem_limit = _vmem_limit_bytes()
    n = len(params["layers"])
    for i, lp in enumerate(params["layers"]):
        is_last = (i == n - 1)
        x = decoder_layer(
            x, e_outputs, src_mask, trg_mask, lp, heads,
            batch_block=batch_block, ff_seq_chunk=ff_seq_chunk,
            final_norm=(params["norm_alpha"], params["norm_bias"]) if is_last else None,
            vmem_limit=vmem_limit)
    return x


# ---------------------------------------------------------------------------
# Deterministic synthetic parameters.
# ---------------------------------------------------------------------------
def make_pe(max_len, d_model):
    pos = jnp.arange(max_len, dtype=jnp.float32)[:, None]
    dim = jnp.arange(d_model, dtype=jnp.float32)[None, :]
    angle = pos / jnp.power(10000.0, (2.0 * jnp.floor(dim / 2.0)) / d_model)
    even = (jnp.arange(d_model) % 2 == 0)[None, :]
    return jnp.where(even, jnp.sin(angle), jnp.cos(angle))


def init_params(key, vocab_size, d_model, d_ff, n_layers, max_len):
    keys = jax.random.split(key, n_layers + 1)

    def layer_params(k):
        ks = jax.random.split(k, 18)
        w = lambda kk, shape: jax.random.normal(kk, shape, jnp.float32) * 0.02
        return dict(
            alpha1=1.0 + w(ks[0], (1, d_model)), bias1=w(ks[1], (1, d_model)),
            alpha2=1.0 + w(ks[2], (1, d_model)), bias2=w(ks[3], (1, d_model)),
            alpha3=1.0 + w(ks[4], (1, d_model)), bias3=w(ks[5], (1, d_model)),
            wqkv1=w(ks[6], (d_model, 3 * d_model)), bqkv1=w(ks[7], (1, 3 * d_model)),
            wo1=w(ks[8], (d_model, d_model)), bo1=w(ks[9], (1, d_model)),
            wqkv2=w(ks[10], (d_model, 3 * d_model)), bqkv2=w(ks[11], (1, 3 * d_model)),
            wo2=w(ks[12], (d_model, d_model)), bo2=w(ks[13], (1, d_model)),
            w1=w(ks[14], (d_model, d_ff)), b1=w(ks[15], (1, d_ff)),
            w2=w(ks[16], (d_ff, d_model)), b2=w(ks[17], (1, d_model)),
        )

    return dict(
        embed=jax.random.normal(keys[0], (vocab_size, d_model), jnp.float32) * 0.1,
        pe=make_pe(max_len, d_model),
        layers=[layer_params(k) for k in keys[1:]],
        norm_alpha=jnp.ones((1, d_model), jnp.float32),
        norm_bias=jnp.zeros((1, d_model), jnp.float32),
    )


# ---------------------------------------------------------------------------
# Pure-JAX reference (mirrors the PyTorch forward, eval mode).
# ---------------------------------------------------------------------------
def reference_decoder(trg_ids, e_outputs, src_mask, trg_mask, params, heads):
    D = params["embed"].shape[1]
    B, S = trg_ids.shape

    def norm(t, a, b):
        mean = jnp.mean(t, axis=-1, keepdims=True)
        var = jnp.sum((t - mean) ** 2, axis=-1, keepdims=True) / (D - 1)
        return a * (t - mean) / (jnp.sqrt(var) + EPS) + b

    def mha(q_in, k_in, v_in, mask, wqkv, bqkv, wo, bo):
        d_k = D // heads
        q = q_in @ wqkv[:, :D] + bqkv[:, :D]
        k = k_in @ wqkv[:, D:2 * D] + bqkv[:, D:2 * D]
        v = v_in @ wqkv[:, 2 * D:] + bqkv[:, 2 * D:]
        qh = q.reshape(B, -1, heads, d_k).transpose(0, 2, 1, 3)
        kh = k.reshape(B, -1, heads, d_k).transpose(0, 2, 1, 3)
        vh = v.reshape(B, -1, heads, d_k).transpose(0, 2, 1, 3)
        scores = jnp.einsum("bhqd,bhkd->bhqk", qh, kh) / math.sqrt(d_k)
        scores = jnp.where(mask[:, None, :, :] == 0.0, NEG_INF, scores)
        p = jax.nn.softmax(scores, axis=-1)
        out = jnp.einsum("bhqk,bhkd->bhqd", p, vh)
        out = out.transpose(0, 2, 1, 3).reshape(B, -1, D)
        return out @ wo + bo

    x = jnp.take(params["embed"], trg_ids, axis=0) * math.sqrt(D)
    x = x + params["pe"][None, :S, :]
    for lp in params["layers"]:
        x2 = norm(x, lp["alpha1"], lp["bias1"])
        x = x + mha(x2, x2, x2, trg_mask,
                    lp["wqkv1"], lp["bqkv1"], lp["wo1"], lp["bo1"])
        x2 = norm(x, lp["alpha2"], lp["bias2"])
        x = x + mha(x2, e_outputs, e_outputs, src_mask,
                    lp["wqkv2"], lp["bqkv2"], lp["wo2"], lp["bo2"])
        x2 = norm(x, lp["alpha3"], lp["bias3"])
        hid = jnp.maximum(x2 @ lp["w1"] + lp["b1"], 0.0)
        x = x + hid @ lp["w2"] + lp["b2"]
    return norm(x, params["norm_alpha"], params["norm_bias"])


if __name__ == "__main__":
    # head_dim = D / heads = 128 -> lane-aligned head layout inside the kernel.
    B, S, S_src = 2, 16, 16
    D, heads, d_ff = 256, 2, 512
    vocab, n_layers, max_len = 64, 2, 32

    key = jax.random.PRNGKey(0)
    kt, ke, kp = jax.random.split(key, 3)
    trg_ids = jax.random.randint(kt, (B, S), 0, vocab)
    e_outputs = jax.random.normal(ke, (B, S_src, D), jnp.float32)

    # Causal target mask; source mask hides the last 3 source positions of batch 1.
    trg_mask = jnp.broadcast_to(jnp.tril(jnp.ones((S, S), jnp.float32)), (B, S, S))
    src_mask = jnp.ones((B, S, S_src), jnp.float32).at[1, :, -3:].set(0.0)

    params = init_params(kp, vocab, D, d_ff, n_layers, max_len)
    ref = reference_decoder(trg_ids, e_outputs, src_mask, trg_mask, params, heads)

    # f32-weight path.  batch_block=1 exercises the multi-step "parallel" grid
    # (the path that feeds both v7x TensorCores); ff_seq_chunk=8 exercises the
    # chunked feed-forward loop (2 chunks).  Tolerance allows for the approximate
    # EUP reciprocals in the norms / softmax denominators.
    out = decoder_forward(trg_ids, e_outputs, src_mask, trg_mask, params, heads,
                          batch_block=1, ff_seq_chunk=8)
    out = jax.block_until_ready(out)
    assert out.shape == (B, S, D)
    err = float(jnp.max(jnp.abs(out - ref)))
    assert jnp.allclose(out, ref, atol=1e-2, rtol=1e-2), f"f32 mismatch, max abs err={err}"

    # bf16-weight path (v6e/v7x MXU fast path, f32 accumulation): looser tolerance
    # for bf16 parameter/operand rounding.
    params_bf16 = jax.tree_util.tree_map(
        lambda a: a.astype(jnp.bfloat16) if a.dtype == jnp.float32 else a, params)
    out_bf16 = decoder_forward(trg_ids, e_outputs, src_mask, trg_mask,
                               params_bf16, heads, ff_seq_chunk=8)
    out_bf16 = jax.block_until_ready(out_bf16)
    err_bf = float(jnp.max(jnp.abs(out_bf16 - ref)))
    assert jnp.allclose(out_bf16, ref, atol=8e-2, rtol=8e-2), \
        f"bf16 mismatch, max abs err={err_bf}"

    print("KERNEL_OK")
</pallas_src>

<mosaic_0001>
module attributes {stable_mosaic.version = 11 : i64} {
  func.func @decoder_layer_kernel(%arg0: i32, %arg1: memref<1x16x256xf32, #tpu.memory_space<vmem>>, %arg2: memref<1x16x256xf32, #tpu.memory_space<vmem>>, %arg3: memref<1x16x16xi8, #tpu.memory_space<vmem>>, %arg4: memref<1x16x16xi8, #tpu.memory_space<vmem>>, %arg5: memref<1x256xf32, #tpu.memory_space<vmem>>, %arg6: memref<1x256xf32, #tpu.memory_space<vmem>>, %arg7: memref<1x256xf32, #tpu.memory_space<vmem>>, %arg8: memref<1x256xf32, #tpu.memory_space<vmem>>, %arg9: memref<1x256xf32, #tpu.memory_space<vmem>>, %arg10: memref<1x256xf32, #tpu.memory_space<vmem>>, %arg11: memref<256x768xf32, #tpu.memory_space<vmem>>, %arg12: memref<1x768xf32, #tpu.memory_space<vmem>>, %arg13: memref<256x256xf32, #tpu.memory_space<vmem>>, %arg14: memref<1x256xf32, #tpu.memory_space<vmem>>, %arg15: memref<256x768xf32, #tpu.memory_space<vmem>>, %arg16: memref<1x768xf32, #tpu.memory_space<vmem>>, %arg17: memref<256x256xf32, #tpu.memory_space<vmem>>, %arg18: memref<1x256xf32, #tpu.memory_space<vmem>>, %arg19: memref<256x512xf32, #tpu.memory_space<vmem>>, %arg20: memref<1x512xf32, #tpu.memory_space<vmem>>, %arg21: memref<512x256xf32, #tpu.memory_space<vmem>>, %arg22: memref<1x256xf32, #tpu.memory_space<vmem>>, %arg23: memref<1x256xf32, #tpu.memory_space<vmem>>, %arg24: memref<1x256xf32, #tpu.memory_space<vmem>>, %arg25: memref<1x16x256xf32, #tpu.memory_space<vmem>>) attributes {dimension_semantics = [#tpu.dimension_semantics<parallel>], iteration_bounds = array<i64: 2>, scalar_prefetch = 0 : i64, scratch_operands = 0 : i64, tpu.core_type = #tpu.core_type<tc>, window_params = [{transform_indices = @transform_0, window_bounds = array<i64: 1, 16, 256>}, {transform_indices = @transform_1, window_bounds = array<i64: 1, 16, 256>}, {transform_indices = @transform_2, window_bounds = array<i64: 1, 16, 16>}, {transform_indices = @transform_3, window_bounds = array<i64: 1, 16, 16>}, {pipeline_mode = #tpu.pipeline_mode<synchronous>, transform_indices = @transform_4, window_bounds = array<i64: 1, 256>}, {pipeline_mode = #tpu.pipeline_mode<synchronous>, transform_indices = @transform_5, window_bounds = array<i64: 1, 256>}, {pipeline_mode = #tpu.pipeline_mode<synchronous>, transform_indices = @transform_6, window_bounds = array<i64: 1, 256>}, {pipeline_mode = #tpu.pipeline_mode<synchronous>, transform_indices = @transform_7, window_bounds = array<i64: 1, 256>}, {pipeline_mode = #tpu.pipeline_mode<synchronous>, transform_indices = @transform_8, window_bounds = array<i64: 1, 256>}, {pipeline_mode = #tpu.pipeline_mode<synchronous>, transform_indices = @transform_9, window_bounds = array<i64: 1, 256>}, {pipeline_mode = #tpu.pipeline_mode<synchronous>, transform_indices = @transform_10, window_bounds = array<i64: 256, 768>}, {pipeline_mode = #tpu.pipeline_mode<synchronous>, transform_indices = @transform_11, window_bounds = array<i64: 1, 768>}, {pipeline_mode = #tpu.pipeline_mode<synchronous>, transform_indices = @transform_12, window_bounds = array<i64: 256, 256>}, {pipeline_mode = #tpu.pipeline_mode<synchronous>, transform_indices = @transform_13, window_bounds = array<i64: 1, 256>}, {pipeline_mode = #tpu.pipeline_mode<synchronous>, transform_indices = @transform_14, window_bounds = array<i64: 256, 768>}, {pipeline_mode = #tpu.pipeline_mode<synchronous>, transform_indices = @transform_15, window_bounds = array<i64: 1, 768>}, {pipeline_mode = #tpu.pipeline_mode<synchronous>, transform_indices = @transform_16, window_bounds = array<i64: 256, 256>}, {pipeline_mode = #tpu.pipeline_mode<synchronous>, transform_indices = @transform_17, window_bounds = array<i64: 1, 256>}, {pipeline_mode = #tpu.pipeline_mode<synchronous>, transform_indices = @transform_18, window_bounds = array<i64: 256, 512>}, {pipeline_mode = #tpu.pipeline_mode<synchronous>, transform_indices = @transform_19, window_bounds = array<i64: 1, 512>}, {pipeline_mode = #tpu.pipeline_mode<synchronous>, transform_indices = @transform_20, window_bounds = array<i64: 512, 256>}, {pipeline_mode = #tpu.pipeline_mode<synchronous>, transform_indices = @transform_21, window_bounds = array<i64: 1, 256>}, {pipeline_mode = #tpu.pipeline_mode<synchronous>, transform_indices = @transform_22, window_bounds = array<i64: 1, 256>}, {pipeline_mode = #tpu.pipeline_mode<synchronous>, transform_indices = @transform_23, window_bounds = array<i64: 1, 256>}, {transform_indices = @transform_24, window_bounds = array<i64: 1, 16, 256>}]} {
    %c0 = arith.constant 0 : index
    %c0_0 = arith.constant 0 : index
    %c0_1 = arith.constant 0 : index
    %0 = vector.load %arg1[%c0, %c0_0, %c0_1] : memref<1x16x256xf32, #tpu.memory_space<vmem>>, vector<1x16x256xf32>
    %c0_2 = arith.constant 0 : index
    %c0_3 = arith.constant 0 : index
    %c0_4 = arith.constant 0 : index
    %1 = vector.load %arg4[%c0_2, %c0_3, %c0_4] : memref<1x16x16xi8, #tpu.memory_space<vmem>>, vector<1x16x16xi8>
    %2 = arith.sitofp %1 : vector<1x16x16xi8> to vector<1x16x16xf32>
    %cst = arith.constant 1.000000e+00 : f32
    %3 = vector.broadcast %cst : f32 to vector<1x16x16xf32>
    %4 = arith.subf %2, %3 : vector<1x16x16xf32>
    %cst_5 = arith.constant 1.000000e+09 : f32
    %5 = vector.broadcast %cst_5 : f32 to vector<1x16x16xf32>
    %6 = arith.mulf %4, %5 : vector<1x16x16xf32>
    %cst_6 = arith.constant dense<0.000000e+00> : vector<1x16xf32>
    %7 = vector.multi_reduction <add>, %0, %cst_6 [2] : vector<1x16x256xf32> to vector<1x16xf32>
    %8 = vector.shape_cast %7 : vector<1x16xf32> to vector<1x16x1xf32>
    %cst_7 = arith.constant 2.560000e+02 : f32
    %9 = vector.broadcast %cst_7 : f32 to vector<1x16x1xf32>
    %10 = arith.divf %8, %9 : vector<1x16x1xf32>
    %11 = vector.broadcast %10 : vector<1x16x1xf32> to vector<1x16x256xf32>
    %12 = arith.subf %0, %11 : vector<1x16x256xf32>
    %13 = arith.mulf %12, %12 : vector<1x16x256xf32>
    %cst_8 = arith.constant dense<0.000000e+00> : vector<1x16xf32>
    %14 = vector.multi_reduction <add>, %13, %cst_8 [2] : vector<1x16x256xf32> to vector<1x16xf32>
    %15 = vector.shape_cast %14 : vector<1x16xf32> to vector<1x16x1xf32>
    %cst_9 = arith.constant 0.00392156886 : f32
    %16 = vector.broadcast %cst_9 : f32 to vector<1x16x1xf32>
    %17 = arith.mulf %15, %16 : vector<1x16x1xf32>
    %18 = math.sqrt %17 : vector<1x16x1xf32>
    %cst_10 = arith.constant 9.99999997E-7 : f32
    %19 = vector.broadcast %cst_10 : f32 to vector<1x16x1xf32>
    %20 = arith.addf %18, %19 : vector<1x16x1xf32>
    %21 = tpu.reciprocal %20 {approx = true} : vector<1x16x1xf32> -> vector<1x16x1xf32>
    %c0_11 = arith.constant 0 : index
    %c0_12 = arith.constant 0 : index
    %22 = vector.load %arg5[%c0_11, %c0_12] : memref<1x256xf32, #tpu.memory_space<vmem>>, vector<1x256xf32>
    %23 = vector.broadcast %10 : vector<1x16x1xf32> to vector<1x16x256xf32>
    %24 = arith.subf %0, %23 : vector<1x16x256xf32>
    %25 = vector.broadcast %21 : vector<1x16x1xf32> to vector<1x16x256xf32>
    %26 = arith.mulf %24, %25 : vector<1x16x256xf32>
    %27 = vector.shape_cast %22 : vector<1x256xf32> to vector<1x1x256xf32>
    %28 = vector.broadcast %27 : vector<1x1x256xf32> to vector<1x16x256xf32>
    %29 = arith.mulf %28, %26 : vector<1x16x256xf32>
    %c0_13 = arith.constant 0 : index
    %c0_14 = arith.constant 0 : index
    %30 = vector.load %arg6[%c0_13, %c0_14] : memref<1x256xf32, #tpu.memory_space<vmem>>, vector<1x256xf32>
    %31 = vector.shape_cast %30 : vector<1x256xf32> to vector<1x1x256xf32>
    %32 = vector.broadcast %31 : vector<1x1x256xf32> to vector<1x16x256xf32>
    %33 = arith.addf %29, %32 : vector<1x16x256xf32>
    %34 = vector.shape_cast %33 : vector<1x16x256xf32> to vector<16x256xf32>
    %c0_15 = arith.constant 0 : index
    %c0_16 = arith.constant 0 : index
    %35 = vector.load %arg11[%c0_15, %c0_16] : memref<256x768xf32, #tpu.memory_space<vmem>>, vector<256x768xf32>
    %cst_17 = arith.constant dense<0.000000e+00> : vector<16x768xf32>
    %36 = tpu.matmul %34, %35, %cst_17 {dimension_numbers = #tpu.dot_dimension_numbers<[1], [0], [0], [1], [0, 0, 1, 1], [], []>} : vector<16x256xf32>, vector<256x768xf32>, vector<16x768xf32> -> vector<16x768xf32>
    %c0_18 = arith.constant 0 : index
    %c0_19 = arith.constant 0 : index
    %37 = vector.load %arg12[%c0_18, %c0_19] : memref<1x768xf32, #tpu.memory_space<vmem>>, vector<1x768xf32>
    %38 = vector.broadcast %37 : vector<1x768xf32> to vector<16x768xf32>
    %39 = arith.addf %36, %38 : vector<16x768xf32>
    %40 = vector.extract_strided_slice %39 {offsets = [0, 0], sizes = [16, 256], strides = [1, 1]} : vector<16x768xf32> to vector<16x256xf32>
    %41 = vector.extract_strided_slice %39 {offsets = [0, 256], sizes = [16, 256], strides = [1, 1]} : vector<16x768xf32> to vector<16x256xf32>
    %42 = vector.extract_strided_slice %39 {offsets = [0, 512], sizes = [16, 256], strides = [1, 1]} : vector<16x768xf32> to vector<16x256xf32>
    %43 = vector.shape_cast %40 : vector<16x256xf32> to vector<1x16x256xf32>
    %44 = vector.extract_strided_slice %43 {offsets = [0, 0, 0], sizes = [1, 16, 128], strides = [1, 1, 1]} : vector<1x16x256xf32> to vector<1x16x128xf32>
    %45 = vector.extract_strided_slice %43 {offsets = [0, 0, 128], sizes = [1, 16, 128], strides = [1, 1, 1]} : vector<1x16x256xf32> to vector<1x16x128xf32>
    %46 = vector.shape_cast %44 : vector<1x16x128xf32> to vector<1x1x16x128xf32>
    %47 = vector.shape_cast %45 : vector<1x16x128xf32> to vector<1x1x16x128xf32>
    %48 = tpu.concatenate %46, %47 in 1 : vector<1x1x16x128xf32>, vector<1x1x16x128xf32> -> vector<1x2x16x128xf32>
    %49 = vector.shape_cast %48 : vector<1x2x16x128xf32> to vector<2x16x128xf32>
    %50 = vector.shape_cast %41 : vector<16x256xf32> to vector<1x16x256xf32>
    %51 = vector.extract_strided_slice %50 {offsets = [0, 0, 0], sizes = [1, 16, 128], strides = [1, 1, 1]} : vector<1x16x256xf32> to vector<1x16x128xf32>
    %52 = vector.extract_strided_slice %50 {offsets = [0, 0, 128], sizes = [1, 16, 128], strides = [1, 1, 1]} : vector<1x16x256xf32> to vector<1x16x128xf32>
    %53 = vector.shape_cast %51 : vector<1x16x128xf32> to vector<1x1x16x128xf32>
    %54 = vector.shape_cast %52 : vector<1x16x128xf32> to vector<1x1x16x128xf32>
    %55 = tpu.concatenate %53, %54 in 1 : vector<1x1x16x128xf32>, vector<1x1x16x128xf32> -> vector<1x2x16x128xf32>
    %56 = vector.shape_cast %55 : vector<1x2x16x128xf32> to vector<2x16x128xf32>
    %57 = vector.shape_cast %42 : vector<16x256xf32> to vector<1x16x256xf32>
    %58 = vector.extract_strided_slice %57 {offsets = [0, 0, 0], sizes = [1, 16, 128], strides = [1, 1, 1]} : vector<1x16x256xf32> to vector<1x16x128xf32>
    %59 = vector.extract_strided_slice %57 {offsets = [0, 0, 128], sizes = [1, 16, 128], strides = [1, 1, 1]} : vector<1x16x256xf32> to vector<1x16x128xf32>
    %60 = vector.shape_cast %58 : vector<1x16x128xf32> to vector<1x1x16x128xf32>
    %61 = vector.shape_cast %59 : vector<1x16x128xf32> to vector<1x1x16x128xf32>
    %62 = tpu.concatenate %60, %61 in 1 : vector<1x1x16x128xf32>, vector<1x1x16x128xf32> -> vector<1x2x16x128xf32>
    %63 = vector.shape_cast %62 : vector<1x2x16x128xf32> to vector<2x16x128xf32>
    "tpu.trace_start"() <{level = 10 : i32, message = "bqd,bkd->bqk"}> : () -> ()
    %cst_20 = arith.constant dense<0.000000e+00> : vector<2x16x16xf32>
    %64 = tpu.matmul %49, %56, %cst_20 {dimension_numbers = #tpu.dot_dimension_numbers<[2], [2], [1], [1], [0, 0, 0, 1, 1, 1], [0], [0]>} : vector<2x16x128xf32>, vector<2x16x128xf32>, vector<2x16x16xf32> -> vector<2x16x16xf32>
    "tpu.trace_stop"() : () -> ()
    %cst_21 = arith.constant 0.0883883461 : f32
    %65 = vector.broadcast %cst_21 : f32 to vector<2x16x16xf32>
    %66 = arith.mulf %64, %65 : vector<2x16x16xf32>
    %67 = vector.shape_cast %66 : vector<2x16x16xf32> to vector<1x2x16x16xf32>
    %68 = vector.shape_cast %6 : vector<1x16x16xf32> to vector<1x1x16x16xf32>
    %69 = vector.broadcast %68 : vector<1x1x16x16xf32> to vector<1x2x16x16xf32>
    %70 = arith.addf %67, %69 : vector<1x2x16x16xf32>
    %cst_22 = arith.constant dense<0xFF800000> : vector<1x2x16xf32>
    %71 = vector.multi_reduction <maximumf>, %70, %cst_22 [3] : vector<1x2x16x16xf32> to vector<1x2x16xf32>
    %72 = vector.shape_cast %71 : vector<1x2x16xf32> to vector<1x2x16x1xf32>
    %73 = vector.broadcast %72 : vector<1x2x16x1xf32> to vector<1x2x16x16xf32>
    %74 = arith.subf %70, %73 : vector<1x2x16x16xf32>
    %75 = math.exp %74 : vector<1x2x16x16xf32>
    %cst_23 = arith.constant dense<0.000000e+00> : vector<1x2x16xf32>
    %76 = vector.multi_reduction <add>, %75, %cst_23 [3] : vector<1x2x16x16xf32> to vector<1x2x16xf32>
    %77 = vector.shape_cast %76 : vector<1x2x16xf32> to vector<1x2x16x1xf32>
    %78 = tpu.reciprocal %77 {approx = true} : vector<1x2x16x1xf32> -> vector<1x2x16x1xf32>
    %79 = vector.broadcast %78 : vector<1x2x16x1xf32> to vector<1x2x16x16xf32>
    %80 = arith.mulf %75, %79 : vector<1x2x16x16xf32>
    %81 = vector.shape_cast %80 : vector<1x2x16x16xf32> to vector<2x16x16xf32>
    "tpu.trace_start"() <{level = 10 : i32, message = "bqk,bkd->bqd"}> : () -> ()
    %cst_24 = arith.constant dense<0.000000e+00> : vector<2x16x128xf32>
    %82 = tpu.matmul %81, %63, %cst_24 {dimension_numbers = #tpu.dot_dimension_numbers<[2], [1], [1], [2], [0, 0, 0, 1, 1, 2], [0], [0]>} : vector<2x16x16xf32>, vector<2x16x128xf32>, vector<2x16x128xf32> -> vector<2x16x128xf32>
    "tpu.trace_stop"() : () -> ()
    %83 = vector.shape_cast %82 : vector<2x16x128xf32> to vector<1x2x16x128xf32>
    %84 = vector.extract_strided_slice %83 {offsets = [0, 0, 0, 0], sizes = [1, 1, 16, 128], strides = [1, 1, 1, 1]} : vector<1x2x16x128xf32> to vector<1x1x16x128xf32>
    %85 = vector.shape_cast %84 : vector<1x1x16x128xf32> to vector<1x16x128xf32>
    %86 = vector.extract_strided_slice %83 {offsets = [0, 1, 0, 0], sizes = [1, 1, 16, 128], strides = [1, 1, 1, 1]} : vector<1x2x16x128xf32> to vector<1x1x16x128xf32>
    %87 = vector.shape_cast %86 : vector<1x1x16x128xf32> to vector<1x16x128xf32>
    %88 = tpu.concatenate %85, %87 in 2 : vector<1x16x128xf32>, vector<1x16x128xf32> -> vector<1x16x256xf32>
    %89 = vector.shape_cast %88 : vector<1x16x256xf32> to vector<16x256xf32>
    %c0_25 = arith.constant 0 : index
    %c0_26 = arith.constant 0 : index
    %90 = vector.load %arg13[%c0_25, %c0_26] : memref<256x256xf32, #tpu.memory_space<vmem>>, vector<256x256xf32>
    %cst_27 = arith.constant dense<0.000000e+00> : vector<16x256xf32>
    %91 = tpu.matmul %89, %90, %cst_27 {dimension_numbers = #tpu.dot_dimension_numbers<[1], [0], [0], [1], [0, 0, 1, 1], [], []>} : vector<16x256xf32>, vector<256x256xf32>, vector<16x256xf32> -> vector<16x256xf32>
    %c0_28 = arith.constant 0 : index
    %c0_29 = arith.constant 0 : index
    %92 = vector.load %arg14[%c0_28, %c0_29] : memref<1x256xf32, #tpu.memory_space<vmem>>, vector<1x256xf32>
    %93 = vector.broadcast %92 : vector<1x256xf32> to vector<16x256xf32>
    %94 = arith.addf %91, %93 : vector<16x256xf32>
    %95 = vector.shape_cast %94 : vector<16x256xf32> to vector<1x16x256xf32>
    %96 = arith.addf %0, %95 : vector<1x16x256xf32>
    %c0_30 = arith.constant 0 : index
    %c0_31 = arith.constant 0 : index
    %c0_32 = arith.constant 0 : index
    %97 = vector.load %arg3[%c0_30, %c0_31, %c0_32] : memref<1x16x16xi8, #tpu.memory_space<vmem>>, vector<1x16x16xi8>
    %98 = arith.sitofp %97 : vector<1x16x16xi8> to vector<1x16x16xf32>
    %cst_33 = arith.constant 1.000000e+00 : f32
    %99 = vector.broadcast %cst_33 : f32 to vector<1x16x16xf32>
    %100 = arith.subf %98, %99 : vector<1x16x16xf32>
    %cst_34 = arith.constant 1.000000e+09 : f32
    %101 = vector.broadcast %cst_34 : f32 to vector<1x16x16xf32>
    %102 = arith.mulf %100, %101 : vector<1x16x16xf32>
    %cst_35 = arith.constant dense<0.000000e+00> : vector<1x16xf32>
    %103 = vector.multi_reduction <add>, %96, %cst_35 [2] : vector<1x16x256xf32> to vector<1x16xf32>
    %104 = vector.shape_cast %103 : vector<1x16xf32> to vector<1x16x1xf32>
    %cst_36 = arith.constant 2.560000e+02 : f32
    %105 = vector.broadcast %cst_36 : f32 to vector<1x16x1xf32>
    %106 = arith.divf %104, %105 : vector<1x16x1xf32>
    %107 = vector.broadcast %106 : vector<1x16x1xf32> to vector<1x16x256xf32>
    %108 = arith.subf %96, %107 : vector<1x16x256xf32>
    %109 = arith.mulf %108, %108 : vector<1x16x256xf32>
    %cst_37 = arith.constant dense<0.000000e+00> : vector<1x16xf32>
    %110 = vector.multi_reduction <add>, %109, %cst_37 [2] : vector<1x16x256xf32> to vector<1x16xf32>
    %111 = vector.shape_cast %110 : vector<1x16xf32> to vector<1x16x1xf32>
    %cst_38 = arith.constant 0.00392156886 : f32
    %112 = vector.broadcast %cst_38 : f32 to vector<1x16x1xf32>
    %113 = arith.mulf %111, %112 : vector<1x16x1xf32>
    %114 = math.sqrt %113 : vector<1x16x1xf32>
    %cst_39 = arith.constant 9.99999997E-7 : f32
    %115 = vector.broadcast %cst_39 : f32 to vector<1x16x1xf32>
    %116 = arith.addf %114, %115 : vector<1x16x1xf32>
    %117 = tpu.reciprocal %116 {approx = true} : vector<1x16x1xf32> -> vector<1x16x1xf32>
    %c0_40 = arith.constant 0 : index
    %c0_41 = arith.constant 0 : index
    %118 = vector.load %arg7[%c0_40, %c0_41] : memref<1x256xf32, #tpu.memory_space<vmem>>, vector<1x256xf32>
    %119 = vector.broadcast %106 : vector<1x16x1xf32> to vector<1x16x256xf32>
    %120 = arith.subf %96, %119 : vector<1x16x256xf32>
    %121 = vector.broadcast %117 : vector<1x16x1xf32> to vector<1x16x256xf32>
    %122 = arith.mulf %120, %121 : vector<1x16x256xf32>
    %123 = vector.shape_cast %118 : vector<1x256xf32> to vector<1x1x256xf32>
    %124 = vector.broadcast %123 : vector<1x1x256xf32> to vector<1x16x256xf32>
    %125 = arith.mulf %124, %122 : vector<1x16x256xf32>
    %c0_42 = arith.constant 0 : index
    %c0_43 = arith.constant 0 : index
    %126 = vector.load %arg8[%c0_42, %c0_43] : memref<1x256xf32, #tpu.memory_space<vmem>>, vector<1x256xf32>
    %127 = vector.shape_cast %126 : vector<1x256xf32> to vector<1x1x256xf32>
    %128 = vector.broadcast %127 : vector<1x1x256xf32> to vector<1x16x256xf32>
    %129 = arith.addf %125, %128 : vector<1x16x256xf32>
    %130 = vector.shape_cast %129 : vector<1x16x256xf32> to vector<16x256xf32>
    %c0_44 = arith.constant 0 : index
    %c0_45 = arith.constant 0 : index
    %c0_46 = arith.constant 0 : index
    %131 = vector.load %arg2[%c0_44, %c0_45, %c0_46] : memref<1x16x256xf32, #tpu.memory_space<vmem>>, vector<1x16x256xf32>
    %132 = vector.shape_cast %131 : vector<1x16x256xf32> to vector<16x256xf32>
    %c0_47 = arith.constant 0 : index
    %c0_48 = arith.constant 0 : index
    %133 = vector.load %arg15[%c0_47, %c0_48] : memref<256x768xf32, #tpu.memory_space<vmem>>, vector<256x256xf32>
    %cst_49 = arith.constant dense<0.000000e+00> : vector<16x256xf32>
    %134 = tpu.matmul %130, %133, %cst_49 {dimension_numbers = #tpu.dot_dimension_numbers<[1], [0], [0], [1], [0, 0, 1, 1], [], []>} : vector<16x256xf32>, vector<256x256xf32>, vector<16x256xf32> -> vector<16x256xf32>
    %c0_50 = arith.constant 0 : index
    %c0_51 = arith.constant 0 : index
    %135 = vector.load %arg16[%c0_50, %c0_51] : memref<1x768xf32, #tpu.memory_space<vmem>>, vector<1x256xf32>
    %136 = vector.broadcast %135 : vector<1x256xf32> to vector<16x256xf32>
    %137 = arith.addf %134, %136 : vector<16x256xf32>
    %c0_52 = arith.constant 0 : index
    %c256 = arith.constant 256 : index
    %138 = vector.load %arg15[%c0_52, %c256] : memref<256x768xf32, #tpu.memory_space<vmem>>, vector<256x512xf32>
    %cst_53 = arith.constant dense<0.000000e+00> : vector<16x512xf32>
    %139 = tpu.matmul %132, %138, %cst_53 {dimension_numbers = #tpu.dot_dimension_numbers<[1], [0], [0], [1], [0, 0, 1, 1], [], []>} : vector<16x256xf32>, vector<256x512xf32>, vector<16x512xf32> -> vector<16x512xf32>
    %c0_54 = arith.constant 0 : index
    %c256_55 = arith.constant 256 : index
    %140 = vector.load %arg16[%c0_54, %c256_55] : memref<1x768xf32, #tpu.memory_space<vmem>>, vector<1x512xf32>
    %141 = vector.broadcast %140 : vector<1x512xf32> to vector<16x512xf32>
    %142 = arith.addf %139, %141 : vector<16x512xf32>
    %143 = vector.extract_strided_slice %142 {offsets = [0, 0], sizes = [16, 256], strides = [1, 1]} : vector<16x512xf32> to vector<16x256xf32>
    %144 = vector.extract_strided_slice %142 {offsets = [0, 256], sizes = [16, 256], strides = [1, 1]} : vector<16x512xf32> to vector<16x256xf32>
    %145 = vector.shape_cast %137 : vector<16x256xf32> to vector<1x16x256xf32>
    %146 = vector.extract_strided_slice %145 {offsets = [0, 0, 0], sizes = [1, 16, 128], strides = [1, 1, 1]} : vector<1x16x256xf32> to vector<1x16x128xf32>
    %147 = vector.extract_strided_slice %145 {offsets = [0, 0, 128], sizes = [1, 16, 128], strides = [1, 1, 1]} : vector<1x16x256xf32> to vector<1x16x128xf32>
    %148 = vector.shape_cast %146 : vector<1x16x128xf32> to vector<1x1x16x128xf32>
    %149 = vector.shape_cast %147 : vector<1x16x128xf32> to vector<1x1x16x128xf32>
    %150 = tpu.concatenate %148, %149 in 1 : vector<1x1x16x128xf32>, vector<1x1x16x128xf32> -> vector<1x2x16x128xf32>
    %151 = vector.shape_cast %150 : vector<1x2x16x128xf32> to vector<2x16x128xf32>
    %152 = vector.shape_cast %143 : vector<16x256xf32> to vector<1x16x256xf32>
    %153 = vector.extract_strided_slice %152 {offsets = [0, 0, 0], sizes = [1, 16, 128], strides = [1, 1, 1]} : vector<1x16x256xf32> to vector<1x16x128xf32>
    %154 = vector.extract_strided_slice %152 {offsets = [0, 0, 128], sizes = [1, 16, 128], strides = [1, 1, 1]} : vector<1x16x256xf32> to vector<1x16x128xf32>
    %155 = vector.shape_cast %153 : vector<1x16x128xf32> to vector<1x1x16x128xf32>
    %156 = vector.shape_cast %154 : vector<1x16x128xf32> to vector<1x1x16x128xf32>
    %157 = tpu.concatenate %155, %156 in 1 : vector<1x1x16x128xf32>, vector<1x1x16x128xf32> -> vector<1x2x16x128xf32>
    %158 = vector.shape_cast %157 : vector<1x2x16x128xf32> to vector<2x16x128xf32>
    %159 = vector.shape_cast %144 : vector<16x256xf32> to vector<1x16x256xf32>
    %160 = vector.extract_strided_slice %159 {offsets = [0, 0, 0], sizes = [1, 16, 128], strides = [1, 1, 1]} : vector<1x16x256xf32> to vector<1x16x128xf32>
    %161 = vector.extract_strided_slice %159 {offsets = [0, 0, 128], sizes = [1, 16, 128], strides = [1, 1, 1]} : vector<1x16x256xf32> to vector<1x16x128xf32>
    %162 = vector.shape_cast %160 : vector<1x16x128xf32> to vector<1x1x16x128xf32>
    %163 = vector.shape_cast %161 : vector<1x16x128xf32> to vector<1x1x16x128xf32>
    %164 = tpu.concatenate %162, %163 in 1 : vector<1x1x16x128xf32>, vector<1x1x16x128xf32> -> vector<1x2x16x128xf32>
    %165 = vector.shape_cast %164 : vector<1x2x16x128xf32> to vector<2x16x128xf32>
    "tpu.trace_start"() <{level = 10 : i32, message = "bqd,bkd->bqk"}> : () -> ()
    %cst_56 = arith.constant dense<0.000000e+00> : vector<2x16x16xf32>
    %166 = tpu.matmul %151, %158, %cst_56 {dimension_numbers = #tpu.dot_dimension_numbers<[2], [2], [1], [1], [0, 0, 0, 1, 1, 1], [0], [0]>} : vector<2x16x128xf32>, vector<2x16x128xf32>, vector<2x16x16xf32> -> vector<2x16x16xf32>
    "tpu.trace_stop"() : () -> ()
    %cst_57 = arith.constant 0.0883883461 : f32
    %167 = vector.broadcast %cst_57 : f32 to vector<2x16x16xf32>
    %168 = arith.mulf %166, %167 : vector<2x16x16xf32>
    %169 = vector.shape_cast %168 : vector<2x16x16xf32> to vector<1x2x16x16xf32>
    %170 = vector.shape_cast %102 : vector<1x16x16xf32> to vector<1x1x16x16xf32>
    %171 = vector.broadcast %170 : vector<1x1x16x16xf32> to vector<1x2x16x16xf32>
    %172 = arith.addf %169, %171 : vector<1x2x16x16xf32>
    %cst_58 = arith.constant dense<0xFF800000> : vector<1x2x16xf32>
    %173 = vector.multi_reduction <maximumf>, %172, %cst_58 [3] : vector<1x2x16x16xf32> to vector<1x2x16xf32>
    %174 = vector.shape_cast %173 : vector<1x2x16xf32> to vector<1x2x16x1xf32>
    %175 = vector.broadcast %174 : vector<1x2x16x1xf32> to vector<1x2x16x16xf32>
    %176 = arith.subf %172, %175 : vector<1x2x16x16xf32>
    %177 = math.exp %176 : vector<1x2x16x16xf32>
    %cst_59 = arith.constant dense<0.000000e+00> : vector<1x2x16xf32>
    %178 = vector.multi_reduction <add>, %177, %cst_59 [3] : vector<1x2x16x16xf32> to vector<1x2x16xf32>
    %179 = vector.shape_cast %178 : vector<1x2x16xf32> to vector<1x2x16x1xf32>
    %180 = tpu.reciprocal %179 {approx = true} : vector<1x2x16x1xf32> -> vector<1x2x16x1xf32>
    %181 = vector.broadcast %180 : vector<1x2x16x1xf32> to vector<1x2x16x16xf32>
    %182 = arith.mulf %177, %181 : vector<1x2x16x16xf32>
    %183 = vector.shape_cast %182 : vector<1x2x16x16xf32> to vector<2x16x16xf32>
    "tpu.trace_start"() <{level = 10 : i32, message = "bqk,bkd->bqd"}> : () -> ()
    %cst_60 = arith.constant dense<0.000000e+00> : vector<2x16x128xf32>
    %184 = tpu.matmul %183, %165, %cst_60 {dimension_numbers = #tpu.dot_dimension_numbers<[2], [1], [1], [2], [0, 0, 0, 1, 1, 2], [0], [0]>} : vector<2x16x16xf32>, vector<2x16x128xf32>, vector<2x16x128xf32> -> vector<2x16x128xf32>
    "tpu.trace_stop"() : () -> ()
    %185 = vector.shape_cast %184 : vector<2x16x128xf32> to vector<1x2x16x128xf32>
    %186 = vector.extract_strided_slice %185 {offsets = [0, 0, 0, 0], sizes = [1, 1, 16, 128], strides = [1, 1, 1, 1]} : vector<1x2x16x128xf32> to vector<1x1x16x128xf32>
    %187 = vector.shape_cast %186 : vector<1x1x16x128xf32> to vector<1x16x128xf32>
    %188 = vector.extract_strided_slice %185 {offsets = [0, 1, 0, 0], sizes = [1, 1, 16, 128], strides = [1, 1, 1, 1]} : vector<1x2x16x128xf32> to vector<1x1x16x128xf32>
    %189 = vector.shape_cast %188 : vector<1x1x16x128xf32> to vector<1x16x128xf32>
    %190 = tpu.concatenate %187, %189 in 2 : vector<1x16x128xf32>, vector<1x16x128xf32> -> vector<1x16x256xf32>
    %191 = vector.shape_cast %190 : vector<1x16x256xf32> to vector<16x256xf32>
    %c0_61 = arith.constant 0 : index
    %c0_62 = arith.constant 0 : index
    %192 = vector.load %arg17[%c0_61, %c0_62] : memref<256x256xf32, #tpu.memory_space<vmem>>, vector<256x256xf32>
    %cst_63 = arith.constant dense<0.000000e+00> : vector<16x256xf32>
    %193 = tpu.matmul %191, %192, %cst_63 {dimension_numbers = #tpu.dot_dimension_numbers<[1], [0], [0], [1], [0, 0, 1, 1], [], []>} : vector<16x256xf32>, vector<256x256xf32>, vector<16x256xf32> -> vector<16x256xf32>
    %c0_64 = arith.constant 0 : index
    %c0_65 = arith.constant 0 : index
    %194 = vector.load %arg18[%c0_64, %c0_65] : memref<1x256xf32, #tpu.memory_space<vmem>>, vector<1x256xf32>
    %195 = vector.broadcast %194 : vector<1x256xf32> to vector<16x256xf32>
    %196 = arith.addf %193, %195 : vector<16x256xf32>
    %197 = vector.shape_cast %196 : vector<16x256xf32> to vector<1x16x256xf32>
    %198 = arith.addf %96, %197 : vector<1x16x256xf32>
    %c0_66 = arith.constant 0 : index
    %c0_67 = arith.constant 0 : index
    %c0_68 = arith.constant 0 : index
    %199 = vector.load %arg25[%c0_66, %c0_67, %c0_68] : memref<1x16x256xf32, #tpu.memory_space<vmem>>, vector<1x16x256xf32>
    tpu.vector_store %arg25[%c0_66, %c0_67, %c0_68], %198 {strides = array<i32>} : memref<1x16x256xf32, #tpu.memory_space<vmem>>, vector<1x16x256xf32>,
    %c0_i32 = arith.constant 0 : i32
    %c2_i32 = arith.constant 2 : i32
    %200 = arith.addi %c0_i32, %c2_i32 : i32
    %c1_i32 = arith.constant 1 : i32
    scf.for %arg26 = %c0_i32 to %200 step %c1_i32  : i32 {
      %c8_i32 = arith.constant 8 : i32
      %201 = arith.muli %arg26, %c8_i32 : i32
      %202 = tpu.assume_multiple %201, 8 : i32
      %c0_70 = arith.constant 0 : index
      %203 = arith.index_cast %202 : i32 to index
      %c0_71 = arith.constant 0 : index
      %204 = vector.load %arg25[%c0_70, %203, %c0_71] : memref<1x16x256xf32, #tpu.memory_space<vmem>>, vector<1x8x256xf32>
      %cst_72 = arith.constant dense<0.000000e+00> : vector<1x8xf32>
      %205 = vector.multi_reduction <add>, %204, %cst_72 [2] : vector<1x8x256xf32> to vector<1x8xf32>
      %206 = vector.shape_cast %205 : vector<1x8xf32> to vector<1x8x1xf32>
      %cst_73 = arith.constant 2.560000e+02 : f32
      %207 = vector.broadcast %cst_73 : f32 to vector<1x8x1xf32>
      %208 = arith.divf %206, %207 : vector<1x8x1xf32>
      %209 = vector.broadcast %208 : vector<1x8x1xf32> to vector<1x8x256xf32>
      %210 = arith.subf %204, %209 : vector<1x8x256xf32>
      %211 = arith.mulf %210, %210 : vector<1x8x256xf32>
      %cst_74 = arith.constant dense<0.000000e+00> : vector<1x8xf32>
      %212 = vector.multi_reduction <add>, %211, %cst_74 [2] : vector<1x8x256xf32> to vector<1x8xf32>
      %213 = vector.shape_cast %212 : vector<1x8xf32> to vector<1x8x1xf32>
      %cst_75 = arith.constant 0.00392156886 : f32
      %214 = vector.broadcast %cst_75 : f32 to vector<1x8x1xf32>
      %215 = arith.mulf %213, %214 : vector<1x8x1xf32>
      %216 = math.sqrt %215 : vector<1x8x1xf32>
      %cst_76 = arith.constant 9.99999997E-7 : f32
      %217 = vector.broadcast %cst_76 : f32 to vector<1x8x1xf32>
      %218 = arith.addf %216, %217 : vector<1x8x1xf32>
      %219 = tpu.reciprocal %218 {approx = true} : vector<1x8x1xf32> -> vector<1x8x1xf32>
      %c0_77 = arith.constant 0 : index
      %c0_78 = arith.constant 0 : index
      %220 = vector.load %arg9[%c0_77, %c0_78] : memref<1x256xf32, #tpu.memory_space<vmem>>, vector<1x256xf32>
      %221 = vector.broadcast %208 : vector<1x8x1xf32> to vector<1x8x256xf32>
      %222 = arith.subf %204, %221 : vector<1x8x256xf32>
      %223 = vector.broadcast %219 : vector<1x8x1xf32> to vector<1x8x256xf32>
      %224 = arith.mulf %222, %223 : vector<1x8x256xf32>
      %225 = vector.shape_cast %220 : vector<1x256xf32> to vector<1x1x256xf32>
      %226 = vector.broadcast %225 : vector<1x1x256xf32> to vector<1x8x256xf32>
      %227 = arith.mulf %226, %224 : vector<1x8x256xf32>
      %c0_79 = arith.constant 0 : index
      %c0_80 = arith.constant 0 : index
      %228 = vector.load %arg10[%c0_79, %c0_80] : memref<1x256xf32, #tpu.memory_space<vmem>>, vector<1x256xf32>
      %229 = vector.shape_cast %228 : vector<1x256xf32> to vector<1x1x256xf32>
      %230 = vector.broadcast %229 : vector<1x1x256xf32> to vector<1x8x256xf32>
      %231 = arith.addf %227, %230 : vector<1x8x256xf32>
      %232 = vector.shape_cast %231 : vector<1x8x256xf32> to vector<8x256xf32>
      %c0_81 = arith.constant 0 : index
      %c0_82 = arith.constant 0 : index
      %233 = vector.load %arg19[%c0_81, %c0_82] : memref<256x512xf32, #tpu.memory_space<vmem>>, vector<256x512xf32>
      %cst_83 = arith.constant dense<0.000000e+00> : vector<8x512xf32>
      %234 = tpu.matmul %232, %233, %cst_83 {dimension_numbers = #tpu.dot_dimension_numbers<[1], [0], [0], [1], [0, 0, 1, 1], [], []>} : vector<8x256xf32>, vector<256x512xf32>, vector<8x512xf32> -> vector<8x512xf32>
      %c0_84 = arith.constant 0 : index
      %c0_85 = arith.constant 0 : index
      %235 = vector.load %arg20[%c0_84, %c0_85] : memref<1x512xf32, #tpu.memory_space<vmem>>, vector<1x512xf32>
      %236 = vector.broadcast %235 : vector<1x512xf32> to vector<8x512xf32>
      %237 = arith.addf %234, %236 : vector<8x512xf32>
      %cst_86 = arith.constant 0.000000e+00 : f32
      %238 = vector.broadcast %cst_86 : f32 to vector<8x512xf32>
      %239 = arith.maximumf %237, %238 : vector<8x512xf32>
      %c0_87 = arith.constant 0 : index
      %c0_88 = arith.constant 0 : index
      %240 = vector.load %arg21[%c0_87, %c0_88] : memref<512x256xf32, #tpu.memory_space<vmem>>, vector<512x256xf32>
      %cst_89 = arith.constant dense<0.000000e+00> : vector<8x256xf32>
      %241 = tpu.matmul %239, %240, %cst_89 {dimension_numbers = #tpu.dot_dimension_numbers<[1], [0], [0], [1], [0, 0, 1, 1], [], []>} : vector<8x512xf32>, vector<512x256xf32>, vector<8x256xf32> -> vector<8x256xf32>
      %c0_90 = arith.constant 0 : index
      %c0_91 = arith.constant 0 : index
      %242 = vector.load %arg22[%c0_90, %c0_91] : memref<1x256xf32, #tpu.memory_space<vmem>>, vector<1x256xf32>
      %243 = vector.broadcast %242 : vector<1x256xf32> to vector<8x256xf32>
      %244 = arith.addf %241, %243 : vector<8x256xf32>
      %245 = vector.shape_cast %244 : vector<8x256xf32> to vector<1x8x256xf32>
      %246 = arith.addf %204, %245 : vector<1x8x256xf32>
      %c0_92 = arith.constant 0 : index
      %247 = arith.index_cast %202 : i32 to index
      %c0_93 = arith.constant 0 : index
      %248 = vector.load %arg25[%c0_92, %247, %c0_93] : memref<1x16x256xf32, #tpu.memory_space<vmem>>, vector<1x8x256xf32>
      tpu.vector_store %arg25[%c0_92, %247, %c0_93], %246 {strides = array<i32>} : memref<1x16x256xf32, #tpu.memory_space<vmem>>, vector<1x8x256xf32>,
    }
    %c2_i32_69 = arith.constant 2 : i32
    return
  }
  func.func @transform_0(%arg0: i32) -> (i32, i32, i32) {
    %c0_i32 = arith.constant 0 : i32
    %c0_i32_0 = arith.constant 0 : i32
    %c0_i32_1 = arith.constant 0 : i32
    return %arg0, %c0_i32, %c0_i32_0 : i32, i32, i32
  }
  func.func @transform_1(%arg0: i32) -> (i32, i32, i32) {
    %c0_i32 = arith.constant 0 : i32
    %c0_i32_0 = arith.constant 0 : i32
    %c0_i32_1 = arith.constant 0 : i32
    return %arg0, %c0_i32, %c0_i32_0 : i32, i32, i32
  }
  func.func @transform_2(%arg0: i32) -> (i32, i32, i32) {
    %c0_i32 = arith.constant 0 : i32
    %c0_i32_0 = arith.constant 0 : i32
    %c0_i32_1 = arith.constant 0 : i32
    return %arg0, %c0_i32, %c0_i32_0 : i32, i32, i32
  }
  func.func @transform_3(%arg0: i32) -> (i32, i32, i32) {
    %c0_i32 = arith.constant 0 : i32
    %c0_i32_0 = arith.constant 0 : i32
    %c0_i32_1 = arith.constant 0 : i32
    return %arg0, %c0_i32, %c0_i32_0 : i32, i32, i32
  }
  func.func @transform_4(%arg0: i32) -> (i32, i32) {
    %c0_i32 = arith.constant 0 : i32
    %c0_i32_0 = arith.constant 0 : i32
    %c0_i32_1 = arith.constant 0 : i32
    return %c0_i32, %c0_i32_0 : i32, i32
  }
  func.func @transform_5(%arg0: i32) -> (i32, i32) {
    %c0_i32 = arith.constant 0 : i32
    %c0_i32_0 = arith.constant 0 : i32
    %c0_i32_1 = arith.constant 0 : i32
    return %c0_i32, %c0_i32_0 : i32, i32
  }
  func.func @transform_6(%arg0: i32) -> (i32, i32) {
    %c0_i32 = arith.constant 0 : i32
    %c0_i32_0 = arith.constant 0 : i32
    %c0_i32_1 = arith.constant 0 : i32
    return %c0_i32, %c0_i32_0 : i32, i32
  }
  func.func @transform_7(%arg0: i32) -> (i32, i32) {
    %c0_i32 = arith.constant 0 : i32
    %c0_i32_0 = arith.constant 0 : i32
    %c0_i32_1 = arith.constant 0 : i32
    return %c0_i32, %c0_i32_0 : i32, i32
  }
  func.func @transform_8(%arg0: i32) -> (i32, i32) {
    %c0_i32 = arith.constant 0 : i32
    %c0_i32_0 = arith.constant 0 : i32
    %c0_i32_1 = arith.constant 0 : i32
    return %c0_i32, %c0_i32_0 : i32, i32
  }
  func.func @transform_9(%arg0: i32) -> (i32, i32) {
    %c0_i32 = arith.constant 0 : i32
    %c0_i32_0 = arith.constant 0 : i32
    %c0_i32_1 = arith.constant 0 : i32
    return %c0_i32, %c0_i32_0 : i32, i32
  }
  func.func @transform_10(%arg0: i32) -> (i32, i32) {
    %c0_i32 = arith.constant 0 : i32
    %c0_i32_0 = arith.constant 0 : i32
    %c0_i32_1 = arith.constant 0 : i32
    return %c0_i32, %c0_i32_0 : i32, i32
  }
  func.func @transform_11(%arg0: i32) -> (i32, i32) {
    %c0_i32 = arith.constant 0 : i32
    %c0_i32_0 = arith.constant 0 : i32
    %c0_i32_1 = arith.constant 0 : i32
    return %c0_i32, %c0_i32_0 : i32, i32
  }
  func.func @transform_12(%arg0: i32) -> (i32, i32) {
    %c0_i32 = arith.constant 0 : i32
    %c0_i32_0 = arith.constant 0 : i32
    %c0_i32_1 = arith.constant 0 : i32
    return %c0_i32, %c0_i32_0 : i32, i32
  }
  func.func @transform_13(%arg0: i32) -> (i32, i32) {
    %c0_i32 = arith.constant 0 : i32
    %c0_i32_0 = arith.constant 0 : i32
    %c0_i32_1 = arith.constant 0 : i32
    return %c0_i32, %c0_i32_0 : i32, i32
  }
  func.func @transform_14(%arg0: i32) -> (i32, i32) {
    %c0_i32 = arith.constant 0 : i32
    %c0_i32_0 = arith.constant 0 : i32
    %c0_i32_1 = arith.constant 0 : i32
    return %c0_i32, %c0_i32_0 : i32, i32
  }
  func.func @transform_15(%arg0: i32) -> (i32, i32) {
    %c0_i32 = arith.constant 0 : i32
    %c0_i32_0 = arith.constant 0 : i32
    %c0_i32_1 = arith.constant 0 : i32
    return %c0_i32, %c0_i32_0 : i32, i32
  }
  func.func @transform_16(%arg0: i32) -> (i32, i32) {
    %c0_i32 = arith.constant 0 : i32
    %c0_i32_0 = arith.constant 0 : i32
    %c0_i32_1 = arith.constant 0 : i32
    return %c0_i32, %c0_i32_0 : i32, i32
  }
  func.func @transform_17(%arg0: i32) -> (i32, i32) {
    %c0_i32 = arith.constant 0 : i32
    %c0_i32_0 = arith.constant 0 : i32
    %c0_i32_1 = arith.constant 0 : i32
    return %c0_i32, %c0_i32_0 : i32, i32
  }
  func.func @transform_18(%arg0: i32) -> (i32, i32) {
    %c0_i32 = arith.constant 0 : i32
    %c0_i32_0 = arith.constant 0 : i32
    %c0_i32_1 = arith.constant 0 : i32
    return %c0_i32, %c0_i32_0 : i32, i32
  }
  func.func @transform_19(%arg0: i32) -> (i32, i32) {
    %c0_i32 = arith.constant 0 : i32
    %c0_i32_0 = arith.constant 0 : i32
    %c0_i32_1 = arith.constant 0 : i32
    return %c0_i32, %c0_i32_0 : i32, i32
  }
  func.func @transform_20(%arg0: i32) -> (i32, i32) {
    %c0_i32 = arith.constant 0 : i32
    %c0_i32_0 = arith.constant 0 : i32
    %c0_i32_1 = arith.constant 0 : i32
    return %c0_i32, %c0_i32_0 : i32, i32
  }
  func.func @transform_21(%arg0: i32) -> (i32, i32) {
    %c0_i32 = arith.constant 0 : i32
    %c0_i32_0 = arith.constant 0 : i32
    %c0_i32_1 = arith.constant 0 : i32
    return %c0_i32, %c0_i32_0 : i32, i32
  }
  func.func @transform_22(%arg0: i32) -> (i32, i32) {
    %c0_i32 = arith.constant 0 : i32
    %c0_i32_0 = arith.constant 0 : i32
    %c0_i32_1 = arith.constant 0 : i32
    return %c0_i32, %c0_i32_0 : i32, i32
  }
  func.func @transform_23(%arg0: i32) -> (i32, i32) {
    %c0_i32 = arith.constant 0 : i32
    %c0_i32_0 = arith.constant 0 : i32
    %c0_i32_1 = arith.constant 0 : i32
    return %c0_i32, %c0_i32_0 : i32, i32
  }
  func.func @transform_24(%arg0: i32) -> (i32, i32, i32) {
    %c0_i32 = arith.constant 0 : i32
    %c0_i32_0 = arith.constant 0 : i32
    %c0_i32_1 = arith.constant 0 : i32
    return %arg0, %c0_i32, %c0_i32_0 : i32, i32, i32
  }
}

</mosaic_0001>

<llo_original>
// kernel: tpu_custom_call.1
$region0: #{tpu_custom_call.1}
  #allocation0 [shape = 'u32[]', space=smem, size = 0x4, offset = 0x4, fixed_abs, tag = 'smem constant byte address 0x4 - core index']
  #allocation1 [shape = 'u32[72,128]{1,0:T(1,128)}', space=vmem, size = 0x9000, scoped, tag = 'internal scratch']
  %s0 = inlined_call_operand.hbm [shape: f32[2,16,256], index: 0, kind: input, shape index: {}]
  %s1 = inlined_call_operand.hbm [shape: f32[2,16,256], index: 1, kind: input, shape index: {}]
  %s2 = inlined_call_operand.hbm [shape: s8[2,16,16], index: 2, kind: input, shape index: {}]
  %s3 = inlined_call_operand.hbm [shape: s8[2,16,16], index: 3, kind: input, shape index: {}]
  %s4 = inlined_call_operand.hbm [shape: f32[1,256], index: 4, kind: input, shape index: {}]
  %s5 = inlined_call_operand.hbm [shape: f32[1,256], index: 5, kind: input, shape index: {}]
  %s6 = inlined_call_operand.hbm [shape: f32[1,256], index: 6, kind: input, shape index: {}]
  %s7 = inlined_call_operand.hbm [shape: f32[1,256], index: 7, kind: input, shape index: {}]
  %s8 = inlined_call_operand.hbm [shape: f32[1,256], index: 8, kind: input, shape index: {}]
  %s9 = inlined_call_operand.hbm [shape: f32[1,256], index: 9, kind: input, shape index: {}]
  %s10 = inlined_call_operand.hbm [shape: f32[256,768], index: 10, kind: input, shape index: {}]
  %s11 = inlined_call_operand.vmem [shape: f32[1,768], index: 11, kind: input, shape index: {}]
  %s12 = inlined_call_operand.hbm [shape: f32[256,256], index: 12, kind: input, shape index: {}]
  %s13 = inlined_call_operand.hbm [shape: f32[1,256], index: 13, kind: input, shape index: {}]
  %s14 = inlined_call_operand.hbm [shape: f32[256,768], index: 14, kind: input, shape index: {}]
  %s15 = inlined_call_operand.vmem [shape: f32[1,768], index: 15, kind: input, shape index: {}]
  %s16 = inlined_call_operand.hbm [shape: f32[256,256], index: 16, kind: input, shape index: {}]
  %s17 = inlined_call_operand.hbm [shape: f32[1,256], index: 17, kind: input, shape index: {}]
  %s18 = inlined_call_operand.hbm [shape: f32[256,512], index: 18, kind: input, shape index: {}]
  %s19 = inlined_call_operand.vmem [shape: f32[1,512], index: 19, kind: input, shape index: {}]
  %s20 = inlined_call_operand.hbm [shape: f32[512,256], index: 20, kind: input, shape index: {}]
  %s21 = inlined_call_operand.vmem [shape: f32[1,256], index: 21, kind: input, shape index: {}]
  %s22 = inlined_call_operand.vmem [shape: f32[1,256], index: 22, kind: input, shape index: {}]
  %s23 = inlined_call_operand.vmem [shape: f32[1,256], index: 23, kind: input, shape index: {}]
  %s24 = inlined_call_operand.hbm [shape: f32[2,16,256], index: 24, kind: output, shape index: {}]
  %s25 = sld [smem:[#allocation0]]
  $region208: #{tpu_custom_call.1} parent=0
    _
  %s27 = ssub.s32 1, %s25
  %s28 = scalar_select 0, %s27, %s25
  $region1: #{tpu_custom_call.1} parent=0
    #allocation2 [shape = 'u8[32768]{0}', space=vmem, size = 0x8000, scoped, tag = 'input window, operand 0']
    #allocation3 [shape = 's32[2]{0}', space=sflag, size = 0x8, scoped, tag = 'scoped memory for tpu_custom_call.1']
    #allocation4 [shape = 's32[2]{0}', space=sflag, size = 0x8, scoped, tag = 'scoped memory for tpu_custom_call.1']
    #allocation5 [shape = 'u8[32768]{0}', space=vmem, size = 0x8000, scoped, tag = 'input window, operand 1']
    #allocation6 [shape = 's32[2]{0}', space=sflag, size = 0x8, scoped, tag = 'scoped memory for tpu_custom_call.1']
    #allocation7 [shape = 'u8[4096]{0}', space=vmem, size = 0x1000, scoped, tag = 'input window, operand 2']
    #allocation8 [shape = 'u8[4096]{0}', space=vmem, size = 0x1000, scoped, tag = 'input window, operand 3']
    #allocation9 [shape = 's32[2]{0}', space=sflag, size = 0x8, scoped, tag = 'scoped memory for tpu_custom_call.1']
    #allocation10 [shape = 'u8[1024]{0}', space=vmem, size = 0x400, scoped, tag = 'input window, operand 4, single buffered']
    #allocation11 [shape = 'u8[1024]{0}', space=vmem, size = 0x400, scoped, tag = 'input window, operand 5, single buffered']
    #allocation12 [shape = 's32[1]{0}', space=sflag, size = 0x4, scoped, tag = 'scoped memory for tpu_custom_call.1']
    #allocation13 [shape = 'u8[1024]{0}', space=vmem, size = 0x400, scoped, tag = 'input window, operand 6, single buffered']
    #allocation14 [shape = 'u8[1024]{0}', space=vmem, size = 0x400, scoped, tag = 'input window, operand 7, single buffered']
    #allocation15 [shape = 's32[1]{0}', space=sflag, size = 0x4, scoped, tag = 'scoped memory for tpu_custom_call.1']
    #allocation16 [shape = 'u8[1024]{0}', space=vmem, size = 0x400, scoped, tag = 'input window, operand 8, single buffered']
    #allocation17 [shape = 'u8[1024]{0}', space=vmem, size = 0x400, scoped, tag = 'input window, operand 9, single buffered']
    #allocation18 [shape = 's32[1]{0}', space=sflag, size = 0x4, scoped, tag = 'scoped memory for tpu_custom_call.1']
    #allocation19 [shape = 'u8[786432]{0}', space=vmem, size = 0xc0000, scoped, tag = 'input window, operand 10, single buffered']
    #allocation20 [shape = 'u8[262144]{0}', space=vmem, size = 0x40000, scoped, tag = 'input window, operand 12, single buffered']
    #allocation21 [shape = 's32[1]{0}', space=sflag, size = 0x4, scoped, tag = 'scoped memory for tpu_custom_call.1']
    #allocation22 [shape = 'u8[1024]{0}', space=vmem, size = 0x400, scoped, tag = 'input window, operand 13, single buffered']
    #allocation23 [shape = 'u8[786432]{0}', space=vmem, size = 0xc0000, scoped, tag = 'input window, operand 14, single buffered']
    #allocation24 [shape = 's32[1]{0}', space=sflag, size = 0x4, scoped, tag = 'scoped memory for tpu_custom_call.1']
    #allocation25 [shape = 'u8[262144]{0}', space=vmem, size = 0x40000, scoped, tag = 'input window, operand 16, single buffered']
    #allocation26 [shape = 'u8[1024]{0}', space=vmem, size = 0x400, scoped, tag = 'input window, operand 17, single buffered']
    #allocation27 [shape = 's32[1]{0}', space=sflag, size = 0x4, scoped, tag = 'scoped memory for tpu_custom_call.1']
    #allocation28 [shape = 'u8[524288]{0}', space=vmem, size = 0x80000, scoped, tag = 'input window, operand 18, single buffered']
    #allocation29 [shape = 'u8[524288]{0}', space=vmem, size = 0x80000, scoped, tag = 'input window, operand 20, single buffered']
    #allocation30 [shape = 's32[1]{0}', space=sflag, size = 0x4, scoped, tag = 'scoped memory for tpu_custom_call.1']
    #allocation31 [shape = 'u8[32768]{0}', space=vmem, size = 0x8000, scoped, tag = 'output window, operand 0']
    %29 = vsyncpa [#allocation3], 0
    %s30 = scalar_lea.sflag [#allocation3], 1
    %31 = vsyncpa %s30, 0
    %32 = vsyncpa [#allocation6], 0
    %s33 = scalar_lea.sflag [#allocation6], 1
    %34 = vsyncpa %s33, 0
    %35 = vsyncpa [#allocation9], 0
    %s36 = scalar_lea.sflag [#allocation9], 1
    %37 = vsyncpa %s36, 0
    %38 = vsyncpa [#allocation12], 0
    %39 = vsyncpa [#allocation15], 0
    %40 = vsyncpa [#allocation18], 0
    %41 = vsyncpa [#allocation21], 0
    %42 = vsyncpa [#allocation24], 0
    %43 = vsyncpa [#allocation27], 0
    %44 = vsyncpa [#allocation30], 0
    %45 = vsyncpa [#allocation4], 0
    %s46 = scalar_lea.sflag [#allocation4], 1
    %47 = vsyncpa %s46, 0
    loop: start=0, step=1, limit=4
    $region2: #{tpu_custom_call.1} parent=1 // loop_pre_header
      _
    $region3: #{tpu_custom_call.1} parent=1 // loop_header
      %s49 = sphi 0, %s53
      %p50 = scmp.ge.s32.totalorder %s49, 4
      %s59 = sphi 0, %s61
      %s62 = sphi 0, %s59
      %s63 = sphi 0, %s62
      %s79 = sphi 0, %s63
      %s85 = sphi 0, %s87
      %s88 = sphi 0, %s85
      %s89 = sphi 0, %s88
      %s105 = sphi 0, %s89
      %s111 = sphi 0, %s113
      %s114 = sphi 0, %s111
      %s115 = sphi 0, %s114
      %s131 = sphi 0, %s115
      %s137 = sphi 0, %s139
      %s140 = sphi 0, %s137
      %s141 = sphi 0, %s140
      %s157 = sphi 0, %s141
      %s161 = sphi 0, %s161
      %s163 = sphi 0, %s161
      %s164 = sphi 0, %s163
      %s178 = sphi 0, %s164
      %s182 = sphi 0, %s182
      %s184 = sphi 0, %s182
      %s185 = sphi 0, %s184
      %s199 = sphi 0, %s185
      %s203 = sphi 0, %s203
      %s205 = sphi 0, %s203
      %s206 = sphi 0, %s205
      %s220 = sphi 0, %s206
      %s224 = sphi 0, %s224
      %s226 = sphi 0, %s224
      %s227 = sphi 0, %s226
      %s241 = sphi 0, %s227
      %s245 = sphi 0, %s245
      %s247 = sphi 0, %s245
      %s248 = sphi 0, %s247
      %s262 = sphi 0, %s248
      %s266 = sphi 0, %s266
      %s268 = sphi 0, %s266
      %s269 = sphi 0, %s268
      %s283 = sphi 0, %s269
      %s287 = sphi 0, %s287
      %s289 = sphi 0, %s287
      %s290 = sphi 0, %s289
      %s304 = sphi 0, %s290
      %s308 = sphi 0, %s308
      %s310 = sphi 0, %s308
      %s311 = sphi 0, %s310
      %s325 = sphi 0, %s311
      %s329 = sphi 0, %s329
      %s331 = sphi 0, %s329
      %s332 = sphi 0, %s331
      %s346 = sphi 0, %s332
      %s350 = sphi 0, %s350
      %s352 = sphi 0, %s350
      %s353 = sphi 0, %s352
      %s367 = sphi 0, %s353
      %s371 = sphi 0, %s371
      %s373 = sphi 0, %s371
      %s374 = sphi 0, %s373
      %s388 = sphi 0, %s374
      %s392 = sphi 0, %s392
      %s394 = sphi 0, %s392
      %s395 = sphi 0, %s394
      %s409 = sphi 0, %s395
      %s413 = sphi 0, %s413
      %s415 = sphi 0, %s413
      %s416 = sphi 0, %s415
      %s430 = sphi 0, %s416
      %s434 = sphi 0, %s434
      %s436 = sphi 0, %s434
      %s437 = sphi 0, %s436
      %s451 = sphi 0, %s437
      %s455 = sphi 0, %s455
      %s457 = sphi 0, %s455
      %s458 = sphi 0, %s457
      %s472 = sphi 0, %s458
      %s476 = sphi 0, %s476
      %s478 = sphi 0, %s476
      %s479 = sphi 0, %s478
      %s493 = sphi 0, %s479
      %s497 = sphi 0, %s497
      %s499 = sphi 0, %s497
      %s500 = sphi 0, %s499
      %s514 = sphi 0, %s500
      %s518 = sphi 0, %s518
      %s520 = sphi 0, %s518
      %s521 = sphi 0, %s520
      %s535 = sphi 0, %s521
      %s539 = sphi 0, %s539
      %s541 = sphi 0, %s539
      %s542 = sphi 0, %s541
      %s556 = sphi 0, %s542
      %s560 = sphi 0, %s560
      %s562 = sphi 0, %s560
      %s563 = sphi 0, %s562
      %s577 = sphi 0, %s563
      %s583 = sphi 0, %s585
      %s586 = sphi 0, %s583
      %s587 = sphi 0, %s586
      %s603 = sphi 0, %s587
    $region4: #{tpu_custom_call.1} parent=1 // loop_header_branch
      %52 = sbr.rel (%p50) target = $region8
    $region5: #{tpu_custom_call.1} parent=1 // loop_body
      %s54 = ssub.s32 %s49, 1
      %s55 = ssub.s32 %s49, 2
      %s56 = sadd.s32 %s49, 1
      %s57 = ssub.s32 %s49, %s56
      %p58 = scmp.eq.s32.totalorder %s57, 0
      %s60 = sadd.s32 %s59, 1
      %s61 = scalar_select %p58, %s59, %s60
      %p64 = pneg %p58
      %p65 = scmp.eq.s32.totalorder %s49, 1
      %p66 = por %p64, %p65
      %p67 = scmp.ne.s32.totalorder %s59, %s62
      %p68 = scmp.eq.s32.totalorder %s49, 0
      %p69 = por %p67, %p68
      %p70 = scmp.ne.s32.totalorder %s59, %s62
      %p71 = scmp.eq.s32.totalorder %s54, 1
      %p72 = por %p70, %p71
      %p73 = scmp.ne.s32.totalorder %s62, %s63
      %p74 = scmp.eq.s32.totalorder %s54, 0
      %p75 = por %p73, %p74
      %p76 = scmp.ne.s32.totalorder %s62, %s63
      %p77 = scmp.eq.s32.totalorder %s55, 1
      %p78 = por %p76, %p77
      %p80 = scmp.ne.s32.totalorder %s63, %s79
      %p81 = scmp.eq.s32.totalorder %s55, 0
      %p82 = por %p80, %p81
      %s83 = ssub.s32 %s49, %s56
      %p84 = scmp.eq.s32.totalorder %s83, 0
      %s86 = sadd.s32 %s85, 1
      %s87 = scalar_select %p84, %s85, %s86
      %p90 = pneg %p84
      %p91 = scmp.eq.s32.totalorder %s49, 1
      %p92 = por %p90, %p91
      %p93 = scmp.ne.s32.totalorder %s85, %s88
      %p94 = scmp.eq.s32.totalorder %s49, 0
      %p95 = por %p93, %p94
      %p96 = scmp.ne.s32.totalorder %s85, %s88
      %p97 = scmp.eq.s32.totalorder %s54, 1
      %p98 = por %p96, %p97
      %p99 = scmp.ne.s32.totalorder %s88, %s89
      %p100 = scmp.eq.s32.totalorder %s54, 0
      %p101 = por %p99, %p100
      %p102 = scmp.ne.s32.totalorder %s88, %s89
      %p103 = scmp.eq.s32.totalorder %s55, 1
      %p104 = por %p102, %p103
      %p106 = scmp.ne.s32.totalorder %s89, %s105
      %p107 = scmp.eq.s32.totalorder %s55, 0
      %p108 = por %p106, %p107
      %s109 = ssub.s32 %s49, %s56
      %p110 = scmp.eq.s32.totalorder %s109, 0
      %s112 = sadd.s32 %s111, 1
      %s113 = scalar_select %p110, %s111, %s112
      %p116 = pneg %p110
      %p117 = scmp.eq.s32.totalorder %s49, 1
      %p118 = por %p116, %p117
      %p119 = scmp.ne.s32.totalorder %s111, %s114
      %p120 = scmp.eq.s32.totalorder %s49, 0
      %p121 = por %p119, %p120
      %p122 = scmp.ne.s32.totalorder %s111, %s114
      %p123 = scmp.eq.s32.totalorder %s54, 1
      %p124 = por %p122, %p123
      %p125 = scmp.ne.s32.totalorder %s114, %s115
      %p126 = scmp.eq.s32.totalorder %s54, 0
      %p127 = por %p125, %p126
      %p128 = scmp.ne.s32.totalorder %s114, %s115
      %p129 = scmp.eq.s32.totalorder %s55, 1
      %p130 = por %p128, %p129
      %p132 = scmp.ne.s32.totalorder %s115, %s131
      %p133 = scmp.eq.s32.totalorder %s55, 0
      %p134 = por %p132, %p133
      %s135 = ssub.s32 %s49, %s56
      %p136 = scmp.eq.s32.totalorder %s135, 0
      %s138 = sadd.s32 %s137, 1
      %s139 = scalar_select %p136, %s137, %s138
      %p142 = pneg %p136
      %p143 = scmp.eq.s32.totalorder %s49, 1
      %p144 = por %p142, %p143
      %p145 = scmp.ne.s32.totalorder %s137, %s140
      %p146 = scmp.eq.s32.totalorder %s49, 0
      %p147 = por %p145, %p146
      %p148 = scmp.ne.s32.totalorder %s137, %s140
      %p149 = scmp.eq.s32.totalorder %s54, 1
      %p150 = por %p148, %p149
      %p151 = scmp.ne.s32.totalorder %s140, %s141
      %p152 = scmp.eq.s32.totalorder %s54, 0
      %p153 = por %p151, %p152
      %p154 = scmp.ne.s32.totalorder %s140, %s141
      %p155 = scmp.eq.s32.totalorder %s55, 1
      %p156 = por %p154, %p155
      %p158 = scmp.ne.s32.totalorder %s141, %s157
      %p159 = scmp.eq.s32.totalorder %s55, 0
      %p160 = por %p158, %p159
      %s162 = sadd.s32 %s161, 1
      %p165 = scmp.eq.s32.totalorder %s49, 1
      %p166 = scmp.ne.s32.totalorder %s161, %s163
      %p167 = scmp.eq.s32.totalorder %s49, 0
      %p168 = por %p166, %p167
      %p169 = scmp.ne.s32.totalorder %s161, %s163
      %p170 = scmp.eq.s32.totalorder %s54, 1
      %p171 = por %p169, %p170
      %p172 = scmp.ne.s32.totalorder %s163, %s164
      %p173 = scmp.eq.s32.totalorder %s54, 0
      %p174 = por %p172, %p173
      %p175 = scmp.ne.s32.totalorder %s163, %s164
      %p176 = scmp.eq.s32.totalorder %s55, 1
      %p177 = por %p175, %p176
      %p179 = scmp.ne.s32.totalorder %s164, %s178
      %p180 = scmp.eq.s32.totalorder %s55, 0
      %p181 = por %p179, %p180
      %s183 = sadd.s32 %s182, 1
      %p186 = scmp.eq.s32.totalorder %s49, 1
      %p187 = scmp.ne.s32.totalorder %s182, %s184
      %p188 = scmp.eq.s32.totalorder %s49, 0
      %p189 = por %p187, %p188
      %p190 = scmp.ne.s32.totalorder %s182, %s184
      %p191 = scmp.eq.s32.totalorder %s54, 1
      %p192 = por %p190, %p191
      %p193 = scmp.ne.s32.totalorder %s184, %s185
      %p194 = scmp.eq.s32.totalorder %s54, 0
      %p195 = por %p193, %p194
      %p196 = scmp.ne.s32.totalorder %s184, %s185
      %p197 = scmp.eq.s32.totalorder %s55, 1
      %p198 = por %p196, %p197
      %p200 = scmp.ne.s32.totalorder %s185, %s199
      %p201 = scmp.eq.s32.totalorder %s55, 0
      %p202 = por %p200, %p201
      %s204 = sadd.s32 %s203, 1
      %p207 = scmp.eq.s32.totalorder %s49, 1
      %p208 = scmp.ne.s32.totalorder %s203, %s205
      %p209 = scmp.eq.s32.totalorder %s49, 0
      %p210 = por %p208, %p209
      %p211 = scmp.ne.s32.totalorder %s203, %s205
      %p212 = scmp.eq.s32.totalorder %s54, 1
      %p213 = por %p211, %p212
      %p214 = scmp.ne.s32.totalorder %s205, %s206
      %p215 = scmp.eq.s32.totalorder %s54, 0
      %p216 = por %p214, %p215
      %p217 = scmp.ne.s32.totalorder %s205, %s206
      %p218 = scmp.eq.s32.totalorder %s55, 1
      %p219 = por %p217, %p218
      %p221 = scmp.ne.s32.totalorder %s206, %s220
      %p222 = scmp.eq.s32.totalorder %s55, 0
      %p223 = por %p221, %p222
      %s225 = sadd.s32 %s224, 1
      %p228 = scmp.eq.s32.totalorder %s49, 1
      %p229 = scmp.ne.s32.totalorder %s224, %s226
      %p230 = scmp.eq.s32.totalorder %s49, 0
      %p231 = por %p229, %p230
      %p232 = scmp.ne.s32.totalorder %s224, %s226
      %p233 = scmp.eq.s32.totalorder %s54, 1
      %p234 = por %p232, %p233
      %p235 = scmp.ne.s32.totalorder %s226, %s227
      %p236 = scmp.eq.s32.totalorder %s54, 0
      %p237 = por %p235, %p236
      %p238 = scmp.ne.s32.totalorder %s226, %s227
      %p239 = scmp.eq.s32.totalorder %s55, 1
      %p240 = por %p238, %p239
      %p242 = scmp.ne.s32.totalorder %s227, %s241
      %p243 = scmp.eq.s32.totalorder %s55, 0
      %p244 = por %p242, %p243
      %s246 = sadd.s32 %s245, 1
      %p249 = scmp.eq.s32.totalorder %s49, 1
      %p250 = scmp.ne.s32.totalorder %s245, %s247
      %p251 = scmp.eq.s32.totalorder %s49, 0
      %p252 = por %p250, %p251
      %p253 = scmp.ne.s32.totalorder %s245, %s247
      %p254 = scmp.eq.s32.totalorder %s54, 1
      %p255 = por %p253, %p254
      %p256 = scmp.ne.s32.totalorder %s247, %s248
      %p257 = scmp.eq.s32.totalorder %s54, 0
      %p258 = por %p256, %p257
      %p259 = scmp.ne.s32.totalorder %s247, %s248
      %p260 = scmp.eq.s32.totalorder %s55, 1
      %p261 = por %p259, %p260
      %p263 = scmp.ne.s32.totalorder %s248, %s262
      %p264 = scmp.eq.s32.totalorder %s55, 0
      %p265 = por %p263, %p264
      %s267 = sadd.s32 %s266, 1
      %p270 = scmp.eq.s32.totalorder %s49, 1
      %p271 = scmp.ne.s32.totalorder %s266, %s268
      %p272 = scmp.eq.s32.totalorder %s49, 0
      %p273 = por %p271, %p272
      %p274 = scmp.ne.s32.totalorder %s266, %s268
      %p275 = scmp.eq.s32.totalorder %s54, 1
      %p276 = por %p274, %p275
      %p277 = scmp.ne.s32.totalorder %s268, %s269
      %p278 = scmp.eq.s32.totalorder %s54, 0
      %p279 = por %p277, %p278
      %p280 = scmp.ne.s32.totalorder %s268, %s269
      %p281 = scmp.eq.s32.totalorder %s55, 1
      %p282 = por %p280, %p281
      %p284 = scmp.ne.s32.totalorder %s269, %s283
      %p285 = scmp.eq.s32.totalorder %s55, 0
      %p286 = por %p284, %p285
      %s288 = sadd.s32 %s287, 1
      %p291 = scmp.eq.s32.totalorder %s49, 1
      %p292 = scmp.ne.s32.totalorder %s287, %s289
      %p293 = scmp.eq.s32.totalorder %s49, 0
      %p294 = por %p292, %p293
      %p295 = scmp.ne.s32.totalorder %s287, %s289
      %p296 = scmp.eq.s32.totalorder %s54, 1
      %p297 = por %p295, %p296
      %p298 = scmp.ne.s32.totalorder %s289, %s290
      %p299 = scmp.eq.s32.totalorder %s54, 0
      %p300 = por %p298, %p299
      %p301 = scmp.ne.s32.totalorder %s289, %s290
      %p302 = scmp.eq.s32.totalorder %s55, 1
      %p303 = por %p301, %p302
      %p305 = scmp.ne.s32.totalorder %s290, %s304
      %p306 = scmp.eq.s32.totalorder %s55, 0
      %p307 = por %p305, %p306
      %s309 = sadd.s32 %s308, 1
      %p312 = scmp.eq.s32.totalorder %s49, 1
      %p313 = scmp.ne.s32.totalorder %s308, %s310
      %p314 = scmp.eq.s32.totalorder %s49, 0
      %p315 = por %p313, %p314
      %p316 = scmp.ne.s32.totalorder %s308, %s310
      %p317 = scmp.eq.s32.totalorder %s54, 1
      %p318 = por %p316, %p317
      %p319 = scmp.ne.s32.totalorder %s310, %s311
      %p320 = scmp.eq.s32.totalorder %s54, 0
      %p321 = por %p319, %p320
      %p322 = scmp.ne.s32.totalorder %s310, %s311
      %p323 = scmp.eq.s32.totalorder %s55, 1
      %p324 = por %p322, %p323
      %p326 = scmp.ne.s32.totalorder %s311, %s325
      %p327 = scmp.eq.s32.totalorder %s55, 0
      %p328 = por %p326, %p327
      %s330 = sadd.s32 %s329, 1
      %p333 = scmp.eq.s32.totalorder %s49, 1
      %p334 = scmp.ne.s32.totalorder %s329, %s331
      %p335 = scmp.eq.s32.totalorder %s49, 0
      %p336 = por %p334, %p335
      %p337 = scmp.ne.s32.totalorder %s329, %s331
      %p338 = scmp.eq.s32.totalorder %s54, 1
      %p339 = por %p337, %p338
      %p340 = scmp.ne.s32.totalorder %s331, %s332
      %p341 = scmp.eq.s32.totalorder %s54, 0
      %p342 = por %p340, %p341
      %p343 = scmp.ne.s32.totalorder %s331, %s332
      %p344 = scmp.eq.s32.totalorder %s55, 1
      %p345 = por %p343, %p344
      %p347 = scmp.ne.s32.totalorder %s332, %s346
      %p348 = scmp.eq.s32.totalorder %s55, 0
      %p349 = por %p347, %p348
      %s351 = sadd.s32 %s350, 1
      %p354 = scmp.eq.s32.totalorder %s49, 1
      %p355 = scmp.ne.s32.totalorder %s350, %s352
      %p356 = scmp.eq.s32.totalorder %s49, 0
      %p357 = por %p355, %p356
      %p358 = scmp.ne.s32.totalorder %s350, %s352
      %p359 = scmp.eq.s32.totalorder %s54, 1
      %p360 = por %p358, %p359
      %p361 = scmp.ne.s32.totalorder %s352, %s353
      %p362 = scmp.eq.s32.totalorder %s54, 0
      %p363 = por %p361, %p362
      %p364 = scmp.ne.s32.totalorder %s352, %s353
      %p365 = scmp.eq.s32.totalorder %s55, 1
      %p366 = por %p364, %p365
      %p368 = scmp.ne.s32.totalorder %s353, %s367
      %p369 = scmp.eq.s32.totalorder %s55, 0
      %p370 = por %p368, %p369
      %s372 = sadd.s32 %s371, 1
      %p375 = scmp.eq.s32.totalorder %s49, 1
      %p376 = scmp.ne.s32.totalorder %s371, %s373
      %p377 = scmp.eq.s32.totalorder %s49, 0
      %p378 = por %p376, %p377
      %p379 = scmp.ne.s32.totalorder %s371, %s373
      %p380 = scmp.eq.s32.totalorder %s54, 1
      %p381 = por %p379, %p380
      %p382 = scmp.ne.s32.totalorder %s373, %s374
      %p383 = scmp.eq.s32.totalorder %s54, 0
      %p384 = por %p382, %p383
      %p385 = scmp.ne.s32.totalorder %s373, %s374
      %p386 = scmp.eq.s32.totalorder %s55, 1
      %p387 = por %p385, %p386
      %p389 = scmp.ne.s32.totalorder %s374, %s388
      %p390 = scmp.eq.s32.totalorder %s55, 0
      %p391 = por %p389, %p390
      %s393 = sadd.s32 %s392, 1
      %p396 = scmp.eq.s32.totalorder %s49, 1
      %p397 = scmp.ne.s32.totalorder %s392, %s394
      %p398 = scmp.eq.s32.totalorder %s49, 0
      %p399 = por %p397, %p398
      %p400 = scmp.ne.s32.totalorder %s392, %s394
      %p401 = scmp.eq.s32.totalorder %s54, 1
      %p402 = por %p400, %p401
      %p403 = scmp.ne.s32.totalorder %s394, %s395
      %p404 = scmp.eq.s32.totalorder %s54, 0
      %p405 = por %p403, %p404
      %p406 = scmp.ne.s32.totalorder %s394, %s395
      %p407 = scmp.eq.s32.totalorder %s55, 1
      %p408 = por %p406, %p407
      %p410 = scmp.ne.s32.totalorder %s395, %s409
      %p411 = scmp.eq.s32.totalorder %s55, 0
      %p412 = por %p410, %p411
      %s414 = sadd.s32 %s413, 1
      %p417 = scmp.eq.s32.totalorder %s49, 1
      %p418 = scmp.ne.s32.totalorder %s413, %s415
      %p419 = scmp.eq.s32.totalorder %s49, 0
      %p420 = por %p418, %p419
      %p421 = scmp.ne.s32.totalorder %s413, %s415
      %p422 = scmp.eq.s32.totalorder %s54, 1
      %p423 = por %p421, %p422
      %p424 = scmp.ne.s32.totalorder %s415, %s416
      %p425 = scmp.eq.s32.totalorder %s54, 0
      %p426 = por %p424, %p425
      %p427 = scmp.ne.s32.totalorder %s415, %s416
      %p428 = scmp.eq.s32.totalorder %s55, 1
      %p429 = por %p427, %p428
      %p431 = scmp.ne.s32.totalorder %s416, %s430
      %p432 = scmp.eq.s32.totalorder %s55, 0
      %p433 = por %p431, %p432
      %s435 = sadd.s32 %s434, 1
      %p438 = scmp.eq.s32.totalorder %s49, 1
      %p439 = scmp.ne.s32.totalorder %s434, %s436
      %p440 = scmp.eq.s32.totalorder %s49, 0
      %p441 = por %p439, %p440
      %p442 = scmp.ne.s32.totalorder %s434, %s436
      %p443 = scmp.eq.s32.totalorder %s54, 1
      %p444 = por %p442, %p443
      %p445 = scmp.ne.s32.totalorder %s436, %s437
      %p446 = scmp.eq.s32.totalorder %s54, 0
      %p447 = por %p445, %p446
      %p448 = scmp.ne.s32.totalorder %s436, %s437
      %p449 = scmp.eq.s32.totalorder %s55, 1
      %p450 = por %p448, %p449
      %p452 = scmp.ne.s32.totalorder %s437, %s451
      %p453 = scmp.eq.s32.totalorder %s55, 0
      %p454 = por %p452, %p453
      %s456 = sadd.s32 %s455, 1
      %p459 = scmp.eq.s32.totalorder %s49, 1
      %p460 = scmp.ne.s32.totalorder %s455, %s457
      %p461 = scmp.eq.s32.totalorder %s49, 0
      %p462 = por %p460, %p461
      %p463 = scmp.ne.s32.totalorder %s455, %s457
      %p464 = scmp.eq.s32.totalorder %s54, 1
      %p465 = por %p463, %p464
      %p466 = scmp.ne.s32.totalorder %s457, %s458
      %p467 = scmp.eq.s32.totalorder %s54, 0
      %p468 = por %p466, %p467
      %p469 = scmp.ne.s32.totalorder %s457, %s458
      %p470 = scmp.eq.s32.totalorder %s55, 1
      %p471 = por %p469, %p470
      %p473 = scmp.ne.s32.totalorder %s458, %s472
      %p474 = scmp.eq.s32.totalorder %s55, 0
      %p475 = por %p473, %p474
      %s477 = sadd.s32 %s476, 1
      %p480 = scmp.eq.s32.totalorder %s49, 1
      %p481 = scmp.ne.s32.totalorder %s476, %s478
      %p482 = scmp.eq.s32.totalorder %s49, 0
      %p483 = por %p481, %p482
      %p484 = scmp.ne.s32.totalorder %s476, %s478
      %p485 = scmp.eq.s32.totalorder %s54, 1
      %p486 = por %p484, %p485
      %p487 = scmp.ne.s32.totalorder %s478, %s479
      %p488 = scmp.eq.s32.totalorder %s54, 0
      %p489 = por %p487, %p488
      %p490 = scmp.ne.s32.totalorder %s478, %s479
      %p491 = scmp.eq.s32.totalorder %s55, 1
      %p492 = por %p490, %p491
      %p494 = scmp.ne.s32.totalorder %s479, %s493
      %p495 = scmp.eq.s32.totalorder %s55, 0
      %p496 = por %p494, %p495
      %s498 = sadd.s32 %s497, 1
      %p501 = scmp.eq.s32.totalorder %s49, 1
      %p502 = scmp.ne.s32.totalorder %s497, %s499
      %p503 = scmp.eq.s32.totalorder %s49, 0
      %p504 = por %p502, %p503
      %p505 = scmp.ne.s32.totalorder %s497, %s499
      %p506 = scmp.eq.s32.totalorder %s54, 1
      %p507 = por %p505, %p506
      %p508 = scmp.ne.s32.totalorder %s499, %s500
      %p509 = scmp.eq.s32.totalorder %s54, 0
      %p510 = por %p508, %p509
      %p511 = scmp.ne.s32.totalorder %s499, %s500
      %p512 = scmp.eq.s32.totalorder %s55, 1
      %p513 = por %p511, %p512
      %p515 = scmp.ne.s32.totalorder %s500, %s514
      %p516 = scmp.eq.s32.totalorder %s55, 0
      %p517 = por %p515, %p516
      %s519 = sadd.s32 %s518, 1
      %p522 = scmp.eq.s32.totalorder %s49, 1
      %p523 = scmp.ne.s32.totalorder %s518, %s520
      %p524 = scmp.eq.s32.totalorder %s49, 0
      %p525 = por %p523, %p524
      %p526 = scmp.ne.s32.totalorder %s518, %s520
      %p527 = scmp.eq.s32.totalorder %s54, 1
      %p528 = por %p526, %p527
      %p529 = scmp.ne.s32.totalorder %s520, %s521
      %p530 = scmp.eq.s32.totalorder %s54, 0
      %p531 = por %p529, %p530
      %p532 = scmp.ne.s32.totalorder %s520, %s521
      %p533 = scmp.eq.s32.totalorder %s55, 1
      %p534 = por %p532, %p533
      %p536 = scmp.ne.s32.totalorder %s521, %s535
      %p537 = scmp.eq.s32.totalorder %s55, 0
      %p538 = por %p536, %p537
      %s540 = sadd.s32 %s539, 1
      %p543 = scmp.eq.s32.totalorder %s49, 1
      %p544 = scmp.ne.s32.totalorder %s539, %s541
      %p545 = scmp.eq.s32.totalorder %s49, 0
      %p546 = por %p544, %p545
      %p547 = scmp.ne.s32.totalorder %s539, %s541
      %p548 = scmp.eq.s32.totalorder %s54, 1
      %p549 = por %p547, %p548
      %p550 = scmp.ne.s32.totalorder %s541, %s542
      %p551 = scmp.eq.s32.totalorder %s54, 0
      %p552 = por %p550, %p551
      %p553 = scmp.ne.s32.totalorder %s541, %s542
      %p554 = scmp.eq.s32.totalorder %s55, 1
      %p555 = por %p553, %p554
      %p557 = scmp.ne.s32.totalorder %s542, %s556
      %p558 = scmp.eq.s32.totalorder %s55, 0
      %p559 = por %p557, %p558
      %s561 = sadd.s32 %s560, 1
      %p564 = scmp.eq.s32.totalorder %s49, 1
      %p565 = scmp.ne.s32.totalorder %s560, %s562
      %p566 = scmp.eq.s32.totalorder %s49, 0
      %p567 = por %p565, %p566
      %p568 = scmp.ne.s32.totalorder %s560, %s562
      %p569 = scmp.eq.s32.totalorder %s54, 1
      %p570 = por %p568, %p569
      %p571 = scmp.ne.s32.totalorder %s562, %s563
      %p572 = scmp.eq.s32.totalorder %s54, 0
      %p573 = por %p571, %p572
      %p574 = scmp.ne.s32.totalorder %s562, %s563
      %p575 = scmp.eq.s32.totalorder %s55, 1
      %p576 = por %p574, %p575
      %p578 = scmp.ne.s32.totalorder %s563, %s577
      %p579 = scmp.eq.s32.totalorder %s55, 0
      %p580 = por %p578, %p579
      %s581 = ssub.s32 %s49, %s56
      %p582 = scmp.eq.s32.totalorder %s581, 0
      %s584 = sadd.s32 %s583, 1
      %s585 = scalar_select %p582, %s583, %s584
      %p588 = pneg %p582
      %p589 = scmp.eq.s32.totalorder %s49, 1
      %p590 = por %p588, %p589
      %p591 = scmp.ne.s32.totalorder %s583, %s586
      %p592 = scmp.eq.s32.totalorder %s49, 0
      %p593 = por %p591, %p592
      %p594 = scmp.ne.s32.totalorder %s583, %s586
      %p595 = scmp.eq.s32.totalorder %s54, 1
      %p596 = por %p594, %p595
      %p597 = scmp.ne.s32.totalorder %s586, %s587
      %p598 = scmp.eq.s32.totalorder %s54, 0
      %p599 = por %p597, %p598
      %p600 = scmp.ne.s32.totalorder %s586, %s587
      %p601 = scmp.eq.s32.totalorder %s55, 1
      %p602 = por %p600, %p601
      %p604 = scmp.ne.s32.totalorder %s587, %s603
      %p605 = scmp.eq.s32.totalorder %s55, 0
      %p606 = por %p604, %p605
      %p607 = scmp.le.s32.totalorder 1, %s49
      %p608 = scmp.lt.s32.totalorder %s49, 3
      %p609 = pnand %p607, %p608
      %p610 = pneg %p609
      // Predicated region
      $region9: #{tpu_custom_call.1} parent=5 // pred_check
        _
      $region10: #{tpu_custom_call.1} parent=5 // pred_check_branch
        %612 = sbr.rel (%p609) target = $region12
      $region11: #{tpu_custom_call.1} parent=5 // pred_region
        %s613 = ssub.s32 %s49, 1
        // Predicated region
        $region13: #{tpu_custom_call.1} parent=11 // pred_check
          %p614 = pneg %p174
        $region14: #{tpu_custom_call.1} parent=11 // pred_check_branch
          %616 = sbr.rel (%p614) target = $region16
        $region15: #{tpu_custom_call.1} parent=11 // pred_region
          %618 = vsyncadd [#allocation9], 0
          %s620 = sshll.u32 %s4, 4
          %s621 = int_to_ptr.hbm [resolvable:$true] %s620
          %s622 = sshll.u32 [#allocation10], 4
          %s623 = int_to_ptr.vmem [resolvable:$true] %s622
          %625 = dma.hbm_to_vmem [thread:$0]  %s621, 32, %s623, [#allocation9]
        $region16: #{tpu_custom_call.1} parent=11 // pred_fallthru
          _
        // Predicated region
        $region17: #{tpu_custom_call.1} parent=11 // pred_check
          %p626 = pneg %p195
        $region18: #{tpu_custom_call.1} parent=11 // pred_check_branch
          %628 = sbr.rel (%p626) target = $region20
        $region19: #{tpu_custom_call.1} parent=11 // pred_region
          %630 = vsyncadd [#allocation12], 0
          %s632 = sshll.u32 %s5, 4
          %s633 = int_to_ptr.hbm [resolvable:$true] %s632
          %s634 = sshll.u32 [#allocation11], 4
          %s635 = int_to_ptr.vmem [resolvable:$true] %s634
          %637 = dma.hbm_to_vmem [thread:$0]  %s633, 32, %s635, [#allocation12]
        $region20: #{tpu_custom_call.1} parent=11 // pred_fallthru
          _
        // Predicated region
        $region21: #{tpu_custom_call.1} parent=11 // pred_check
          %p638 = pneg %p216
        $region22: #{tpu_custom_call.1} parent=11 // pred_check_branch
          %640 = sbr.rel (%p638) target = $region24
        $region23: #{tpu_custom_call.1} parent=11 // pred_region
          %642 = vsyncadd [#allocation12], 0
          %s644 = sshll.u32 %s6, 4
          %s645 = int_to_ptr.hbm [resolvable:$true] %s644
          %s646 = sshll.u32 [#allocation13], 4
          %s647 = int_to_ptr.vmem [resolvable:$true] %s646
          %649 = dma.hbm_to_vmem [thread:$0]  %s645, 32, %s647, [#allocation12]
        $region24: #{tpu_custom_call.1} parent=11 // pred_fallthru
          _
        // Predicated region
        $region25: #{tpu_custom_call.1} parent=11 // pred_check
          %p650 = pneg %p237
        $region26: #{tpu_custom_call.1} parent=11 // pred_check_branch
          %652 = sbr.rel (%p650) target = $region28
        $region27: #{tpu_custom_call.1} parent=11 // pred_region
          %654 = vsyncadd [#allocation15], 0
          %s656 = sshll.u32 %s7, 4
          %s657 = int_to_ptr.hbm [resolvable:$true] %s656
          %s658 = sshll.u32 [#allocation14], 4
          %s659 = int_to_ptr.vmem [resolvable:$true] %s658
          %661 = dma.hbm_to_vmem [thread:$0]  %s657, 32, %s659, [#allocation15]
        $region28: #{tpu_custom_call.1} parent=11 // pred_fallthru
          _
        // Predicated region
        $region29: #{tpu_custom_call.1} parent=11 // pred_check
          %p662 = pneg %p258
        $region30: #{tpu_custom_call.1} parent=11 // pred_check_branch
          %664 = sbr.rel (%p662) target = $region32
        $region31: #{tpu_custom_call.1} parent=11 // pred_region
          %666 = vsyncadd [#allocation15], 0
          %s668 = sshll.u32 %s8, 4
          %s669 = int_to_ptr.hbm [resolvable:$true] %s668
          %s670 = sshll.u32 [#allocation16], 4
          %s671 = int_to_ptr.vmem [resolvable:$true] %s670
          %673 = dma.hbm_to_vmem [thread:$0]  %s669, 32, %s671, [#allocation15]
        $region32: #{tpu_custom_call.1} parent=11 // pred_fallthru
          _
        // Predicated region
        $region33: #{tpu_custom_call.1} parent=11 // pred_check
          %p674 = pneg %p279
        $region34: #{tpu_custom_call.1} parent=11 // pred_check_branch
          %676 = sbr.rel (%p674) target = $region36
        $region35: #{tpu_custom_call.1} parent=11 // pred_region
          %678 = vsyncadd [#allocation18], 0
          %s680 = sshll.u32 %s9, 4
          %s681 = int_to_ptr.hbm [resolvable:$true] %s680
          %s682 = sshll.u32 [#allocation17], 4
          %s683 = int_to_ptr.vmem [resolvable:$true] %s682
          %685 = dma.hbm_to_vmem [thread:$0]  %s681, 32, %s683, [#allocation18]
        $region36: #{tpu_custom_call.1} parent=11 // pred_fallthru
          _
        // Predicated region
        $region37: #{tpu_custom_call.1} parent=11 // pred_check
          %p686 = pneg %p300
        $region38: #{tpu_custom_call.1} parent=11 // pred_check_branch
          %688 = sbr.rel (%p686) target = $region40
        $region39: #{tpu_custom_call.1} parent=11 // pred_region
          %690 = vsyncadd [#allocation18], 0
          %s691 = sshll.u32 %s10, 4
          %s692 = int_to_ptr.hbm [resolvable:$true] %s691
          %s693 = sshll.u32 [#allocation19], 4
          %s694 = int_to_ptr.vmem [resolvable:$true] %s693
          %699 = dma.hbm_to_vmem [thread:$0]  %s692, 24576, %s694, [#allocation18], 768, 768, 48
        $region40: #{tpu_custom_call.1} parent=11 // pred_fallthru
          _
        // Predicated region
        $region41: #{tpu_custom_call.1} parent=11 // pred_check
          %p700 = pneg %p321
        $region42: #{tpu_custom_call.1} parent=11 // pred_check_branch
          %702 = sbr.rel (%p700) target = $region44
        $region43: #{tpu_custom_call.1} parent=11 // pred_region
          _
        $region44: #{tpu_custom_call.1} parent=11 // pred_fallthru
          _
        // Predicated region
        $region45: #{tpu_custom_call.1} parent=11 // pred_check
          %p703 = pneg %p342
        $region46: #{tpu_custom_call.1} parent=11 // pred_check_branch
          %705 = sbr.rel (%p703) target = $region48
        $region47: #{tpu_custom_call.1} parent=11 // pred_region
          %707 = vsyncadd [#allocation21], 0
          %s708 = sshll.u32 %s12, 4
          %s709 = int_to_ptr.hbm [resolvable:$true] %s708
          %s710 = sshll.u32 [#allocation20], 4
          %s711 = int_to_ptr.vmem [resolvable:$true] %s710
          %716 = dma.hbm_to_vmem [thread:$0]  %s709, 8192, %s711, [#allocation21], 256, 256, 16
        $region48: #{tpu_custom_call.1} parent=11 // pred_fallthru
          _
        // Predicated region
        $region49: #{tpu_custom_call.1} parent=11 // pred_check
          %p717 = pneg %p363
        $region50: #{tpu_custom_call.1} parent=11 // pred_check_branch
          %719 = sbr.rel (%p717) target = $region52
        $region51: #{tpu_custom_call.1} parent=11 // pred_region
          %721 = vsyncadd [#allocation21], 0
          %s723 = sshll.u32 %s13, 4
          %s724 = int_to_ptr.hbm [resolvable:$true] %s723
          %s725 = sshll.u32 [#allocation22], 4
          %s726 = int_to_ptr.vmem [resolvable:$true] %s725
          %728 = dma.hbm_to_vmem [thread:$0]  %s724, 32, %s726, [#allocation21]
        $region52: #{tpu_custom_call.1} parent=11 // pred_fallthru
          _
        // Predicated region
        $region53: #{tpu_custom_call.1} parent=11 // pred_check
          %p729 = pneg %p384
        $region54: #{tpu_custom_call.1} parent=11 // pred_check_branch
          %731 = sbr.rel (%p729) target = $region56
        $region55: #{tpu_custom_call.1} parent=11 // pred_region
          %733 = vsyncadd [#allocation24], 0
          %s734 = sshll.u32 %s14, 4
          %s735 = int_to_ptr.hbm [resolvable:$true] %s734
          %s736 = sshll.u32 [#allocation23], 4
          %s737 = int_to_ptr.vmem [resolvable:$true] %s736
          %742 = dma.hbm_to_vmem [thread:$0]  %s735, 24576, %s737, [#allocation24], 768, 768, 48
        $region56: #{tpu_custom_call.1} parent=11 // pred_fallthru
          _
        // Predicated region
        $region57: #{tpu_custom_call.1} parent=11 // pred_check
          %p743 = pneg %p405
        $region58: #{tpu_custom_call.1} parent=11 // pred_check_branch
          %745 = sbr.rel (%p743) target = $region60
        $region59: #{tpu_custom_call.1} parent=11 // pred_region
          _
        $region60: #{tpu_custom_call.1} parent=11 // pred_fallthru
          _
        // Predicated region
        $region61: #{tpu_custom_call.1} parent=11 // pred_check
          %p746 = pneg %p426
        $region62: #{tpu_custom_call.1} parent=11 // pred_check_branch
          %748 = sbr.rel (%p746) target = $region64
        $region63: #{tpu_custom_call.1} parent=11 // pred_region
          %750 = vsyncadd [#allocation24], 0
          %s751 = sshll.u32 %s16, 4
          %s752 = int_to_ptr.hbm [resolvable:$true] %s751
          %s753 = sshll.u32 [#allocation25], 4
          %s754 = int_to_ptr.vmem [resolvable:$true] %s753
          %759 = dma.hbm_to_vmem [thread:$0]  %s752, 8192, %s754, [#allocation24], 256, 256, 16
        $region64: #{tpu_custom_call.1} parent=11 // pred_fallthru
          _
        // Predicated region
        $region65: #{tpu_custom_call.1} parent=11 // pred_check
          %p760 = pneg %p447
        $region66: #{tpu_custom_call.1} parent=11 // pred_check_branch
          %762 = sbr.rel (%p760) target = $region68
        $region67: #{tpu_custom_call.1} parent=11 // pred_region
          %764 = vsyncadd [#allocation27], 0
          %s766 = sshll.u32 %s17, 4
          %s767 = int_to_ptr.hbm [resolvable:$true] %s766
          %s768 = sshll.u32 [#allocation26], 4
          %s769 = int_to_ptr.vmem [resolvable:$true] %s768
          %771 = dma.hbm_to_vmem [thread:$0]  %s767, 32, %s769, [#allocation27]
        $region68: #{tpu_custom_call.1} parent=11 // pred_fallthru
          _
        // Predicated region
        $region69: #{tpu_custom_call.1} parent=11 // pred_check
          %p772 = pneg %p468
        $region70: #{tpu_custom_call.1} parent=11 // pred_check_branch
          %774 = sbr.rel (%p772) target = $region72
        $region71: #{tpu_custom_call.1} parent=11 // pred_region
          %776 = vsyncadd [#allocation27], 0
          %s777 = sshll.u32 %s18, 4
          %s778 = int_to_ptr.hbm [resolvable:$true] %s777
          %s779 = sshll.u32 [#allocation28], 4
          %s780 = int_to_ptr.vmem [resolvable:$true] %s779
          %785 = dma.hbm_to_vmem [thread:$0]  %s778, 16384, %s780, [#allocation27], 512, 512, 32
        $region72: #{tpu_custom_call.1} parent=11 // pred_fallthru
          _
        // Predicated region
        $region73: #{tpu_custom_call.1} parent=11 // pred_check
          %p786 = pneg %p489
        $region74: #{tpu_custom_call.1} parent=11 // pred_check_branch
          %788 = sbr.rel (%p786) target = $region76
        $region75: #{tpu_custom_call.1} parent=11 // pred_region
          _
        $region76: #{tpu_custom_call.1} parent=11 // pred_fallthru
          _
        // Predicated region
        $region77: #{tpu_custom_call.1} parent=11 // pred_check
          %p789 = pneg %p510
        $region78: #{tpu_custom_call.1} parent=11 // pred_check_branch
          %791 = sbr.rel (%p789) target = $region80
        $region79: #{tpu_custom_call.1} parent=11 // pred_region
          %793 = vsyncadd [#allocation30], 0
          %s794 = sshll.u32 %s20, 4
          %s795 = int_to_ptr.hbm [resolvable:$true] %s794
          %s796 = sshll.u32 [#allocation29], 4
          %s797 = int_to_ptr.vmem [resolvable:$true] %s796
          %802 = dma.hbm_to_vmem [thread:$0]  %s795, 16384, %s797, [#allocation30], 256, 256, 16
        $region80: #{tpu_custom_call.1} parent=11 // pred_fallthru
          _
        // Predicated region
        $region81: #{tpu_custom_call.1} parent=11 // pred_check
          %p803 = pneg %p531
        $region82: #{tpu_custom_call.1} parent=11 // pred_check_branch
          %805 = sbr.rel (%p803) target = $region84
        $region83: #{tpu_custom_call.1} parent=11 // pred_region
          _
        $region84: #{tpu_custom_call.1} parent=11 // pred_fallthru
          _
        // Predicated region
        $region85: #{tpu_custom_call.1} parent=11 // pred_check
          %p806 = pneg %p552
        $region86: #{tpu_custom_call.1} parent=11 // pred_check_branch
          %808 = sbr.rel (%p806) target = $region88
        $region87: #{tpu_custom_call.1} parent=11 // pred_region
          _
        $region88: #{tpu_custom_call.1} parent=11 // pred_fallthru
          _
        // Predicated region
        $region89: #{tpu_custom_call.1} parent=11 // pred_check
          %p809 = pneg %p573
        $region90: #{tpu_custom_call.1} parent=11 // pred_check_branch
          %811 = sbr.rel (%p809) target = $region92
        $region91: #{tpu_custom_call.1} parent=11 // pred_region
          _
        $region92: #{tpu_custom_call.1} parent=11 // pred_fallthru
          _
      $region12: #{tpu_custom_call.1} parent=5 // pred_fallthru
        _
      %p812 = scmp.lt.s32.totalorder %s49, 2
      // Predicated region
      $region93: #{tpu_custom_call.1} parent=5 // pred_check
        %p813 = pneg %p812
      $region94: #{tpu_custom_call.1} parent=5 // pred_check_branch
        %815 = sbr.rel (%p813) target = $region96
      $region95: #{tpu_custom_call.1} parent=5 // pred_region
        // Predicated region
        $region97: #{tpu_custom_call.1} parent=95 // pred_check
          %p816 = pneg %p69
        $region98: #{tpu_custom_call.1} parent=95 // pred_check_branch
          %818 = sbr.rel (%p816) target = $region100
        $region99: #{tpu_custom_call.1} parent=95 // pred_region
          %s819 = sand.u32 %s59, 1
          %s820 = scalar_lea.sflag [#allocation3], %s819
          %s821 = sand.u32 %s59, 1
          %s822 = smul.addr %s821, 32
          %s823 = scalar_lea.vmem [#allocation2], %s822
          %825 = vsyncadd %s820, 0
          %s826 = smul.addr %s49, 4
          %s827 = smul.addr %s826, 8
          %s828 = scalar_lea.hbm %s0, %s827
          %s829 = sshll.u32 %s828, 4
          %s830 = int_to_ptr.hbm [resolvable:$true] %s829
          %s831 = sshll.u32 %s823, 4
          %s832 = int_to_ptr.vmem [resolvable:$true] %s831
          %837 = dma.hbm_to_vmem [thread:$0]  %s830, 512, %s832, %s820, 256, 256, 16
        $region100: #{tpu_custom_call.1} parent=95 // pred_fallthru
          _
        // Predicated region
        $region101: #{tpu_custom_call.1} parent=95 // pred_check
          %p838 = pneg %p95
        $region102: #{tpu_custom_call.1} parent=95 // pred_check_branch
          %840 = sbr.rel (%p838) target = $region104
        $region103: #{tpu_custom_call.1} parent=95 // pred_region
          %s841 = sand.u32 %s49, 1
          %s842 = scalar_lea.sflag [#allocation6], %s841
          %s843 = sand.u32 %s85, 1
          %s844 = smul.addr %s843, 32
          %s845 = scalar_lea.vmem [#allocation5], %s844
          %847 = vsyncadd %s842, 0
          %s848 = smul.addr %s49, 4
          %s849 = smul.addr %s848, 8
          %s850 = scalar_lea.hbm %s1, %s849
          %s851 = sshll.u32 %s850, 4
          %s852 = int_to_ptr.hbm [resolvable:$true] %s851
          %s853 = sshll.u32 %s845, 4
          %s854 = int_to_ptr.vmem [resolvable:$true] %s853
          %859 = dma.hbm_to_vmem [thread:$0]  %s852, 512, %s854, %s842, 256, 256, 16
        $region104: #{tpu_custom_call.1} parent=95 // pred_fallthru
          _
        // Predicated region
        $region105: #{tpu_custom_call.1} parent=95 // pred_check
          %p860 = pneg %p121
        $region106: #{tpu_custom_call.1} parent=95 // pred_check_branch
          %862 = sbr.rel (%p860) target = $region108
        $region107: #{tpu_custom_call.1} parent=95 // pred_region
          %s863 = sand.u32 %s49, 1
          %s864 = scalar_lea.sflag [#allocation6], %s863
          %s865 = sand.u32 %s111, 1
          %s866 = smul.addr %s865, 4
          %s867 = scalar_lea.vmem [#allocation7], %s866
          %869 = vsyncadd %s864, 0
          %s870 = smul.addr %s49, 2
          %s871 = smul.addr %s870, 2
          %s872 = scalar_lea.hbm %s2, %s871
          %s873 = sshll.u32 %s872, 4
          %s874 = int_to_ptr.hbm [resolvable:$true] %s873
          %s875 = sshll.u32 %s867, 4
          %s876 = int_to_ptr.vmem [resolvable:$true] %s875
          %881 = dma.hbm_to_vmem [thread:$0]  %s874, 64, %s876, %s864, 32, 32, 2
        $region108: #{tpu_custom_call.1} parent=95 // pred_fallthru
          _
        // Predicated region
        $region109: #{tpu_custom_call.1} parent=95 // pred_check
          %p882 = pneg %p147
        $region110: #{tpu_custom_call.1} parent=95 // pred_check_branch
          %884 = sbr.rel (%p882) target = $region112
        $region111: #{tpu_custom_call.1} parent=95 // pred_region
          %s885 = sand.u32 %s49, 1
          %s886 = scalar_lea.sflag [#allocation9], %s885
          %s887 = sand.u32 %s137, 1
          %s888 = smul.addr %s887, 4
          %s889 = scalar_lea.vmem [#allocation8], %s888
          %891 = vsyncadd %s886, 0
          %s892 = smul.addr %s49, 2
          %s893 = smul.addr %s892, 2
          %s894 = scalar_lea.hbm %s3, %s893
          %s895 = sshll.u32 %s894, 4
          %s896 = int_to_ptr.hbm [resolvable:$true] %s895
          %s897 = sshll.u32 %s889, 4
          %s898 = int_to_ptr.vmem [resolvable:$true] %s897
          %903 = dma.hbm_to_vmem [thread:$0]  %s896, 64, %s898, %s886, 32, 32, 2
        $region112: #{tpu_custom_call.1} parent=95 // pred_fallthru
          _
      $region96: #{tpu_custom_call.1} parent=5 // pred_fallthru
        _
      %p904 = scmp.le.s32.totalorder 1, %s49
      %p905 = scmp.lt.s32.totalorder %s49, 3
      %p906 = pnand %p904, %p905
      %p907 = pneg %p906
      // Predicated region
      $region113: #{tpu_custom_call.1} parent=5 // pred_check
        _
      $region114: #{tpu_custom_call.1} parent=5 // pred_check_branch
        %909 = sbr.rel (%p906) target = $region116
      $region115: #{tpu_custom_call.1} parent=5 // pred_region
        %s910 = ssub.s32 %s49, 1
        %s911 = sand.u32 %s62, 1
        %s912 = scalar_lea.sflag [#allocation3], %s911
        %s913 = sand.u32 %s62, 1
        %s914 = smul.addr %s913, 32
        %s915 = scalar_lea.vmem [#allocation2], %s914
        // Predicated region
        $region117: #{tpu_custom_call.1} parent=115 // pred_check
          %p916 = pneg %p75
        $region118: #{tpu_custom_call.1} parent=115 // pred_check_branch
          %918 = sbr.rel (%p916) target = $region120
        $region119: #{tpu_custom_call.1} parent=115 // pred_region
          %920 = dma.done %s912, 512
        $region120: #{tpu_custom_call.1} parent=115 // pred_fallthru
          _
        %s921 = sand.u32 %s54, 1
        %s922 = scalar_lea.sflag [#allocation6], %s921
        %s923 = sand.u32 %s88, 1
        %s924 = smul.addr %s923, 32
        %s925 = scalar_lea.vmem [#allocation5], %s924
        // Predicated region
        $region121: #{tpu_custom_call.1} parent=115 // pred_check
          %p926 = pneg %p101
        $region122: #{tpu_custom_call.1} parent=115 // pred_check_branch
          %928 = sbr.rel (%p926) target = $region124
        $region123: #{tpu_custom_call.1} parent=115 // pred_region
          %930 = dma.done %s922, 512
        $region124: #{tpu_custom_call.1} parent=115 // pred_fallthru
          _
        %s931 = sand.u32 %s54, 1
        %s932 = scalar_lea.sflag [#allocation6], %s931
        %s933 = sand.u32 %s114, 1
        %s934 = smul.addr %s933, 4
        %s935 = scalar_lea.vmem [#allocation7], %s934
        // Predicated region
        $region125: #{tpu_custom_call.1} parent=115 // pred_check
          %p936 = pneg %p127
        $region126: #{tpu_custom_call.1} parent=115 // pred_check_branch
          %938 = sbr.rel (%p936) target = $region128
        $region127: #{tpu_custom_call.1} parent=115 // pred_region
          %940 = dma.done %s932, 64
        $region128: #{tpu_custom_call.1} parent=115 // pred_fallthru
          _
        %s941 = sand.u32 %s54, 1
        %s942 = scalar_lea.sflag [#allocation9], %s941
        %s943 = sand.u32 %s140, 1
        %s944 = smul.addr %s943, 4
        %s945 = scalar_lea.vmem [#allocation8], %s944
        // Predicated region
        $region129: #{tpu_custom_call.1} parent=115 // pred_check
          %p946 = pneg %p153
        $region130: #{tpu_custom_call.1} parent=115 // pred_check_branch
          %948 = sbr.rel (%p946) target = $region132
        $region131: #{tpu_custom_call.1} parent=115 // pred_region
          %950 = dma.done %s942, 64
        $region132: #{tpu_custom_call.1} parent=115 // pred_fallthru
          _
        // Predicated region
        $region133: #{tpu_custom_call.1} parent=115 // pred_check
          %p951 = pneg %p174
        $region134: #{tpu_custom_call.1} parent=115 // pred_check_branch
          %953 = sbr.rel (%p951) target = $region136
        $region135: #{tpu_custom_call.1} parent=115 // pred_region
          %955 = dma.done [#allocation9], 32
        $region136: #{tpu_custom_call.1} parent=115 // pred_fallthru
          _
        // Predicated region
        $region137: #{tpu_custom_call.1} parent=115 // pred_check
          %p956 = pneg %p195
        $region138: #{tpu_custom_call.1} parent=115 // pred_check_branch
          %958 = sbr.rel (%p956) target = $region140
        $region139: #{tpu_custom_call.1} parent=115 // pred_region
          %960 = dma.done [#allocation12], 32
        $region140: #{tpu_custom_call.1} parent=115 // pred_fallthru
          _
        // Predicated region
        $region141: #{tpu_custom_call.1} parent=115 // pred_check
          %p961 = pneg %p216
        $region142: #{tpu_custom_call.1} parent=115 // pred_check_branch
          %963 = sbr.rel (%p961) target = $region144
        $region143: #{tpu_custom_call.1} parent=115 // pred_region
          %965 = dma.done [#allocation12], 32
        $region144: #{tpu_custom_call.1} parent=115 // pred_fallthru
          _
        // Predicated region
        $region145: #{tpu_custom_call.1} parent=115 // pred_check
          %p966 = pneg %p237
        $region146: #{tpu_custom_call.1} parent=115 // pred_check_branch
          %968 = sbr.rel (%p966) target = $region148
        $region147: #{tpu_custom_call.1} parent=115 // pred_region
          %970 = dma.done [#allocation15], 32
        $region148: #{tpu_custom_call.1} parent=115 // pred_fallthru
          _
        // Predicated region
        $region149: #{tpu_custom_call.1} parent=115 // pred_check
          %p971 = pneg %p258
        $region150: #{tpu_custom_call.1} parent=115 // pred_check_branch
          %973 = sbr.rel (%p971) target = $region152
        $region151: #{tpu_custom_call.1} parent=115 // pred_region
          %975 = dma.done [#allocation15], 32
        $region152: #{tpu_custom_call.1} parent=115 // pred_fallthru
          _
        // Predicated region
        $region153: #{tpu_custom_call.1} parent=115 // pred_check
          %p976 = pneg %p279
        $region154: #{tpu_custom_call.1} parent=115 // pred_check_branch
          %978 = sbr.rel (%p976) target = $region156
        $region155: #{tpu_custom_call.1} parent=115 // pred_region
          %980 = dma.done [#allocation18], 32
        $region156: #{tpu_custom_call.1} parent=115 // pred_fallthru
          _
        // Predicated region
        $region157: #{tpu_custom_call.1} parent=115 // pred_check
          %p981 = pneg %p300
        $region158: #{tpu_custom_call.1} parent=115 // pred_check_branch
          %983 = sbr.rel (%p981) target = $region160
        $region159: #{tpu_custom_call.1} parent=115 // pred_region
          %985 = dma.done [#allocation18], 24576
        $region160: #{tpu_custom_call.1} parent=115 // pred_fallthru
          _
        // Predicated region
        $region161: #{tpu_custom_call.1} parent=115 // pred_check
          %p986 = pneg %p342
        $region162: #{tpu_custom_call.1} parent=115 // pred_check_branch
          %988 = sbr.rel (%p986) target = $region164
        $region163: #{tpu_custom_call.1} parent=115 // pred_region
          %990 = dma.done [#allocation21], 8192
        $region164: #{tpu_custom_call.1} parent=115 // pred_fallthru
          _
        // Predicated region
        $region165: #{tpu_custom_call.1} parent=115 // pred_check
          %p991 = pneg %p363
        $region166: #{tpu_custom_call.1} parent=115 // pred_check_branch
          %993 = sbr.rel (%p991) target = $region168
        $region167: #{tpu_custom_call.1} parent=115 // pred_region
          %995 = dma.done [#allocation21], 32
        $region168: #{tpu_custom_call.1} parent=115 // pred_fallthru
          _
        // Predicated region
        $region169: #{tpu_custom_call.1} parent=115 // pred_check
          %p996 = pneg %p384
        $region170: #{tpu_custom_call.1} parent=115 // pred_check_branch
          %998 = sbr.rel (%p996) target = $region172
        $region171: #{tpu_custom_call.1} parent=115 // pred_region
          %1000 = dma.done [#allocation24], 24576
        $region172: #{tpu_custom_call.1} parent=115 // pred_fallthru
          _
        // Predicated region
        $region173: #{tpu_custom_call.1} parent=115 // pred_check
          %p1001 = pneg %p426
        $region174: #{tpu_custom_call.1} parent=115 // pred_check_branch
          %1003 = sbr.rel (%p1001) target = $region176
        $region175: #{tpu_custom_call.1} parent=115 // pred_region
          %1005 = dma.done [#allocation24], 8192
        $region176: #{tpu_custom_call.1} parent=115 // pred_fallthru
          _
        // Predicated region
        $region177: #{tpu_custom_call.1} parent=115 // pred_check
          %p1006 = pneg %p447
        $region178: #{tpu_custom_call.1} parent=115 // pred_check_branch
          %1008 = sbr.rel (%p1006) target = $region180
        $region179: #{tpu_custom_call.1} parent=115 // pred_region
          %1010 = dma.done [#allocation27], 32
        $region180: #{tpu_custom_call.1} parent=115 // pred_fallthru
          _
        // Predicated region
        $region181: #{tpu_custom_call.1} parent=115 // pred_check
          %p1011 = pneg %p468
        $region182: #{tpu_custom_call.1} parent=115 // pred_check_branch
          %1013 = sbr.rel (%p1011) target = $region184
        $region183: #{tpu_custom_call.1} parent=115 // pred_region
          %1015 = dma.done [#allocation27], 16384
        $region184: #{tpu_custom_call.1} parent=115 // pred_fallthru
          _
        // Predicated region
        $region185: #{tpu_custom_call.1} parent=115 // pred_check
          %p1016 = pneg %p510
        $region186: #{tpu_custom_call.1} parent=115 // pred_check_branch
          %1018 = sbr.rel (%p1016) target = $region188
        $region187: #{tpu_custom_call.1} parent=115 // pred_region
          %1020 = dma.done [#allocation30], 16384
        $region188: #{tpu_custom_call.1} parent=115 // pred_fallthru
          _
        %s1021 = sand.u32 %s62, 1
        %s1022 = scalar_lea.sflag [#allocation3], %s1021
        %s1023 = sand.u32 %s62, 1
        %s1024 = smul.addr %s1023, 32
        %s1025 = scalar_lea.vmem [#allocation2], %s1024
        %p1026 = pneg %p75
        %p1027 = pneg %p72
        %s1028 = sand.u32 %s54, 1
        %s1029 = scalar_lea.sflag [#allocation6], %s1028
        %s1030 = sand.u32 %s88, 1
        %s1031 = smul.addr %s1030, 32
        %s1032 = scalar_lea.vmem [#allocation5], %s1031
        %p1033 = pneg %p101
        %p1034 = pneg %p98
        %s1035 = sand.u32 %s54, 1
        %s1036 = scalar_lea.sflag [#allocation6], %s1035
        %s1037 = sand.u32 %s114, 1
        %s1038 = smul.addr %s1037, 4
        %s1039 = scalar_lea.vmem [#allocation7], %s1038
        %p1040 = pneg %p127
        %p1041 = pneg %p124
        %s1042 = sand.u32 %s54, 1
        %s1043 = scalar_lea.sflag [#allocation9], %s1042
        %s1044 = sand.u32 %s140, 1
        %s1045 = smul.addr %s1044, 4
        %s1046 = scalar_lea.vmem [#allocation8], %s1045
        %p1047 = pneg %p153
        %p1048 = pneg %p150
        %p1049 = pneg %p174
        %p1050 = pneg %p171
        %p1051 = pneg %p195
        %p1052 = pneg %p192
        %p1053 = pneg %p216
        %p1054 = pneg %p213
        %p1055 = pneg %p237
        %p1056 = pneg %p234
        %p1057 = pneg %p258
        %p1058 = pneg %p255
        %p1059 = pneg %p279
        %p1060 = pneg %p276
        %p1061 = pneg %p300
        %p1062 = pneg %p297
        %p1063 = pneg %p321
        %p1064 = pneg %p318
        %p1065 = pneg %p342
        %p1066 = pneg %p339
        %p1067 = pneg %p363
        %p1068 = pneg %p360
        %p1069 = pneg %p384
        %p1070 = pneg %p381
        %p1071 = pneg %p405
        %p1072 = pneg %p402
        %p1073 = pneg %p426
        %p1074 = pneg %p423
        %p1075 = pneg %p447
        %p1076 = pneg %p444
        %p1077 = pneg %p468
        %p1078 = pneg %p465
        %p1079 = pneg %p489
        %p1080 = pneg %p486
        %p1081 = pneg %p510
        %p1082 = pneg %p507
        %p1083 = pneg %p531
        %p1084 = pneg %p528
        %p1085 = pneg %p552
        %p1086 = pneg %p549
        %p1087 = pneg %p573
        %p1088 = pneg %p570
        %p1089 = pneg %p599
        %p1090 = pneg %p596
        %s1091 = sand.u32 %s586, 1
        %s1092 = scalar_lea.sflag [#allocation4], %s1091
        %s1093 = sand.u32 %s586, 1
        %s1094 = smul.addr %s1093, 32
        %s1095 = scalar_lea.vmem [#allocation31], %s1094
        %v1096 = vld [vmem:[%s915] sm:$0xff]
        %v1097 = vld [vmem:[%s915 + $0x8] sm:$0xff]
        %v1098 = vld [vmem:[%s915 + $0x10] sm:$0xff]
        %v1099 = vld [vmem:[%s915 + $0x18] sm:$0xff]
        %v1100 = vld [vmem:[%s945] sm:$0x3]
        %v1101 = vld [vmem:[%s945 + $0x2] sm:$0x3]
        %v1102 = vunpack.c.0.s8 %v1100
        %v1103 = vunpack.c.0.s8 %v1101
        %v1104 = vcvt.s32.f32 %v1102
        %v1105 = vcvt.s32.f32 %v1103
        %v1106 = vsub.f32 %v1104, 1.0
        %v1107 = vsub.f32 %v1105, 1.0
        %v1108 = vmul.f32 %v1106, 1e+09
        %v1109 = vmul.f32 %v1107, 1e+09
        %v1110 = vadd.f32 %v1096, %v1097
        %1111 = vadd.xlane.f32.xlu0 %v1110
        %v1112 = vpop.xlane.xlu0 %1111
        %v1113 = vadd.f32 %v1098, %v1099
        %1114 = vadd.xlane.f32.xlu0 %v1113
        %v1115 = vpop.xlane.xlu0 %1114
        %v1116 = vrcp.pop 256.0
        %v1117 = vmul.f32 256.0, %v1116
        %v1118 = vsub.f32 1.0, %v1117
        %v1119 = vmul.f32 %v1116, %v1118
        %v1120 = vadd.f32 %v1116, %v1119
        %vm1121 = vweird.f32 %v1116
        %v1122 = vsel %vm1121, %v1116, %v1120
        %v1123 = vmul.f32 %v1112, %v1122
        %v1124 = vmul.f32 %v1115, %v1122
        %v1125 = vsub.f32 %v1096, %v1123
        %v1126 = vsub.f32 %v1097, %v1123
        %v1127 = vsub.f32 %v1098, %v1124
        %v1128 = vsub.f32 %v1099, %v1124
        %v1129 = vmul.f32 %v1125, %v1125
        %v1130 = vmul.f32 %v1126, %v1126
        %v1131 = vmul.f32 %v1127, %v1127
        %v1132 = vmul.f32 %v1128, %v1128
        %v1133 = vadd.f32 %v1129, %v1130
        %1134 = vadd.xlane.f32.xlu0 %v1133
        %v1135 = vpop.xlane.xlu0 %1134
        %v1136 = vadd.f32 %v1131, %v1132
        %1137 = vadd.xlane.f32.xlu0 %v1136
        %v1138 = vpop.xlane.xlu0 %1137
        %v1139 = vmul.f32 %v1135, 0.003921569
        %v1140 = vmul.f32 %v1138, 0.003921569
        %v1141 = vrsqrt.pop %v1139
        %v1142 = vmul.f32 %v1141, %v1139
        %v1143 = vmul.f32 %v1142, %v1141
        %v1144 = vmul.f32 0.5, %v1143
        %v1145 = vsub.f32 1.5, %v1144
        %v1146 = vmul.f32 %v1141, %v1145
        %v1147 = vmul.f32 %v1139, %v1146
        %vm1148 = vcmp.eq.f32.partialorder %v1139, inf
        %v1149 = vsel %vm1148, %v1139, %v1147
        %vm1150 = vcmp.eq.f32.partialorder %v1139, 0.0
        %v1151 = vand.u32 %v1139, 2147483648
        %v1152 = vsel %vm1150, %v1151, %v1149
        %v1153 = vrsqrt.pop %v1140
        %v1154 = vmul.f32 %v1153, %v1140
        %v1155 = vmul.f32 %v1154, %v1153
        %v1156 = vmul.f32 0.5, %v1155
        %v1157 = vsub.f32 1.5, %v1156
        %v1158 = vmul.f32 %v1153, %v1157
        %v1159 = vmul.f32 %v1140, %v1158
        %vm1160 = vcmp.eq.f32.partialorder %v1140, inf
        %v1161 = vsel %vm1160, %v1140, %v1159
        %vm1162 = vcmp.eq.f32.partialorder %v1140, 0.0
        %v1163 = vand.u32 %v1140, 2147483648
        %v1164 = vsel %vm1162, %v1163, %v1161
        %v1165 = vadd.f32 %v1152, 1e-06
        %v1166 = vadd.f32 %v1164, 1e-06
        %v1167 = vrcp.pop %v1165
        %v1168 = vrcp.pop %v1166
        %v1169 = vld [vmem:[#allocation10] sm:$0x3]
        %v1170 = vmul.f32 %v1125, %v1167
        %v1171 = vmul.f32 %v1126, %v1167
        %v1172 = vmul.f32 %v1127, %v1168
        %v1173 = vmul.f32 %v1128, %v1168
        %v1175 = vperm.slane %v1169, 0
        %v1176 = vperm.slane %v1169, 1
        %v1179 = vmul.f32 %v1175, %v1170
        %v1180 = vmul.f32 %v1176, %v1171
        %v1181 = vmul.f32 %v1175, %v1172
        %v1182 = vmul.f32 %v1176, %v1173
        %v1183 = vld [vmem:[#allocation11] sm:$0x3]
        %v1185 = vperm.slane %v1183, 0
        %v1186 = vperm.slane %v1183, 1
        %v1189 = vadd.f32 %v1179, %v1185
        %v1190 = vadd.f32 %v1180, %v1186
        %v1191 = vadd.f32 %v1181, %v1185
        %v1192 = vadd.f32 %v1182, %v1186
        %v1193 = vld [vmem:[#allocation19] sm:$0xff]
        %v1194 = vld [vmem:[#allocation19 + $0x8] sm:$0xff]
        %v1195 = vld [vmem:[#allocation19 + $0x10] sm:$0xff]
        %v1196 = vld [vmem:[#allocation19 + $0x18] sm:$0xff]
        %v1197 = vld [vmem:[#allocation19 + $0x20] sm:$0xff]
        %v1198 = vld [vmem:[#allocation19 + $0x28] sm:$0xff]
        %v1199 = vld [vmem:[#allocation19 + $0x30] sm:$0xff]
        %v1200 = vld [vmem:[#allocation19 + $0x38] sm:$0xff]
        %v1201 = vld [vmem:[#allocation19 + $0x40] sm:$0xff]
        %v1202 = vld [vmem:[#allocation19 + $0x48] sm:$0xff]
        %v1203 = vld [vmem:[#allocation19 + $0x50] sm:$0xff]
        %v1204 = vld [vmem:[#allocation19 + $0x58] sm:$0xff]
        %v1205 = vld [vmem:[#allocation19 + $0x60] sm:$0xff]
        %v1206 = vld [vmem:[#allocation19 + $0x68] sm:$0xff]
        %v1207 = vld [vmem:[#allocation19 + $0x70] sm:$0xff]
        %v1208 = vld [vmem:[#allocation19 + $0x78] sm:$0xff]
        %v1209 = vld [vmem:[#allocation19 + $0x80] sm:$0xff]
        %v1210 = vld [vmem:[#allocation19 + $0x88] sm:$0xff]
        %v1211 = vld [vmem:[#allocation19 + $0x90] sm:$0xff]
        %v1212 = vld [vmem:[#allocation19 + $0x98] sm:$0xff]
        %v1213 = vld [vmem:[#allocation19 + $0xa0] sm:$0xff]
        %v1214 = vld [vmem:[#allocation19 + $0xa8] sm:$0xff]
        %v1215 = vld [vmem:[#allocation19 + $0xb0] sm:$0xff]
        %v1216 = vld [vmem:[#allocation19 + $0xb8] sm:$0xff]
        %v1217 = vld [vmem:[#allocation19 + $0xc0] sm:$0xff]
        %v1218 = vld [vmem:[#allocation19 + $0xc8] sm:$0xff]
        %v1219 = vld [vmem:[#allocation19 + $0xd0] sm:$0xff]
        %v1220 = vld [vmem:[#allocation19 + $0xd8] sm:$0xff]
        %v1221 = vld [vmem:[#allocation19 + $0xe0] sm:$0xff]
        %v1222 = vld [vmem:[#allocation19 + $0xe8] sm:$0xff]
        %v1223 = vld [vmem:[#allocation19 + $0xf0] sm:$0xff]
        %v1224 = vld [vmem:[#allocation19 + $0xf8] sm:$0xff]
        %v1225 = vld [vmem:[#allocation19 + $0x100] sm:$0xff]
        %v1226 = vld [vmem:[#allocation19 + $0x108] sm:$0xff]
        %v1227 = vld [vmem:[#allocation19 + $0x110] sm:$0xff]
        %v1228 = vld [vmem:[#allocation19 + $0x118] sm:$0xff]
        %v1229 = vld [vmem:[#allocation19 + $0x120] sm:$0xff]
        %v1230 = vld [vmem:[#allocation19 + $0x128] sm:$0xff]
        %v1231 = vld [vmem:[#allocation19 + $0x130] sm:$0xff]
        %v1232 = vld [vmem:[#allocation19 + $0x138] sm:$0xff]
        %v1233 = vld [vmem:[#allocation19 + $0x140] sm:$0xff]
        %v1234 = vld [vmem:[#allocation19 + $0x148] sm:$0xff]
        %v1235 = vld [vmem:[#allocation19 + $0x150] sm:$0xff]
        %v1236 = vld [vmem:[#allocation19 + $0x158] sm:$0xff]
        %v1237 = vld [vmem:[#allocation19 + $0x160] sm:$0xff]
        %v1238 = vld [vmem:[#allocation19 + $0x168] sm:$0xff]
        %v1239 = vld [vmem:[#allocation19 + $0x170] sm:$0xff]
        %v1240 = vld [vmem:[#allocation19 + $0x178] sm:$0xff]
        %v1241 = vld [vmem:[#allocation19 + $0x180] sm:$0xff]
        %v1242 = vld [vmem:[#allocation19 + $0x188] sm:$0xff]
        %v1243 = vld [vmem:[#allocation19 + $0x190] sm:$0xff]
        %v1244 = vld [vmem:[#allocation19 + $0x198] sm:$0xff]
        %v1245 = vld [vmem:[#allocation19 + $0x1a0] sm:$0xff]
        %v1246 = vld [vmem:[#allocation19 + $0x1a8] sm:$0xff]
        %v1247 = vld [vmem:[#allocation19 + $0x1b0] sm:$0xff]
        %v1248 = vld [vmem:[#allocation19 + $0x1b8] sm:$0xff]
        %v1249 = vld [vmem:[#allocation19 + $0x1c0] sm:$0xff]
        %v1250 = vld [vmem:[#allocation19 + $0x1c8] sm:$0xff]
        %v1251 = vld [vmem:[#allocation19 + $0x1d0] sm:$0xff]
        %v1252 = vld [vmem:[#allocation19 + $0x1d8] sm:$0xff]
        %v1253 = vld [vmem:[#allocation19 + $0x1e0] sm:$0xff]
        %v1254 = vld [vmem:[#allocation19 + $0x1e8] sm:$0xff]
        %v1255 = vld [vmem:[#allocation19 + $0x1f0] sm:$0xff]
        %v1256 = vld [vmem:[#allocation19 + $0x1f8] sm:$0xff]
        %v1257 = vld [vmem:[#allocation19 + $0x200] sm:$0xff]
        %v1258 = vld [vmem:[#allocation19 + $0x208] sm:$0xff]
        %v1259 = vld [vmem:[#allocation19 + $0x210] sm:$0xff]
        %v1260 = vld [vmem:[#allocation19 + $0x218] sm:$0xff]
        %v1261 = vld [vmem:[#allocation19 + $0x220] sm:$0xff]
        %v1262 = vld [vmem:[#allocation19 + $0x228] sm:$0xff]
        %v1263 = vld [vmem:[#allocation19 + $0x230] sm:$0xff]
        %v1264 = vld [vmem:[#allocation19 + $0x238] sm:$0xff]
        %v1265 = vld [vmem:[#allocation19 + $0x240] sm:$0xff]
        %v1266 = vld [vmem:[#allocation19 + $0x248] sm:$0xff]
        %v1267 = vld [vmem:[#allocation19 + $0x250] sm:$0xff]
        %v1268 = vld [vmem:[#allocation19 + $0x258] sm:$0xff]
        %v1269 = vld [vmem:[#allocation19 + $0x260] sm:$0xff]
        %v1270 = vld [vmem:[#allocation19 + $0x268] sm:$0xff]
        %v1271 = vld [vmem:[#allocation19 + $0x270] sm:$0xff]
        %v1272 = vld [vmem:[#allocation19 + $0x278] sm:$0xff]
        %v1273 = vld [vmem:[#allocation19 + $0x280] sm:$0xff]
        %v1274 = vld [vmem:[#allocation19 + $0x288] sm:$0xff]
        %v1275 = vld [vmem:[#allocation19 + $0x290] sm:$0xff]
        %v1276 = vld [vmem:[#allocation19 + $0x298] sm:$0xff]
        %v1277 = vld [vmem:[#allocation19 + $0x2a0] sm:$0xff]
        %v1278 = vld [vmem:[#allocation19 + $0x2a8] sm:$0xff]
        %v1279 = vld [vmem:[#allocation19 + $0x2b0] sm:$0xff]
        %v1280 = vld [vmem:[#allocation19 + $0x2b8] sm:$0xff]
        %v1281 = vld [vmem:[#allocation19 + $0x2c0] sm:$0xff]
        %v1282 = vld [vmem:[#allocation19 + $0x2c8] sm:$0xff]
        %v1283 = vld [vmem:[#allocation19 + $0x2d0] sm:$0xff]
        %v1284 = vld [vmem:[#allocation19 + $0x2d8] sm:$0xff]
        %v1285 = vld [vmem:[#allocation19 + $0x2e0] sm:$0xff]
        %v1286 = vld [vmem:[#allocation19 + $0x2e8] sm:$0xff]
        %v1287 = vld [vmem:[#allocation19 + $0x2f0] sm:$0xff]
        %v1288 = vld [vmem:[#allocation19 + $0x2f8] sm:$0xff]
        %v1289 = vld [vmem:[#allocation19 + $0x300] sm:$0xff]
        %v1290 = vld [vmem:[#allocation19 + $0x308] sm:$0xff]
        %v1291 = vld [vmem:[#allocation19 + $0x310] sm:$0xff]
        %v1292 = vld [vmem:[#allocation19 + $0x318] sm:$0xff]
        %v1293 = vld [vmem:[#allocation19 + $0x320] sm:$0xff]
        %v1294 = vld [vmem:[#allocation19 + $0x328] sm:$0xff]
        %v1295 = vld [vmem:[#allocation19 + $0x330] sm:$0xff]
        %v1296 = vld [vmem:[#allocation19 + $0x338] sm:$0xff]
        %v1297 = vld [vmem:[#allocation19 + $0x340] sm:$0xff]
        %v1298 = vld [vmem:[#allocation19 + $0x348] sm:$0xff]
        %v1299 = vld [vmem:[#allocation19 + $0x350] sm:$0xff]
        %v1300 = vld [vmem:[#allocation19 + $0x358] sm:$0xff]
        %v1301 = vld [vmem:[#allocation19 + $0x360] sm:$0xff]
        %v1302 = vld [vmem:[#allocation19 + $0x368] sm:$0xff]
        %v1303 = vld [vmem:[#allocation19 + $0x370] sm:$0xff]
        %v1304 = vld [vmem:[#allocation19 + $0x378] sm:$0xff]
        %v1305 = vld [vmem:[#allocation19 + $0x380] sm:$0xff]
        %v1306 = vld [vmem:[#allocation19 + $0x388] sm:$0xff]
        %v1307 = vld [vmem:[#allocation19 + $0x390] sm:$0xff]
        %v1308 = vld [vmem:[#allocation19 + $0x398] sm:$0xff]
        %v1309 = vld [vmem:[#allocation19 + $0x3a0] sm:$0xff]
        %v1310 = vld [vmem:[#allocation19 + $0x3a8] sm:$0xff]
        %v1311 = vld [vmem:[#allocation19 + $0x3b0] sm:$0xff]
        %v1312 = vld [vmem:[#allocation19 + $0x3b8] sm:$0xff]
        %v1313 = vld [vmem:[#allocation19 + $0x3c0] sm:$0xff]
        %v1314 = vld [vmem:[#allocation19 + $0x3c8] sm:$0xff]
        %v1315 = vld [vmem:[#allocation19 + $0x3d0] sm:$0xff]
        %v1316 = vld [vmem:[#allocation19 + $0x3d8] sm:$0xff]
        %v1317 = vld [vmem:[#allocation19 + $0x3e0] sm:$0xff]
        %v1318 = vld [vmem:[#allocation19 + $0x3e8] sm:$0xff]
        %v1319 = vld [vmem:[#allocation19 + $0x3f0] sm:$0xff]
        %v1320 = vld [vmem:[#allocation19 + $0x3f8] sm:$0xff]
        %v1321 = vld [vmem:[#allocation19 + $0x400] sm:$0xff]
        %v1322 = vld [vmem:[#allocation19 + $0x408] sm:$0xff]
        %v1323 = vld [vmem:[#allocation19 + $0x410] sm:$0xff]
        %v1324 = vld [vmem:[#allocation19 + $0x418] sm:$0xff]
        %v1325 = vld [vmem:[#allocation19 + $0x420] sm:$0xff]
        %v1326 = vld [vmem:[#allocation19 + $0x428] sm:$0xff]
        %v1327 = vld [vmem:[#allocation19 + $0x430] sm:$0xff]
        %v1328 = vld [vmem:[#allocation19 + $0x438] sm:$0xff]
        %v1329 = vld [vmem:[#allocation19 + $0x440] sm:$0xff]
        %v1330 = vld [vmem:[#allocation19 + $0x448] sm:$0xff]
        %v1331 = vld [vmem:[#allocation19 + $0x450] sm:$0xff]
        %v1332 = vld [vmem:[#allocation19 + $0x458] sm:$0xff]
        %v1333 = vld [vmem:[#allocation19 + $0x460] sm:$0xff]
        %v1334 = vld [vmem:[#allocation19 + $0x468] sm:$0xff]
        %v1335 = vld [vmem:[#allocation19 + $0x470] sm:$0xff]
        %v1336 = vld [vmem:[#allocation19 + $0x478] sm:$0xff]
        %v1337 = vld [vmem:[#allocation19 + $0x480] sm:$0xff]
        %v1338 = vld [vmem:[#allocation19 + $0x488] sm:$0xff]
        %v1339 = vld [vmem:[#allocation19 + $0x490] sm:$0xff]
        %v1340 = vld [vmem:[#allocation19 + $0x498] sm:$0xff]
        %v1341 = vld [vmem:[#allocation19 + $0x4a0] sm:$0xff]
        %v1342 = vld [vmem:[#allocation19 + $0x4a8] sm:$0xff]
        %v1343 = vld [vmem:[#allocation19 + $0x4b0] sm:$0xff]
        %v1344 = vld [vmem:[#allocation19 + $0x4b8] sm:$0xff]
        %v1345 = vld [vmem:[#allocation19 + $0x4c0] sm:$0xff]
        %v1346 = vld [vmem:[#allocation19 + $0x4c8] sm:$0xff]
        %v1347 = vld [vmem:[#allocation19 + $0x4d0] sm:$0xff]
        %v1348 = vld [vmem:[#allocation19 + $0x4d8] sm:$0xff]
        %v1349 = vld [vmem:[#allocation19 + $0x4e0] sm:$0xff]
        %v1350 = vld [vmem:[#allocation19 + $0x4e8] sm:$0xff]
        %v1351 = vld [vmem:[#allocation19 + $0x4f0] sm:$0xff]
        %v1352 = vld [vmem:[#allocation19 + $0x4f8] sm:$0xff]
        %v1353 = vld [vmem:[#allocation19 + $0x500] sm:$0xff]
        %v1354 = vld [vmem:[#allocation19 + $0x508] sm:$0xff]
        %v1355 = vld [vmem:[#allocation19 + $0x510] sm:$0xff]
        %v1356 = vld [vmem:[#allocation19 + $0x518] sm:$0xff]
        %v1357 = vld [vmem:[#allocation19 + $0x520] sm:$0xff]
        %v1358 = vld [vmem:[#allocation19 + $0x528] sm:$0xff]
        %v1359 = vld [vmem:[#allocation19 + $0x530] sm:$0xff]
        %v1360 = vld [vmem:[#allocation19 + $0x538] sm:$0xff]
        %v1361 = vld [vmem:[#allocation19 + $0x540] sm:$0xff]
        %v1362 = vld [vmem:[#allocation19 + $0x548] sm:$0xff]
        %v1363 = vld [vmem:[#allocation19 + $0x550] sm:$0xff]
        %v1364 = vld [vmem:[#allocation19 + $0x558] sm:$0xff]
        %v1365 = vld [vmem:[#allocation19 + $0x560] sm:$0xff]
        %v1366 = vld [vmem:[#allocation19 + $0x568] sm:$0xff]
        %v1367 = vld [vmem:[#allocation19 + $0x570] sm:$0xff]
        %v1368 = vld [vmem:[#allocation19 + $0x578] sm:$0xff]
        %v1369 = vld [vmem:[#allocation19 + $0x580] sm:$0xff]
        %v1370 = vld [vmem:[#allocation19 + $0x588] sm:$0xff]
        %v1371 = vld [vmem:[#allocation19 + $0x590] sm:$0xff]
        %v1372 = vld [vmem:[#allocation19 + $0x598] sm:$0xff]
        %v1373 = vld [vmem:[#allocation19 + $0x5a0] sm:$0xff]
        %v1374 = vld [vmem:[#allocation19 + $0x5a8] sm:$0xff]
        %v1375 = vld [vmem:[#allocation19 + $0x5b0] sm:$0xff]
        %v1376 = vld [vmem:[#allocation19 + $0x5b8] sm:$0xff]
        %v1377 = vld [vmem:[#allocation19 + $0x5c0] sm:$0xff]
        %v1378 = vld [vmem:[#allocation19 + $0x5c8] sm:$0xff]
        %v1379 = vld [vmem:[#allocation19 + $0x5d0] sm:$0xff]
        %v1380 = vld [vmem:[#allocation19 + $0x5d8] sm:$0xff]
        %v1381 = vld [vmem:[#allocation19 + $0x5e0] sm:$0xff]
        %v1382 = vld [vmem:[#allocation19 + $0x5e8] sm:$0xff]
        %v1383 = vld [vmem:[#allocation19 + $0x5f0] sm:$0xff]
        %v1384 = vld [vmem:[#allocation19 + $0x5f8] sm:$0xff]
        %v1385 = vld [vmem:[%s11] sm:$0x3f]
        %v1387 = vperm.slane %v1385, 0
        %v1388 = vperm.slane %v1385, 1
        %v1389 = vperm.slane %v1385, 2
        %v1390 = vperm.slane %v1385, 3
        %v1391 = vperm.slane %v1385, 4
        %v1392 = vperm.slane %v1385, 5
        %1399 = vmatpush.msra.mxu0 %v1283
        %1400 = vmatpush.msra.mxu0 %v1277
        %1401 = vmatpush.msra.mxu0 %v1271
        %1402 = vmatpush.msra.mxu0 %v1265
        %1403 = vmatpush.msra.mxu0 %v1259
        %1404 = vmatpush.msra.mxu0 %v1253
        %1405 = vmatpush.msra.mxu0 %v1247
        %1406 = vmatpush.msra.mxu0 %v1241
        %1407 = vmatpush.msra.mxu0 %v1235
        %1408 = vmatpush.msra.mxu0 %v1229
        %1409 = vmatpush.msra.mxu0 %v1223
        %1410 = vmatpush.msra.mxu0 %v1217
        %1411 = vmatpush.msra.mxu0 %v1211
        %1412 = vmatpush.msra.mxu0 %v1205
        %1413 = vmatpush.msra.mxu0 %v1199
        %1414 = vmatpush.msra.mxu0 %v1193
        %1415 = vmatmul.f32.gmra.mxu0 %v1189
        %v1416 = vpop.f32.mrf.mxu0
        %v1417 = vadd.f32 %v1387, %v1416
        %1418 = vmatmul.f32.gmra.mxu0 %v1191
        %v1419 = vpop.f32.mrf.mxu0
        %v1420 = vadd.f32 %v1387, %v1419
        %1421 = vdwg.mxu0
        %1422 = vmatpush.msra.mxu0 %v1379
        %1423 = vmatpush.msra.mxu0 %v1373
        %1424 = vmatpush.msra.mxu0 %v1367
        %1425 = vmatpush.msra.mxu0 %v1361
        %1426 = vmatpush.msra.mxu0 %v1355
        %1427 = vmatpush.msra.mxu0 %v1349
        %1428 = vmatpush.msra.mxu0 %v1343
        %1429 = vmatpush.msra.mxu0 %v1337
        %1430 = vmatpush.msra.mxu0 %v1331
        %1431 = vmatpush.msra.mxu0 %v1325
        %1432 = vmatpush.msra.mxu0 %v1319
        %1433 = vmatpush.msra.mxu0 %v1313
        %1434 = vmatpush.msra.mxu0 %v1307
        %1435 = vmatpush.msra.mxu0 %v1301
        %1436 = vmatpush.msra.mxu0 %v1295
        %1437 = vmatpush.msra.mxu0 %v1289
        %1438 = vmatmul.f32.gmra.mxu0 %v1190
        %v1439 = vpop.f32.mrf.mxu0
        %v1440 = vadd.f32 %v1417, %v1439
        %1441 = vmatmul.f32.gmra.mxu0 %v1192
        %v1442 = vpop.f32.mrf.mxu0
        %v1443 = vadd.f32 %v1420, %v1442
        %1444 = vdwg.mxu0
        %1445 = vmatpush.msra.mxu0 %v1284
        %1446 = vmatpush.msra.mxu0 %v1278
        %1447 = vmatpush.msra.mxu0 %v1272
        %1448 = vmatpush.msra.mxu0 %v1266
        %1449 = vmatpush.msra.mxu0 %v1260
        %1450 = vmatpush.msra.mxu0 %v1254
        %1451 = vmatpush.msra.mxu0 %v1248
        %1452 = vmatpush.msra.mxu0 %v1242
        %1453 = vmatpush.msra.mxu0 %v1236
        %1454 = vmatpush.msra.mxu0 %v1230
        %1455 = vmatpush.msra.mxu0 %v1224
        %1456 = vmatpush.msra.mxu0 %v1218
        %1457 = vmatpush.msra.mxu0 %v1212
        %1458 = vmatpush.msra.mxu0 %v1206
        %1459 = vmatpush.msra.mxu0 %v1200
        %1460 = vmatpush.msra.mxu0 %v1194
        %1461 = vmatmul.f32.gmra.mxu0 %v1189
        %v1462 = vpop.f32.mrf.mxu0
        %v1463 = vadd.f32 %v1388, %v1462
        %1464 = vmatmul.f32.gmra.mxu0 %v1191
        %v1465 = vpop.f32.mrf.mxu0
        %v1466 = vadd.f32 %v1388, %v1465
        %1467 = vdwg.mxu0
        %1468 = vmatpush.msra.mxu0 %v1380
        %1469 = vmatpush.msra.mxu0 %v1374
        %1470 = vmatpush.msra.mxu0 %v1368
        %1471 = vmatpush.msra.mxu0 %v1362
        %1472 = vmatpush.msra.mxu0 %v1356
        %1473 = vmatpush.msra.mxu0 %v1350
        %1474 = vmatpush.msra.mxu0 %v1344
        %1475 = vmatpush.msra.mxu0 %v1338
        %1476 = vmatpush.msra.mxu0 %v1332
        %1477 = vmatpush.msra.mxu0 %v1326
        %1478 = vmatpush.msra.mxu0 %v1320
        %1479 = vmatpush.msra.mxu0 %v1314
        %1480 = vmatpush.msra.mxu0 %v1308
        %1481 = vmatpush.msra.mxu0 %v1302
        %1482 = vmatpush.msra.mxu0 %v1296
        %1483 = vmatpush.msra.mxu0 %v1290
        %1484 = vmatmul.f32.gmra.mxu0 %v1190
        %v1485 = vpop.f32.mrf.mxu0
        %v1486 = vadd.f32 %v1463, %v1485
        %1487 = vmatmul.f32.gmra.mxu0 %v1192
        %v1488 = vpop.f32.mrf.mxu0
        %v1489 = vadd.f32 %v1466, %v1488
        %1490 = vdwg.mxu0
        %1491 = vmatpush.msra.mxu0 %v1285
        %1492 = vmatpush.msra.mxu0 %v1279
        %1493 = vmatpush.msra.mxu0 %v1273
        %1494 = vmatpush.msra.mxu0 %v1267
        %1495 = vmatpush.msra.mxu0 %v1261
        %1496 = vmatpush.msra.mxu0 %v1255
        %1497 = vmatpush.msra.mxu0 %v1249
        %1498 = vmatpush.msra.mxu0 %v1243
        %1499 = vmatpush.msra.mxu0 %v1237
        %1500 = vmatpush.msra.mxu0 %v1231
        %1501 = vmatpush.msra.mxu0 %v1225
        %1502 = vmatpush.msra.mxu0 %v1219
        %1503 = vmatpush.msra.mxu0 %v1213
        %1504 = vmatpush.msra.mxu0 %v1207
        %1505 = vmatpush.msra.mxu0 %v1201
        %1506 = vmatpush.msra.mxu0 %v1195
        %1507 = vmatmul.f32.gmra.mxu0 %v1189
        %v1508 = vpop.f32.mrf.mxu0
        %v1509 = vadd.f32 %v1389, %v1508
        %1510 = vmatmul.f32.gmra.mxu0 %v1191
        %v1511 = vpop.f32.mrf.mxu0
        %v1512 = vadd.f32 %v1389, %v1511
        %1513 = vdwg.mxu0
        %1514 = vmatpush.msra.mxu0 %v1381
        %1515 = vmatpush.msra.mxu0 %v1375
        %1516 = vmatpush.msra.mxu0 %v1369
        %1517 = vmatpush.msra.mxu0 %v1363
        %1518 = vmatpush.msra.mxu0 %v1357
        %1519 = vmatpush.msra.mxu0 %v1351
        %1520 = vmatpush.msra.mxu0 %v1345
        %1521 = vmatpush.msra.mxu0 %v1339
        %1522 = vmatpush.msra.mxu0 %v1333
        %1523 = vmatpush.msra.mxu0 %v1327
        %1524 = vmatpush.msra.mxu0 %v1321
        %1525 = vmatpush.msra.mxu0 %v1315
        %1526 = vmatpush.msra.mxu0 %v1309
        %1527 = vmatpush.msra.mxu0 %v1303
        %1528 = vmatpush.msra.mxu0 %v1297
        %1529 = vmatpush.msra.mxu0 %v1291
        %1530 = vmatmul.f32.gmra.mxu0 %v1190
        %v1531 = vpop.f32.mrf.mxu0
        %v1532 = vadd.f32 %v1509, %v1531
        %1533 = vmatmul.f32.gmra.mxu0 %v1192
        %v1534 = vpop.f32.mrf.mxu0
        %v1535 = vadd.f32 %v1512, %v1534
        %1536 = vdwg.mxu0
        %1537 = vmatpush.msra.mxu0 %v1286
        %1538 = vmatpush.msra.mxu0 %v1280
        %1539 = vmatpush.msra.mxu0 %v1274
        %1540 = vmatpush.msra.mxu0 %v1268
        %1541 = vmatpush.msra.mxu0 %v1262
        %1542 = vmatpush.msra.mxu0 %v1256
        %1543 = vmatpush.msra.mxu0 %v1250
        %1544 = vmatpush.msra.mxu0 %v1244
        %1545 = vmatpush.msra.mxu0 %v1238
        %1546 = vmatpush.msra.mxu0 %v1232
        %1547 = vmatpush.msra.mxu0 %v1226
        %1548 = vmatpush.msra.mxu0 %v1220
        %1549 = vmatpush.msra.mxu0 %v1214
        %1550 = vmatpush.msra.mxu0 %v1208
        %1551 = vmatpush.msra.mxu0 %v1202
        %1552 = vmatpush.msra.mxu0 %v1196
        %1553 = vmatmul.f32.gmra.mxu0 %v1189
        %v1554 = vpop.f32.mrf.mxu0
        %v1555 = vadd.f32 %v1390, %v1554
        %1556 = vmatmul.f32.gmra.mxu0 %v1191
        %v1557 = vpop.f32.mrf.mxu0
        %v1558 = vadd.f32 %v1390, %v1557
        %1559 = vdwg.mxu0
        %1560 = vmatpush.msra.mxu0 %v1382
        %1561 = vmatpush.msra.mxu0 %v1376
        %1562 = vmatpush.msra.mxu0 %v1370
        %1563 = vmatpush.msra.mxu0 %v1364
        %1564 = vmatpush.msra.mxu0 %v1358
        %1565 = vmatpush.msra.mxu0 %v1352
        %1566 = vmatpush.msra.mxu0 %v1346
        %1567 = vmatpush.msra.mxu0 %v1340
        %1568 = vmatpush.msra.mxu0 %v1334
        %1569 = vmatpush.msra.mxu0 %v1328
        %1570 = vmatpush.msra.mxu0 %v1322
        %1571 = vmatpush.msra.mxu0 %v1316
        %1572 = vmatpush.msra.mxu0 %v1310
        %1573 = vmatpush.msra.mxu0 %v1304
        %1574 = vmatpush.msra.mxu0 %v1298
        %1575 = vmatpush.msra.mxu0 %v1292
        %1576 = vmatmul.f32.gmra.mxu0 %v1190
        %v1577 = vpop.f32.mrf.mxu0
        %v1578 = vadd.f32 %v1555, %v1577
        %1579 = vmatmul.f32.gmra.mxu0 %v1192
        %v1580 = vpop.f32.mrf.mxu0
        %v1581 = vadd.f32 %v1558, %v1580
        %1582 = vdwg.mxu0
        %1583 = vmatpush.msra.mxu0 %v1287
        %1584 = vmatpush.msra.mxu0 %v1281
        %1585 = vmatpush.msra.mxu0 %v1275
        %1586 = vmatpush.msra.mxu0 %v1269
        %1587 = vmatpush.msra.mxu0 %v1263
        %1588 = vmatpush.msra.mxu0 %v1257
        %1589 = vmatpush.msra.mxu0 %v1251
        %1590 = vmatpush.msra.mxu0 %v1245
        %1591 = vmatpush.msra.mxu0 %v1239
        %1592 = vmatpush.msra.mxu0 %v1233
        %1593 = vmatpush.msra.mxu0 %v1227
        %1594 = vmatpush.msra.mxu0 %v1221
        %1595 = vmatpush.msra.mxu0 %v1215
        %1596 = vmatpush.msra.mxu0 %v1209
        %1597 = vmatpush.msra.mxu0 %v1203
        %1598 = vmatpush.msra.mxu0 %v1197
        %1599 = vmatmul.f32.gmra.mxu0 %v1189
        %v1600 = vpop.f32.mrf.mxu0
        %v1601 = vadd.f32 %v1391, %v1600
        %1602 = vmatmul.f32.gmra.mxu0 %v1191
        %v1603 = vpop.f32.mrf.mxu0
        %v1604 = vadd.f32 %v1391, %v1603
        %1605 = vdwg.mxu0
        %1606 = vmatpush.msra.mxu0 %v1383
        %1607 = vmatpush.msra.mxu0 %v1377
        %1608 = vmatpush.msra.mxu0 %v1371
        %1609 = vmatpush.msra.mxu0 %v1365
        %1610 = vmatpush.msra.mxu0 %v1359
        %1611 = vmatpush.msra.mxu0 %v1353
        %1612 = vmatpush.msra.mxu0 %v1347
        %1613 = vmatpush.msra.mxu0 %v1341
        %1614 = vmatpush.msra.mxu0 %v1335
        %1615 = vmatpush.msra.mxu0 %v1329
        %1616 = vmatpush.msra.mxu0 %v1323
        %1617 = vmatpush.msra.mxu0 %v1317
        %1618 = vmatpush.msra.mxu0 %v1311
        %1619 = vmatpush.msra.mxu0 %v1305
        %1620 = vmatpush.msra.mxu0 %v1299
        %1621 = vmatpush.msra.mxu0 %v1293
        %1622 = vmatmul.f32.gmra.mxu0 %v1190
        %v1623 = vpop.f32.mrf.mxu0
        %v1624 = vadd.f32 %v1601, %v1623
        %1625 = vmatmul.f32.gmra.mxu0 %v1192
        %v1626 = vpop.f32.mrf.mxu0
        %v1627 = vadd.f32 %v1604, %v1626
        %1628 = vdwg.mxu0
        %1629 = vmatpush.msra.mxu0 %v1288
        %1630 = vmatpush.msra.mxu0 %v1282
        %1631 = vmatpush.msra.mxu0 %v1276
        %1632 = vmatpush.msra.mxu0 %v1270
        %1633 = vmatpush.msra.mxu0 %v1264
        %1634 = vmatpush.msra.mxu0 %v1258
        %1635 = vmatpush.msra.mxu0 %v1252
        %1636 = vmatpush.msra.mxu0 %v1246
        %1637 = vmatpush.msra.mxu0 %v1240
        %1638 = vmatpush.msra.mxu0 %v1234
        %1639 = vmatpush.msra.mxu0 %v1228
        %1640 = vmatpush.msra.mxu0 %v1222
        %1641 = vmatpush.msra.mxu0 %v1216
        %1642 = vmatpush.msra.mxu0 %v1210
        %1643 = vmatpush.msra.mxu0 %v1204
        %1644 = vmatpush.msra.mxu0 %v1198
        %1645 = vmatmul.f32.gmra.mxu0 %v1189
        %v1646 = vpop.f32.mrf.mxu0
        %v1647 = vadd.f32 %v1392, %v1646
        %1648 = vmatmul.f32.gmra.mxu0 %v1191
        %v1649 = vpop.f32.mrf.mxu0
        %v1650 = vadd.f32 %v1392, %v1649
        %1651 = vdwg.mxu0
        %1652 = vmatpush.msra.mxu0 %v1384
        %1653 = vmatpush.msra.mxu0 %v1378
        %1654 = vmatpush.msra.mxu0 %v1372
        %1655 = vmatpush.msra.mxu0 %v1366
        %1656 = vmatpush.msra.mxu0 %v1360
        %1657 = vmatpush.msra.mxu0 %v1354
        %1658 = vmatpush.msra.mxu0 %v1348
        %1659 = vmatpush.msra.mxu0 %v1342
        %1660 = vmatpush.msra.mxu0 %v1336
        %1661 = vmatpush.msra.mxu0 %v1330
        %1662 = vmatpush.msra.mxu0 %v1324
        %1663 = vmatpush.msra.mxu0 %v1318
        %1664 = vmatpush.msra.mxu0 %v1312
        %1665 = vmatpush.msra.mxu0 %v1306
        %1666 = vmatpush.msra.mxu0 %v1300
        %1667 = vmatpush.msra.mxu0 %v1294
        %1668 = vmatmul.f32.gmra.mxu0 %v1190
        %v1669 = vpop.f32.mrf.mxu0
        %v1670 = vadd.f32 %v1647, %v1669
        %1671 = vmatmul.f32.gmra.mxu0 %v1192
        %v1672 = vpop.f32.mrf.mxu0
        %v1673 = vadd.f32 %v1650, %v1672
        %1674 = vdwg.mxu0
        %1675 = vmatpush.xpose.msra.mxu0 0.0
        %1676 = vmatpush.xpose.msra.mxu0 0.0
        %1677 = vmatpush.xpose.msra.mxu0 0.0
        %1678 = vmatpush.xpose.msra.mxu0 0.0
        %1679 = vmatpush.xpose.msra.mxu0 0.0
        %1680 = vmatpush.xpose.msra.mxu0 0.0
        %1681 = vmatpush.xpose.msra.mxu0 0.0
        %1682 = vmatpush.xpose.msra.mxu0 0.0
        %1683 = vmatpush.xpose.msra.mxu0 0.0
        %1684 = vmatpush.xpose.msra.mxu0 0.0
        %1685 = vmatpush.xpose.msra.mxu0 0.0
        %1686 = vmatpush.xpose.msra.mxu0 0.0
        %1687 = vmatpush.xpose.msra.mxu0 0.0
        %1688 = vmatpush.xpose.msra.mxu0 0.0
        %1689 = vmatpush.xpose.msra.mxu0 %v1535
        %1690 = vmatpush.xpose.msra.mxu0 %v1532
        %1691 = vmatmul.f32.gmra.mxu0 %v1440
        %v1692 = vpop.f32.mrf.mxu0
        %v1693 = vadd.f32 0.0, %v1692
        %1694 = vmatmul.f32.gmra.mxu0 %v1443
        %v1695 = vpop.f32.mrf.mxu0
        %v1696 = vadd.f32 0.0, %v1695
        %1697 = vdwg.mxu0
        %1698 = vmatpush.xpose.msra.mxu0 0.0
        %1699 = vmatpush.xpose.msra.mxu0 0.0
        %1700 = vmatpush.xpose.msra.mxu0 0.0
        %1701 = vmatpush.xpose.msra.mxu0 0.0
        %1702 = vmatpush.xpose.msra.mxu0 0.0
        %1703 = vmatpush.xpose.msra.mxu0 0.0
        %1704 = vmatpush.xpose.msra.mxu0 0.0
        %1705 = vmatpush.xpose.msra.mxu0 0.0
        %1706 = vmatpush.xpose.msra.mxu0 0.0
        %1707 = vmatpush.xpose.msra.mxu0 0.0
        %1708 = vmatpush.xpose.msra.mxu0 0.0
        %1709 = vmatpush.xpose.msra.mxu0 0.0
        %1710 = vmatpush.xpose.msra.mxu0 0.0
        %1711 = vmatpush.xpose.msra.mxu0 0.0
        %1712 = vmatpush.xpose.msra.mxu0 %v1581
        %1713 = vmatpush.xpose.msra.mxu0 %v1578
        %1714 = vmatmul.f32.gmra.mxu0 %v1486
        %v1715 = vpop.f32.mrf.mxu0
        %v1716 = vadd.f32 0.0, %v1715
        %1717 = vmatmul.f32.gmra.mxu0 %v1489
        %v1718 = vpop.f32.mrf.mxu0
        %v1719 = vadd.f32 0.0, %v1718
        %1720 = vdwg.mxu0
        %v1721 = vmul.f32 %v1693, 0.088388346
        %v1722 = vmul.f32 %v1696, 0.088388346
        %v1723 = vmul.f32 %v1716, 0.088388346
        %v1724 = vmul.f32 %v1719, 0.088388346
        %v1725 = vadd.f32 %v1721, %v1108
        %v1726 = vadd.f32 %v1722, %v1109
        %v1727 = vadd.f32 %v1723, %v1108
        %v1728 = vadd.f32 %v1724, %v1109
        %vm1729 = vcmask 130048
        %v1730 = vsel %vm1729, %v1725, -inf
        %1731 = vmax.xlane.f32.xlu0 %v1730
        %v1732 = vpop.xlane.xlu0 %1731
        %v1733 = vsel %vm1729, %v1726, -inf
        %1734 = vmax.xlane.f32.xlu0 %v1733
        %v1735 = vpop.xlane.xlu0 %1734
        %v1736 = vsel %vm1729, %v1727, -inf
        %1737 = vmax.xlane.f32.xlu0 %v1736
        %v1738 = vpop.xlane.xlu0 %1737
        %v1739 = vsel %vm1729, %v1728, -inf
        %1740 = vmax.xlane.f32.xlu0 %v1739
        %v1741 = vpop.xlane.xlu0 %1740
        %v1742 = vsub.f32 %v1725, %v1732
        %v1743 = vsub.f32 %v1726, %v1735
        %v1744 = vsub.f32 %v1727, %v1738
        %v1745 = vsub.f32 %v1728, %v1741
        %v1746 = vmul.f32 %v1742, 1.442695
        %v1747 = vpow.pop %v1746
        %v1748 = vmul.f32 %v1743, 1.442695
        %v1749 = vpow.pop %v1748
        %v1750 = vmul.f32 %v1744, 1.442695
        %v1751 = vpow.pop %v1750
        %v1752 = vmul.f32 %v1745, 1.442695
        %v1753 = vpow.pop %v1752
        %v1754 = vsel %vm1729, %v1747, 0.0
        %1755 = vadd.xlane.f32.xlu0 %v1754
        %v1756 = vpop.xlane.xlu0 %1755
        %v1757 = vsel %vm1729, %v1749, 0.0
        %1758 = vadd.xlane.f32.xlu0 %v1757
        %v1759 = vpop.xlane.xlu0 %1758
        %v1760 = vsel %vm1729, %v1751, 0.0
        %1761 = vadd.xlane.f32.xlu0 %v1760
        %v1762 = vpop.xlane.xlu0 %1761
        %v1763 = vsel %vm1729, %v1753, 0.0
        %1764 = vadd.xlane.f32.xlu0 %v1763
        %v1765 = vpop.xlane.xlu0 %1764
        %v1766 = vrcp.pop %v1756
        %v1767 = vrcp.pop %v1759
        %v1768 = vrcp.pop %v1762
        %v1769 = vrcp.pop %v1765
        %v1770 = vmul.f32 %v1747, %v1766
        %v1771 = vmul.f32 %v1749, %v1767
        %v1772 = vmul.f32 %v1751, %v1768
        %v1773 = vmul.f32 %v1753, %v1769
        %v1775 = vsel %vm1729, %v1770, 0
        %v1778 = vsel %vm1729, %v1771, 0
        %1780 = vmatpush.msra.mxu0 0.0
        %1781 = vmatpush.msra.mxu0 0.0
        %1782 = vmatpush.msra.mxu0 0.0
        %1783 = vmatpush.msra.mxu0 0.0
        %1784 = vmatpush.msra.mxu0 0.0
        %1785 = vmatpush.msra.mxu0 0.0
        %1786 = vmatpush.msra.mxu0 0.0
        %1787 = vmatpush.msra.mxu0 0.0
        %1788 = vmatpush.msra.mxu0 0.0
        %1789 = vmatpush.msra.mxu0 0.0
        %1790 = vmatpush.msra.mxu0 0.0
        %1791 = vmatpush.msra.mxu0 0.0
        %1792 = vmatpush.msra.mxu0 0.0
        %1793 = vmatpush.msra.mxu0 0.0
        %1794 = vmatpush.msra.mxu0 %v1627
        %1795 = vmatpush.msra.mxu0 %v1624
        %1796 = vmatmul.f32.gmra.mxu0 %v1775
        %v1797 = vpop.f32.mrf.mxu0
        %v1798 = vadd.f32 0.0, %v1797
        %1799 = vmatmul.f32.gmra.mxu0 %v1778
        %v1800 = vpop.f32.mrf.mxu0
        %v1801 = vadd.f32 0.0, %v1800
        %1802 = vdwg.mxu0
        %v1804 = vsel %vm1729, %v1772, 0
        %v1807 = vsel %vm1729, %v1773, 0
        %1809 = vmatpush.msra.mxu0 0.0
        %1810 = vmatpush.msra.mxu0 0.0
        %1811 = vmatpush.msra.mxu0 0.0
        %1812 = vmatpush.msra.mxu0 0.0
        %1813 = vmatpush.msra.mxu0 0.0
        %1814 = vmatpush.msra.mxu0 0.0
        %1815 = vmatpush.msra.mxu0 0.0
        %1816 = vmatpush.msra.mxu0 0.0
        %1817 = vmatpush.msra.mxu0 0.0
        %1818 = vmatpush.msra.mxu0 0.0
        %1819 = vmatpush.msra.mxu0 0.0
        %1820 = vmatpush.msra.mxu0 0.0
        %1821 = vmatpush.msra.mxu0 0.0
        %1822 = vmatpush.msra.mxu0 0.0
        %1823 = vmatpush.msra.mxu0 %v1673
        %1824 = vmatpush.msra.mxu0 %v1670
        %1825 = vmatmul.f32.gmra.mxu0 %v1804
        %v1826 = vpop.f32.mrf.mxu0
        %v1827 = vadd.f32 0.0, %v1826
        %1828 = vmatmul.f32.gmra.mxu0 %v1807
        %v1829 = vpop.f32.mrf.mxu0
        %v1830 = vadd.f32 0.0, %v1829
        %1831 = vdwg.mxu0
        %v1832 = vld [vmem:[#allocation20] sm:$0xff]
        %v1833 = vld [vmem:[#allocation20 + $0x8] sm:$0xff]
        %v1834 = vld [vmem:[#allocation20 + $0x10] sm:$0xff]
        %v1835 = vld [vmem:[#allocation20 + $0x18] sm:$0xff]
        %v1836 = vld [vmem:[#allocation20 + $0x20] sm:$0xff]
        %v1837 = vld [vmem:[#allocation20 + $0x28] sm:$0xff]
        %v1838 = vld [vmem:[#allocation20 + $0x30] sm:$0xff]
        %v1839 = vld [vmem:[#allocation20 + $0x38] sm:$0xff]
        %v1840 = vld [vmem:[#allocation20 + $0x40] sm:$0xff]
        %v1841 = vld [vmem:[#allocation20 + $0x48] sm:$0xff]
        %v1842 = vld [vmem:[#allocation20 + $0x50] sm:$0xff]
        %v1843 = vld [vmem:[#allocation20 + $0x58] sm:$0xff]
        %v1844 = vld [vmem:[#allocation20 + $0x60] sm:$0xff]
        %v1845 = vld [vmem:[#allocation20 + $0x68] sm:$0xff]
        %v1846 = vld [vmem:[#allocation20 + $0x70] sm:$0xff]
        %v1847 = vld [vmem:[#allocation20 + $0x78] sm:$0xff]
        %v1848 = vld [vmem:[#allocation20 + $0x80] sm:$0xff]
        %v1849 = vld [vmem:[#allocation20 + $0x88] sm:$0xff]
        %v1850 = vld [vmem:[#allocation20 + $0x90] sm:$0xff]
        %v1851 = vld [vmem:[#allocation20 + $0x98] sm:$0xff]
        %v1852 = vld [vmem:[#allocation20 + $0xa0] sm:$0xff]
        %v1853 = vld [vmem:[#allocation20 + $0xa8] sm:$0xff]
        %v1854 = vld [vmem:[#allocation20 + $0xb0] sm:$0xff]
        %v1855 = vld [vmem:[#allocation20 + $0xb8] sm:$0xff]
        %v1856 = vld [vmem:[#allocation20 + $0xc0] sm:$0xff]
        %v1857 = vld [vmem:[#allocation20 + $0xc8] sm:$0xff]
        %v1858 = vld [vmem:[#allocation20 + $0xd0] sm:$0xff]
        %v1859 = vld [vmem:[#allocation20 + $0xd8] sm:$0xff]
        %v1860 = vld [vmem:[#allocation20 + $0xe0] sm:$0xff]
        %v1861 = vld [vmem:[#allocation20 + $0xe8] sm:$0xff]
        %v1862 = vld [vmem:[#allocation20 + $0xf0] sm:$0xff]
        %v1863 = vld [vmem:[#allocation20 + $0xf8] sm:$0xff]
        %v1864 = vld [vmem:[#allocation20 + $0x100] sm:$0xff]
        %v1865 = vld [vmem:[#allocation20 + $0x108] sm:$0xff]
        %v1866 = vld [vmem:[#allocation20 + $0x110] sm:$0xff]
        %v1867 = vld [vmem:[#allocation20 + $0x118] sm:$0xff]
        %v1868 = vld [vmem:[#allocation20 + $0x120] sm:$0xff]
        %v1869 = vld [vmem:[#allocation20 + $0x128] sm:$0xff]
        %v1870 = vld [vmem:[#allocation20 + $0x130] sm:$0xff]
        %v1871 = vld [vmem:[#allocation20 + $0x138] sm:$0xff]
        %v1872 = vld [vmem:[#allocation20 + $0x140] sm:$0xff]
        %v1873 = vld [vmem:[#allocation20 + $0x148] sm:$0xff]
        %v1874 = vld [vmem:[#allocation20 + $0x150] sm:$0xff]
        %v1875 = vld [vmem:[#allocation20 + $0x158] sm:$0xff]
        %v1876 = vld [vmem:[#allocation20 + $0x160] sm:$0xff]
        %v1877 = vld [vmem:[#allocation20 + $0x168] sm:$0xff]
        %v1878 = vld [vmem:[#allocation20 + $0x170] sm:$0xff]
        %v1879 = vld [vmem:[#allocation20 + $0x178] sm:$0xff]
        %v1880 = vld [vmem:[#allocation20 + $0x180] sm:$0xff]
        %v1881 = vld [vmem:[#allocation20 + $0x188] sm:$0xff]
        %v1882 = vld [vmem:[#allocation20 + $0x190] sm:$0xff]
        %v1883 = vld [vmem:[#allocation20 + $0x198] sm:$0xff]
        %v1884 = vld [vmem:[#allocation20 + $0x1a0] sm:$0xff]
        %v1885 = vld [vmem:[#allocation20 + $0x1a8] sm:$0xff]
        %v1886 = vld [vmem:[#allocation20 + $0x1b0] sm:$0xff]
        %v1887 = vld [vmem:[#allocation20 + $0x1b8] sm:$0xff]
        %v1888 = vld [vmem:[#allocation20 + $0x1c0] sm:$0xff]
        %v1889 = vld [vmem:[#allocation20 + $0x1c8] sm:$0xff]
        %v1890 = vld [vmem:[#allocation20 + $0x1d0] sm:$0xff]
        %v1891 = vld [vmem:[#allocation20 + $0x1d8] sm:$0xff]
        %v1892 = vld [vmem:[#allocation20 + $0x1e0] sm:$0xff]
        %v1893 = vld [vmem:[#allocation20 + $0x1e8] sm:$0xff]
        %v1894 = vld [vmem:[#allocation20 + $0x1f0] sm:$0xff]
        %v1895 = vld [vmem:[#allocation20 + $0x1f8] sm:$0xff]
        %v1896 = vld [vmem:[#allocation22] sm:$0x3]
        %v1898 = vperm.slane %v1896, 0
        %v1899 = vperm.slane %v1896, 1
        %1902 = vmatpush.msra.mxu0 %v1862
        %1903 = vmatpush.msra.mxu0 %v1860
        %1904 = vmatpush.msra.mxu0 %v1858
        %1905 = vmatpush.msra.mxu0 %v1856
        %1906 = vmatpush.msra.mxu0 %v1854
        %1907 = vmatpush.msra.mxu0 %v1852
        %1908 = vmatpush.msra.mxu0 %v1850
        %1909 = vmatpush.msra.mxu0 %v1848
        %1910 = vmatpush.msra.mxu0 %v1846
        %1911 = vmatpush.msra.mxu0 %v1844
        %1912 = vmatpush.msra.mxu0 %v1842
        %1913 = vmatpush.msra.mxu0 %v1840
        %1914 = vmatpush.msra.mxu0 %v1838
        %1915 = vmatpush.msra.mxu0 %v1836
        %1916 = vmatpush.msra.mxu0 %v1834
        %1917 = vmatpush.msra.mxu0 %v1832
        %1918 = vmatmul.f32.gmra.mxu0 %v1798
        %v1919 = vpop.f32.mrf.mxu0
        %v1920 = vadd.f32 %v1898, %v1919
        %1921 = vmatmul.f32.gmra.mxu0 %v1801
        %v1922 = vpop.f32.mrf.mxu0
        %v1923 = vadd.f32 %v1898, %v1922
        %1924 = vdwg.mxu0
        %1925 = vmatpush.msra.mxu0 %v1894
        %1926 = vmatpush.msra.mxu0 %v1892
        %1927 = vmatpush.msra.mxu0 %v1890
        %1928 = vmatpush.msra.mxu0 %v1888
        %1929 = vmatpush.msra.mxu0 %v1886
        %1930 = vmatpush.msra.mxu0 %v1884
        %1931 = vmatpush.msra.mxu0 %v1882
        %1932 = vmatpush.msra.mxu0 %v1880
        %1933 = vmatpush.msra.mxu0 %v1878
        %1934 = vmatpush.msra.mxu0 %v1876
        %1935 = vmatpush.msra.mxu0 %v1874
        %1936 = vmatpush.msra.mxu0 %v1872
        %1937 = vmatpush.msra.mxu0 %v1870
        %1938 = vmatpush.msra.mxu0 %v1868
        %1939 = vmatpush.msra.mxu0 %v1866
        %1940 = vmatpush.msra.mxu0 %v1864
        %1941 = vmatmul.f32.gmra.mxu0 %v1827
        %v1942 = vpop.f32.mrf.mxu0
        %v1943 = vadd.f32 %v1920, %v1942
        %1944 = vmatmul.f32.gmra.mxu0 %v1830
        %v1945 = vpop.f32.mrf.mxu0
        %v1946 = vadd.f32 %v1923, %v1945
        %1947 = vdwg.mxu0
        %1948 = vmatpush.msra.mxu0 %v1863
        %1949 = vmatpush.msra.mxu0 %v1861
        %1950 = vmatpush.msra.mxu0 %v1859
        %1951 = vmatpush.msra.mxu0 %v1857
        %1952 = vmatpush.msra.mxu0 %v1855
        %1953 = vmatpush.msra.mxu0 %v1853
        %1954 = vmatpush.msra.mxu0 %v1851
        %1955 = vmatpush.msra.mxu0 %v1849
        %1956 = vmatpush.msra.mxu0 %v1847
        %1957 = vmatpush.msra.mxu0 %v1845
        %1958 = vmatpush.msra.mxu0 %v1843
        %1959 = vmatpush.msra.mxu0 %v1841
        %1960 = vmatpush.msra.mxu0 %v1839
        %1961 = vmatpush.msra.mxu0 %v1837
        %1962 = vmatpush.msra.mxu0 %v1835
        %1963 = vmatpush.msra.mxu0 %v1833
        %1964 = vmatmul.f32.gmra.mxu0 %v1798
        %v1965 = vpop.f32.mrf.mxu0
        %v1966 = vadd.f32 %v1899, %v1965
        %1967 = vmatmul.f32.gmra.mxu0 %v1801
        %v1968 = vpop.f32.mrf.mxu0
        %v1969 = vadd.f32 %v1899, %v1968
        %1970 = vdwg.mxu0
        %1971 = vmatpush.msra.mxu0 %v1895
        %1972 = vmatpush.msra.mxu0 %v1893
        %1973 = vmatpush.msra.mxu0 %v1891
        %1974 = vmatpush.msra.mxu0 %v1889
        %1975 = vmatpush.msra.mxu0 %v1887
        %1976 = vmatpush.msra.mxu0 %v1885
        %1977 = vmatpush.msra.mxu0 %v1883
        %1978 = vmatpush.msra.mxu0 %v1881
        %1979 = vmatpush.msra.mxu0 %v1879
        %1980 = vmatpush.msra.mxu0 %v1877
        %1981 = vmatpush.msra.mxu0 %v1875
        %1982 = vmatpush.msra.mxu0 %v1873
        %1983 = vmatpush.msra.mxu0 %v1871
        %1984 = vmatpush.msra.mxu0 %v1869
        %1985 = vmatpush.msra.mxu0 %v1867
        %1986 = vmatpush.msra.mxu0 %v1865
        %1987 = vmatmul.f32.gmra.mxu0 %v1827
        %v1988 = vpop.f32.mrf.mxu0
        %v1989 = vadd.f32 %v1966, %v1988
        %1990 = vmatmul.f32.gmra.mxu0 %v1830
        %v1991 = vpop.f32.mrf.mxu0
        %v1992 = vadd.f32 %v1969, %v1991
        %1993 = vdwg.mxu0
        %v1994 = vadd.f32 %v1096, %v1943
        %v1995 = vadd.f32 %v1097, %v1989
        %v1996 = vadd.f32 %v1098, %v1946
        %v1997 = vadd.f32 %v1099, %v1992
        %v1998 = vld [vmem:[%s935] sm:$0x3]
        %v1999 = vld [vmem:[%s935 + $0x2] sm:$0x3]
        %v2000 = vunpack.c.0.s8 %v1998
        %v2001 = vunpack.c.0.s8 %v1999
        %v2002 = vcvt.s32.f32 %v2000
        %v2003 = vcvt.s32.f32 %v2001
        %v2004 = vsub.f32 %v2002, 1.0
        %v2005 = vsub.f32 %v2003, 1.0
        %v2006 = vmul.f32 %v2004, 1e+09
        %v2007 = vmul.f32 %v2005, 1e+09
        %v2008 = vadd.f32 %v1994, %v1995
        %2009 = vadd.xlane.f32.xlu0 %v2008
        %v2010 = vpop.xlane.xlu0 %2009
        %v2011 = vadd.f32 %v1996, %v1997
        %2012 = vadd.xlane.f32.xlu0 %v2011
        %v2013 = vpop.xlane.xlu0 %2012
        %v2014 = vmul.f32 %v2010, %v1122
        %v2015 = vmul.f32 %v2013, %v1122
        %v2016 = vsub.f32 %v1994, %v2014
        %v2017 = vsub.f32 %v1995, %v2014
        %v2018 = vsub.f32 %v1996, %v2015
        %v2019 = vsub.f32 %v1997, %v2015
        %v2020 = vmul.f32 %v2016, %v2016
        %v2021 = vmul.f32 %v2017, %v2017
        %v2022 = vmul.f32 %v2018, %v2018
        %v2023 = vmul.f32 %v2019, %v2019
        %v2024 = vadd.f32 %v2020, %v2021
        %2025 = vadd.xlane.f32.xlu0 %v2024
        %v2026 = vpop.xlane.xlu0 %2025
        %v2027 = vadd.f32 %v2022, %v2023
        %2028 = vadd.xlane.f32.xlu0 %v2027
        %v2029 = vpop.xlane.xlu0 %2028
        %v2030 = vmul.f32 %v2026, 0.003921569
        %v2031 = vmul.f32 %v2029, 0.003921569
        %v2032 = vrsqrt.pop %v2030
        %v2033 = vmul.f32 %v2032, %v2030
        %v2034 = vmul.f32 %v2033, %v2032
        %v2035 = vmul.f32 0.5, %v2034
        %v2036 = vsub.f32 1.5, %v2035
        %v2037 = vmul.f32 %v2032, %v2036
        %v2038 = vmul.f32 %v2030, %v2037
        %vm2039 = vcmp.eq.f32.partialorder %v2030, inf
        %v2040 = vsel %vm2039, %v2030, %v2038
        %vm2041 = vcmp.eq.f32.partialorder %v2030, 0.0
        %v2042 = vand.u32 %v2030, 2147483648
        %v2043 = vsel %vm2041, %v2042, %v2040
        %v2044 = vrsqrt.pop %v2031
        %v2045 = vmul.f32 %v2044, %v2031
        %v2046 = vmul.f32 %v2045, %v2044
        %v2047 = vmul.f32 0.5, %v2046
        %v2048 = vsub.f32 1.5, %v2047
        %v2049 = vmul.f32 %v2044, %v2048
        %v2050 = vmul.f32 %v2031, %v2049
        %vm2051 = vcmp.eq.f32.partialorder %v2031, inf
        %v2052 = vsel %vm2051, %v2031, %v2050
        %vm2053 = vcmp.eq.f32.partialorder %v2031, 0.0
        %v2054 = vand.u32 %v2031, 2147483648
        %v2055 = vsel %vm2053, %v2054, %v2052
        %v2056 = vadd.f32 %v2043, 1e-06
        %v2057 = vadd.f32 %v2055, 1e-06
        %v2058 = vrcp.pop %v2056
        %v2059 = vrcp.pop %v2057
        %v2060 = vld [vmem:[#allocation13] sm:$0x3]
        %v2061 = vmul.f32 %v2016, %v2058
        %v2062 = vmul.f32 %v2017, %v2058
        %v2063 = vmul.f32 %v2018, %v2059
        %v2064 = vmul.f32 %v2019, %v2059
        %v2066 = vperm.slane %v2060, 0
        %v2067 = vperm.slane %v2060, 1
        %v2070 = vmul.f32 %v2066, %v2061
        %v2071 = vmul.f32 %v2067, %v2062
        %v2072 = vmul.f32 %v2066, %v2063
        %v2073 = vmul.f32 %v2067, %v2064
        %v2074 = vld [vmem:[#allocation14] sm:$0x3]
        %v2076 = vperm.slane %v2074, 0
        %v2077 = vperm.slane %v2074, 1
        %v2080 = vadd.f32 %v2070, %v2076
        %v2081 = vadd.f32 %v2071, %v2077
        %v2082 = vadd.f32 %v2072, %v2076
        %v2083 = vadd.f32 %v2073, %v2077
        %v2084 = vld [vmem:[%s925] sm:$0xff]
        %v2085 = vld [vmem:[%s925 + $0x8] sm:$0xff]
        %v2086 = vld [vmem:[%s925 + $0x10] sm:$0xff]
        %v2087 = vld [vmem:[%s925 + $0x18] sm:$0xff]
        %v2088 = vld [vmem:[#allocation23] sm:$0xff]
        %v2089 = vld [vmem:[#allocation23 + $0x8] sm:$0xff]
        %v2090 = vld [vmem:[#allocation23 + $0x30] sm:$0xff]
        %v2091 = vld [vmem:[#allocation23 + $0x38] sm:$0xff]
        %v2092 = vld [vmem:[#allocation23 + $0x60] sm:$0xff]
        %v2093 = vld [vmem:[#allocation23 + $0x68] sm:$0xff]
        %v2094 = vld [vmem:[#allocation23 + $0x90] sm:$0xff]
        %v2095 = vld [vmem:[#allocation23 + $0x98] sm:$0xff]
        %v2096 = vld [vmem:[#allocation23 + $0xc0] sm:$0xff]
        %v2097 = vld [vmem:[#allocation23 + $0xc8] sm:$0xff]
        %v2098 = vld [vmem:[#allocation23 + $0xf0] sm:$0xff]
        %v2099 = vld [vmem:[#allocation23 + $0xf8] sm:$0xff]
        %v2100 = vld [vmem:[#allocation23 + $0x120] sm:$0xff]
        %v2101 = vld [vmem:[#allocation23 + $0x128] sm:$0xff]
        %v2102 = vld [vmem:[#allocation23 + $0x150] sm:$0xff]
        %v2103 = vld [vmem:[#allocation23 + $0x158] sm:$0xff]
        %v2104 = vld [vmem:[#allocation23 + $0x180] sm:$0xff]
        %v2105 = vld [vmem:[#allocation23 + $0x188] sm:$0xff]
        %v2106 = vld [vmem:[#allocation23 + $0x1b0] sm:$0xff]
        %v2107 = vld [vmem:[#allocation23 + $0x1b8] sm:$0xff]
        %v2108 = vld [vmem:[#allocation23 + $0x1e0] sm:$0xff]
        %v2109 = vld [vmem:[#allocation23 + $0x1e8] sm:$0xff]
        %v2110 = vld [vmem:[#allocation23 + $0x210] sm:$0xff]
        %v2111 = vld [vmem:[#allocation23 + $0x218] sm:$0xff]
        %v2112 = vld [vmem:[#allocation23 + $0x240] sm:$0xff]
        %v2113 = vld [vmem:[#allocation23 + $0x248] sm:$0xff]
        %v2114 = vld [vmem:[#allocation23 + $0x270] sm:$0xff]
        %v2115 = vld [vmem:[#allocation23 + $0x278] sm:$0xff]
        %v2116 = vld [vmem:[#allocation23 + $0x2a0] sm:$0xff]
        %v2117 = vld [vmem:[#allocation23 + $0x2a8] sm:$0xff]
        %v2118 = vld [vmem:[#allocation23 + $0x2d0] sm:$0xff]
        %v2119 = vld [vmem:[#allocation23 + $0x2d8] sm:$0xff]
        %v2120 = vld [vmem:[#allocation23 + $0x300] sm:$0xff]
        %v2121 = vld [vmem:[#allocation23 + $0x308] sm:$0xff]
        %v2122 = vld [vmem:[#allocation23 + $0x330] sm:$0xff]
        %v2123 = vld [vmem:[#allocation23 + $0x338] sm:$0xff]
        %v2124 = vld [vmem:[#allocation23 + $0x360] sm:$0xff]
        %v2125 = vld [vmem:[#allocation23 + $0x368] sm:$0xff]
        %v2126 = vld [vmem:[#allocation23 + $0x390] sm:$0xff]
        %v2127 = vld [vmem:[#allocation23 + $0x398] sm:$0xff]
        %v2128 = vld [vmem:[#allocation23 + $0x3c0] sm:$0xff]
        %v2129 = vld [vmem:[#allocation23 + $0x3c8] sm:$0xff]
        %v2130 = vld [vmem:[#allocation23 + $0x3f0] sm:$0xff]
        %v2131 = vld [vmem:[#allocation23 + $0x3f8] sm:$0xff]
        %v2132 = vld [vmem:[#allocation23 + $0x420] sm:$0xff]
        %v2133 = vld [vmem:[#allocation23 + $0x428] sm:$0xff]
        %v2134 = vld [vmem:[#allocation23 + $0x450] sm:$0xff]
        %v2135 = vld [vmem:[#allocation23 + $0x458] sm:$0xff]
        %v2136 = vld [vmem:[#allocation23 + $0x480] sm:$0xff]
        %v2137 = vld [vmem:[#allocation23 + $0x488] sm:$0xff]
        %v2138 = vld [vmem:[#allocation23 + $0x4b0] sm:$0xff]
        %v2139 = vld [vmem:[#allocation23 + $0x4b8] sm:$0xff]
        %v2140 = vld [vmem:[#allocation23 + $0x4e0] sm:$0xff]
        %v2141 = vld [vmem:[#allocation23 + $0x4e8] sm:$0xff]
        %v2142 = vld [vmem:[#allocation23 + $0x510] sm:$0xff]
        %v2143 = vld [vmem:[#allocation23 + $0x518] sm:$0xff]
        %v2144 = vld [vmem:[#allocation23 + $0x540] sm:$0xff]
        %v2145 = vld [vmem:[#allocation23 + $0x548] sm:$0xff]
        %v2146 = vld [vmem:[#allocation23 + $0x570] sm:$0xff]
        %v2147 = vld [vmem:[#allocation23 + $0x578] sm:$0xff]
        %v2148 = vld [vmem:[#allocation23 + $0x5a0] sm:$0xff]
        %v2149 = vld [vmem:[#allocation23 + $0x5a8] sm:$0xff]
        %v2150 = vld [vmem:[#allocation23 + $0x5d0] sm:$0xff]
        %v2151 = vld [vmem:[#allocation23 + $0x5d8] sm:$0xff]
        %v2152 = vld [vmem:[%s15] sm:$0x3]
        %v2154 = vperm.slane %v2152, 0
        %v2155 = vperm.slane %v2152, 1
        %2158 = vmatpush.msra.mxu0 %v2118
        %2159 = vmatpush.msra.mxu0 %v2116
        %2160 = vmatpush.msra.mxu0 %v2114
        %2161 = vmatpush.msra.mxu0 %v2112
        %2162 = vmatpush.msra.mxu0 %v2110
        %2163 = vmatpush.msra.mxu0 %v2108
        %2164 = vmatpush.msra.mxu0 %v2106
        %2165 = vmatpush.msra.mxu0 %v2104
        %2166 = vmatpush.msra.mxu0 %v2102
        %2167 = vmatpush.msra.mxu0 %v2100
        %2168 = vmatpush.msra.mxu0 %v2098
        %2169 = vmatpush.msra.mxu0 %v2096
        %2170 = vmatpush.msra.mxu0 %v2094
        %2171 = vmatpush.msra.mxu0 %v2092
        %2172 = vmatpush.msra.mxu0 %v2090
        %2173 = vmatpush.msra.mxu0 %v2088
        %2174 = vmatmul.f32.gmra.mxu0 %v2080
        %v2175 = vpop.f32.mrf.mxu0
        %v2176 = vadd.f32 %v2154, %v2175
        %2177 = vmatmul.f32.gmra.mxu0 %v2082
        %v2178 = vpop.f32.mrf.mxu0
        %v2179 = vadd.f32 %v2154, %v2178
        %2180 = vdwg.mxu0
        %2181 = vmatpush.msra.mxu0 %v2150
        %2182 = vmatpush.msra.mxu0 %v2148
        %2183 = vmatpush.msra.mxu0 %v2146
        %2184 = vmatpush.msra.mxu0 %v2144
        %2185 = vmatpush.msra.mxu0 %v2142
        %2186 = vmatpush.msra.mxu0 %v2140
        %2187 = vmatpush.msra.mxu0 %v2138
        %2188 = vmatpush.msra.mxu0 %v2136
        %2189 = vmatpush.msra.mxu0 %v2134
        %2190 = vmatpush.msra.mxu0 %v2132
        %2191 = vmatpush.msra.mxu0 %v2130
        %2192 = vmatpush.msra.mxu0 %v2128
        %2193 = vmatpush.msra.mxu0 %v2126
        %2194 = vmatpush.msra.mxu0 %v2124
        %2195 = vmatpush.msra.mxu0 %v2122
        %2196 = vmatpush.msra.mxu0 %v2120
        %2197 = vmatmul.f32.gmra.mxu0 %v2081
        %v2198 = vpop.f32.mrf.mxu0
        %v2199 = vadd.f32 %v2176, %v2198
        %2200 = vmatmul.f32.gmra.mxu0 %v2083
        %v2201 = vpop.f32.mrf.mxu0
        %v2202 = vadd.f32 %v2179, %v2201
        %2203 = vdwg.mxu0
        %2204 = vmatpush.msra.mxu0 %v2119
        %2205 = vmatpush.msra.mxu0 %v2117
        %2206 = vmatpush.msra.mxu0 %v2115
        %2207 = vmatpush.msra.mxu0 %v2113
        %2208 = vmatpush.msra.mxu0 %v2111
        %2209 = vmatpush.msra.mxu0 %v2109
        %2210 = vmatpush.msra.mxu0 %v2107
        %2211 = vmatpush.msra.mxu0 %v2105
        %2212 = vmatpush.msra.mxu0 %v2103
        %2213 = vmatpush.msra.mxu0 %v2101
        %2214 = vmatpush.msra.mxu0 %v2099
        %2215 = vmatpush.msra.mxu0 %v2097
        %2216 = vmatpush.msra.mxu0 %v2095
        %2217 = vmatpush.msra.mxu0 %v2093
        %2218 = vmatpush.msra.mxu0 %v2091
        %2219 = vmatpush.msra.mxu0 %v2089
        %2220 = vmatmul.f32.gmra.mxu0 %v2080
        %v2221 = vpop.f32.mrf.mxu0
        %v2222 = vadd.f32 %v2155, %v2221
        %2223 = vmatmul.f32.gmra.mxu0 %v2082
        %v2224 = vpop.f32.mrf.mxu0
        %v2225 = vadd.f32 %v2155, %v2224
        %2226 = vdwg.mxu0
        %2227 = vmatpush.msra.mxu0 %v2151
        %2228 = vmatpush.msra.mxu0 %v2149
        %2229 = vmatpush.msra.mxu0 %v2147
        %2230 = vmatpush.msra.mxu0 %v2145
        %2231 = vmatpush.msra.mxu0 %v2143
        %2232 = vmatpush.msra.mxu0 %v2141
        %2233 = vmatpush.msra.mxu0 %v2139
        %2234 = vmatpush.msra.mxu0 %v2137
        %2235 = vmatpush.msra.mxu0 %v2135
        %2236 = vmatpush.msra.mxu0 %v2133
        %2237 = vmatpush.msra.mxu0 %v2131
        %2238 = vmatpush.msra.mxu0 %v2129
        %2239 = vmatpush.msra.mxu0 %v2127
        %2240 = vmatpush.msra.mxu0 %v2125
        %2241 = vmatpush.msra.mxu0 %v2123
        %2242 = vmatpush.msra.mxu0 %v2121
        %2243 = vmatmul.f32.gmra.mxu0 %v2081
        %v2244 = vpop.f32.mrf.mxu0
        %v2245 = vadd.f32 %v2222, %v2244
        %2246 = vmatmul.f32.gmra.mxu0 %v2083
        %v2247 = vpop.f32.mrf.mxu0
        %v2248 = vadd.f32 %v2225, %v2247
        %2249 = vdwg.mxu0
        %v2250 = vld [vmem:[#allocation23 + $0x10] sm:$0xff]
        %v2251 = vld [vmem:[#allocation23 + $0x18] sm:$0xff]
        %v2252 = vld [vmem:[#allocation23 + $0x20] sm:$0xff]
        %v2253 = vld [vmem:[#allocation23 + $0x28] sm:$0xff]
        %v2254 = vld [vmem:[#allocation23 + $0x40] sm:$0xff]
        %v2255 = vld [vmem:[#allocation23 + $0x48] sm:$0xff]
        %v2256 = vld [vmem:[#allocation23 + $0x50] sm:$0xff]
        %v2257 = vld [vmem:[#allocation23 + $0x58] sm:$0xff]
        %v2258 = vld [vmem:[#allocation23 + $0x70] sm:$0xff]
        %v2259 = vld [vmem:[#allocation23 + $0x78] sm:$0xff]
        %v2260 = vld [vmem:[#allocation23 + $0x80] sm:$0xff]
        %v2261 = vld [vmem:[#allocation23 + $0x88] sm:$0xff]
        %v2262 = vld [vmem:[#allocation23 + $0xa0] sm:$0xff]
        %v2263 = vld [vmem:[#allocation23 + $0xa8] sm:$0xff]
        %v2264 = vld [vmem:[#allocation23 + $0xb0] sm:$0xff]
        %v2265 = vld [vmem:[#allocation23 + $0xb8] sm:$0xff]
        %v2266 = vld [vmem:[#allocation23 + $0xd0] sm:$0xff]
        %v2267 = vld [vmem:[#allocation23 + $0xd8] sm:$0xff]
        %v2268 = vld [vmem:[#allocation23 + $0xe0] sm:$0xff]
        %v2269 = vld [vmem:[#allocation23 + $0xe8] sm:$0xff]
        %v2270 = vld [vmem:[#allocation23 + $0x100] sm:$0xff]
        %v2271 = vld [vmem:[#allocation23 + $0x108] sm:$0xff]
        %v2272 = vld [vmem:[#allocation23 + $0x110] sm:$0xff]
        %v2273 = vld [vmem:[#allocation23 + $0x118] sm:$0xff]
        %v2274 = vld [vmem:[#allocation23 + $0x130] sm:$0xff]
        %v2275 = vld [vmem:[#allocation23 + $0x138] sm:$0xff]
        %v2276 = vld [vmem:[#allocation23 + $0x140] sm:$0xff]
        %v2277 = vld [vmem:[#allocation23 + $0x148] sm:$0xff]
        %v2278 = vld [vmem:[#allocation23 + $0x160] sm:$0xff]
        %v2279 = vld [vmem:[#allocation23 + $0x168] sm:$0xff]
        %v2280 = vld [vmem:[#allocation23 + $0x170] sm:$0xff]
        %v2281 = vld [vmem:[#allocation23 + $0x178] sm:$0xff]
        %v2282 = vld [vmem:[#allocation23 + $0x190] sm:$0xff]
        %v2283 = vld [vmem:[#allocation23 + $0x198] sm:$0xff]
        %v2284 = vld [vmem:[#allocation23 + $0x1a0] sm:$0xff]
        %v2285 = vld [vmem:[#allocation23 + $0x1a8] sm:$0xff]
        %v2286 = vld [vmem:[#allocation23 + $0x1c0] sm:$0xff]
        %v2287 = vld [vmem:[#allocation23 + $0x1c8] sm:$0xff]
        %v2288 = vld [vmem:[#allocation23 + $0x1d0] sm:$0xff]
        %v2289 = vld [vmem:[#allocation23 + $0x1d8] sm:$0xff]
        %v2290 = vld [vmem:[#allocation23 + $0x1f0] sm:$0xff]
        %v2291 = vld [vmem:[#allocation23 + $0x1f8] sm:$0xff]
        %v2292 = vld [vmem:[#allocation23 + $0x200] sm:$0xff]
        %v2293 = vld [vmem:[#allocation23 + $0x208] sm:$0xff]
        %v2294 = vld [vmem:[#allocation23 + $0x220] sm:$0xff]
        %v2295 = vld [vmem:[#allocation23 + $0x228] sm:$0xff]
        %v2296 = vld [vmem:[#allocation23 + $0x230] sm:$0xff]
        %v2297 = vld [vmem:[#allocation23 + $0x238] sm:$0xff]
        %v2298 = vld [vmem:[#allocation23 + $0x250] sm:$0xff]
        %v2299 = vld [vmem:[#allocation23 + $0x258] sm:$0xff]
        %v2300 = vld [vmem:[#allocation23 + $0x260] sm:$0xff]
        %v2301 = vld [vmem:[#allocation23 + $0x268] sm:$0xff]
        %v2302 = vld [vmem:[#allocation23 + $0x280] sm:$0xff]
        %v2303 = vld [vmem:[#allocation23 + $0x288] sm:$0xff]
        %v2304 = vld [vmem:[#allocation23 + $0x290] sm:$0xff]
        %v2305 = vld [vmem:[#allocation23 + $0x298] sm:$0xff]
        %v2306 = vld [vmem:[#allocation23 + $0x2b0] sm:$0xff]
        %v2307 = vld [vmem:[#allocation23 + $0x2b8] sm:$0xff]
        %v2308 = vld [vmem:[#allocation23 + $0x2c0] sm:$0xff]
        %v2309 = vld [vmem:[#allocation23 + $0x2c8] sm:$0xff]
        %v2310 = vld [vmem:[#allocation23 + $0x2e0] sm:$0xff]
        %v2311 = vld [vmem:[#allocation23 + $0x2e8] sm:$0xff]
        %v2312 = vld [vmem:[#allocation23 + $0x2f0] sm:$0xff]
        %v2313 = vld [vmem:[#allocation23 + $0x2f8] sm:$0xff]
        %v2314 = vld [vmem:[#allocation23 + $0x310] sm:$0xff]
        %v2315 = vld [vmem:[#allocation23 + $0x318] sm:$0xff]
        %v2316 = vld [vmem:[#allocation23 + $0x320] sm:$0xff]
        %v2317 = vld [vmem:[#allocation23 + $0x328] sm:$0xff]
        %v2318 = vld [vmem:[#allocation23 + $0x340] sm:$0xff]
        %v2319 = vld [vmem:[#allocation23 + $0x348] sm:$0xff]
        %v2320 = vld [vmem:[#allocation23 + $0x350] sm:$0xff]
        %v2321 = vld [vmem:[#allocation23 + $0x358] sm:$0xff]
        %v2322 = vld [vmem:[#allocation23 + $0x370] sm:$0xff]
        %v2323 = vld [vmem:[#allocation23 + $0x378] sm:$0xff]
        %v2324 = vld [vmem:[#allocation23 + $0x380] sm:$0xff]
        %v2325 = vld [vmem:[#allocation23 + $0x388] sm:$0xff]
        %v2326 = vld [vmem:[#allocation23 + $0x3a0] sm:$0xff]
        %v2327 = vld [vmem:[#allocation23 + $0x3a8] sm:$0xff]
        %v2328 = vld [vmem:[#allocation23 + $0x3b0] sm:$0xff]
        %v2329 = vld [vmem:[#allocation23 + $0x3b8] sm:$0xff]
        %v2330 = vld [vmem:[#allocation23 + $0x3d0] sm:$0xff]
        %v2331 = vld [vmem:[#allocation23 + $0x3d8] sm:$0xff]
        %v2332 = vld [vmem:[#allocation23 + $0x3e0] sm:$0xff]
        %v2333 = vld [vmem:[#allocation23 + $0x3e8] sm:$0xff]
        %v2334 = vld [vmem:[#allocation23 + $0x400] sm:$0xff]
        %v2335 = vld [vmem:[#allocation23 + $0x408] sm:$0xff]
        %v2336 = vld [vmem:[#allocation23 + $0x410] sm:$0xff]
        %v2337 = vld [vmem:[#allocation23 + $0x418] sm:$0xff]
        %v2338 = vld [vmem:[#allocation23 + $0x430] sm:$0xff]
        %v2339 = vld [vmem:[#allocation23 + $0x438] sm:$0xff]
        %v2340 = vld [vmem:[#allocation23 + $0x440] sm:$0xff]
        %v2341 = vld [vmem:[#allocation23 + $0x448] sm:$0xff]
        %v2342 = vld [vmem:[#allocation23 + $0x460] sm:$0xff]
        %v2343 = vld [vmem:[#allocation23 + $0x468] sm:$0xff]
        %v2344 = vld [vmem:[#allocation23 + $0x470] sm:$0xff]
        %v2345 = vld [vmem:[#allocation23 + $0x478] sm:$0xff]
        %v2346 = vld [vmem:[#allocation23 + $0x490] sm:$0xff]
        %v2347 = vld [vmem:[#allocation23 + $0x498] sm:$0xff]
        %v2348 = vld [vmem:[#allocation23 + $0x4a0] sm:$0xff]
        %v2349 = vld [vmem:[#allocation23 + $0x4a8] sm:$0xff]
        %v2350 = vld [vmem:[#allocation23 + $0x4c0] sm:$0xff]
        %v2351 = vld [vmem:[#allocation23 + $0x4c8] sm:$0xff]
        %v2352 = vld [vmem:[#allocation23 + $0x4d0] sm:$0xff]
        %v2353 = vld [vmem:[#allocation23 + $0x4d8] sm:$0xff]
        %v2354 = vld [vmem:[#allocation23 + $0x4f0] sm:$0xff]
        %v2355 = vld [vmem:[#allocation23 + $0x4f8] sm:$0xff]
        %v2356 = vld [vmem:[#allocation23 + $0x500] sm:$0xff]
        %v2357 = vld [vmem:[#allocation23 + $0x508] sm:$0xff]
        %v2358 = vld [vmem:[#allocation23 + $0x520] sm:$0xff]
        %v2359 = vld [vmem:[#allocation23 + $0x528] sm:$0xff]
        %v2360 = vld [vmem:[#allocation23 + $0x530] sm:$0xff]
        %v2361 = vld [vmem:[#allocation23 + $0x538] sm:$0xff]
        %v2362 = vld [vmem:[#allocation23 + $0x550] sm:$0xff]
        %v2363 = vld [vmem:[#allocation23 + $0x558] sm:$0xff]
        %v2364 = vld [vmem:[#allocation23 + $0x560] sm:$0xff]
        %v2365 = vld [vmem:[#allocation23 + $0x568] sm:$0xff]
        %v2366 = vld [vmem:[#allocation23 + $0x580] sm:$0xff]
        %v2367 = vld [vmem:[#allocation23 + $0x588] sm:$0xff]
        %v2368 = vld [vmem:[#allocation23 + $0x590] sm:$0xff]
        %v2369 = vld [vmem:[#allocation23 + $0x598] sm:$0xff]
        %v2370 = vld [vmem:[#allocation23 + $0x5b0] sm:$0xff]
        %v2371 = vld [vmem:[#allocation23 + $0x5b8] sm:$0xff]
        %v2372 = vld [vmem:[#allocation23 + $0x5c0] sm:$0xff]
        %v2373 = vld [vmem:[#allocation23 + $0x5c8] sm:$0xff]
        %v2374 = vld [vmem:[#allocation23 + $0x5e0] sm:$0xff]
        %v2375 = vld [vmem:[#allocation23 + $0x5e8] sm:$0xff]
        %v2376 = vld [vmem:[#allocation23 + $0x5f0] sm:$0xff]
        %v2377 = vld [vmem:[#allocation23 + $0x5f8] sm:$0xff]
        %v2378 = vld [vmem:[%s15 + $0x2] sm:$0xf]
        %v2380 = vperm.slane %v2378, 0
        %v2381 = vperm.slane %v2378, 1
        %v2382 = vperm.slane %v2378, 2
        %v2383 = vperm.slane %v2378, 3
        %2388 = vmatpush.msra.mxu0 %v2310
        %2389 = vmatpush.msra.mxu0 %v2306
        %2390 = vmatpush.msra.mxu0 %v2302
        %2391 = vmatpush.msra.mxu0 %v2298
        %2392 = vmatpush.msra.mxu0 %v2294
        %2393 = vmatpush.msra.mxu0 %v2290
        %2394 = vmatpush.msra.mxu0 %v2286
        %2395 = vmatpush.msra.mxu0 %v2282
        %2396 = vmatpush.msra.mxu0 %v2278
        %2397 = vmatpush.msra.mxu0 %v2274
        %2398 = vmatpush.msra.mxu0 %v2270
        %2399 = vmatpush.msra.mxu0 %v2266
        %2400 = vmatpush.msra.mxu0 %v2262
        %2401 = vmatpush.msra.mxu0 %v2258
        %2402 = vmatpush.msra.mxu0 %v2254
        %2403 = vmatpush.msra.mxu0 %v2250
        %2404 = vmatmul.f32.gmra.mxu0 %v2084
        %v2405 = vpop.f32.mrf.mxu0
        %v2406 = vadd.f32 %v2380, %v2405
        %2407 = vmatmul.f32.gmra.mxu0 %v2086
        %v2408 = vpop.f32.mrf.mxu0
        %v2409 = vadd.f32 %v2380, %v2408
        %2410 = vdwg.mxu0
        %2411 = vmatpush.msra.mxu0 %v2374
        %2412 = vmatpush.msra.mxu0 %v2370
        %2413 = vmatpush.msra.mxu0 %v2366
        %2414 = vmatpush.msra.mxu0 %v2362
        %2415 = vmatpush.msra.mxu0 %v2358
        %2416 = vmatpush.msra.mxu0 %v2354
        %2417 = vmatpush.msra.mxu0 %v2350
        %2418 = vmatpush.msra.mxu0 %v2346
        %2419 = vmatpush.msra.mxu0 %v2342
        %2420 = vmatpush.msra.mxu0 %v2338
        %2421 = vmatpush.msra.mxu0 %v2334
        %2422 = vmatpush.msra.mxu0 %v2330
        %2423 = vmatpush.msra.mxu0 %v2326
        %2424 = vmatpush.msra.mxu0 %v2322
        %2425 = vmatpush.msra.mxu0 %v2318
        %2426 = vmatpush.msra.mxu0 %v2314
        %2427 = vmatmul.f32.gmra.mxu0 %v2085
        %v2428 = vpop.f32.mrf.mxu0
        %v2429 = vadd.f32 %v2406, %v2428
        %2430 = vmatmul.f32.gmra.mxu0 %v2087
        %v2431 = vpop.f32.mrf.mxu0
        %v2432 = vadd.f32 %v2409, %v2431
        %2433 = vdwg.mxu0
        %2434 = vmatpush.msra.mxu0 %v2311
        %2435 = vmatpush.msra.mxu0 %v2307
        %2436 = vmatpush.msra.mxu0 %v2303
        %2437 = vmatpush.msra.mxu0 %v2299
        %2438 = vmatpush.msra.mxu0 %v2295
        %2439 = vmatpush.msra.mxu0 %v2291
        %2440 = vmatpush.msra.mxu0 %v2287
        %2441 = vmatpush.msra.mxu0 %v2283
        %2442 = vmatpush.msra.mxu0 %v2279
        %2443 = vmatpush.msra.mxu0 %v2275
        %2444 = vmatpush.msra.mxu0 %v2271
        %2445 = vmatpush.msra.mxu0 %v2267
        %2446 = vmatpush.msra.mxu0 %v2263
        %2447 = vmatpush.msra.mxu0 %v2259
        %2448 = vmatpush.msra.mxu0 %v2255
        %2449 = vmatpush.msra.mxu0 %v2251
        %2450 = vmatmul.f32.gmra.mxu0 %v2084
        %v2451 = vpop.f32.mrf.mxu0
        %v2452 = vadd.f32 %v2381, %v2451
        %2453 = vmatmul.f32.gmra.mxu0 %v2086
        %v2454 = vpop.f32.mrf.mxu0
        %v2455 = vadd.f32 %v2381, %v2454
        %2456 = vdwg.mxu0
        %2457 = vmatpush.msra.mxu0 %v2375
        %2458 = vmatpush.msra.mxu0 %v2371
        %2459 = vmatpush.msra.mxu0 %v2367
        %2460 = vmatpush.msra.mxu0 %v2363
        %2461 = vmatpush.msra.mxu0 %v2359
        %2462 = vmatpush.msra.mxu0 %v2355
        %2463 = vmatpush.msra.mxu0 %v2351
        %2464 = vmatpush.msra.mxu0 %v2347
        %2465 = vmatpush.msra.mxu0 %v2343
        %2466 = vmatpush.msra.mxu0 %v2339
        %2467 = vmatpush.msra.mxu0 %v2335
        %2468 = vmatpush.msra.mxu0 %v2331
        %2469 = vmatpush.msra.mxu0 %v2327
        %2470 = vmatpush.msra.mxu0 %v2323
        %2471 = vmatpush.msra.mxu0 %v2319
        %2472 = vmatpush.msra.mxu0 %v2315
        %2473 = vmatmul.f32.gmra.mxu0 %v2085
        %v2474 = vpop.f32.mrf.mxu0
        %v2475 = vadd.f32 %v2452, %v2474
        %2476 = vmatmul.f32.gmra.mxu0 %v2087
        %v2477 = vpop.f32.mrf.mxu0
        %v2478 = vadd.f32 %v2455, %v2477
        %2479 = vdwg.mxu0
        %2480 = vmatpush.msra.mxu0 %v2312
        %2481 = vmatpush.msra.mxu0 %v2308
        %2482 = vmatpush.msra.mxu0 %v2304
        %2483 = vmatpush.msra.mxu0 %v2300
        %2484 = vmatpush.msra.mxu0 %v2296
        %2485 = vmatpush.msra.mxu0 %v2292
        %2486 = vmatpush.msra.mxu0 %v2288
        %2487 = vmatpush.msra.mxu0 %v2284
        %2488 = vmatpush.msra.mxu0 %v2280
        %2489 = vmatpush.msra.mxu0 %v2276
        %2490 = vmatpush.msra.mxu0 %v2272
        %2491 = vmatpush.msra.mxu0 %v2268
        %2492 = vmatpush.msra.mxu0 %v2264
        %2493 = vmatpush.msra.mxu0 %v2260
        %2494 = vmatpush.msra.mxu0 %v2256
        %2495 = vmatpush.msra.mxu0 %v2252
        %2496 = vmatmul.f32.gmra.mxu0 %v2084
        %v2497 = vpop.f32.mrf.mxu0
        %v2498 = vadd.f32 %v2382, %v2497
        %2499 = vmatmul.f32.gmra.mxu0 %v2086
        %v2500 = vpop.f32.mrf.mxu0
        %v2501 = vadd.f32 %v2382, %v2500
        %2502 = vdwg.mxu0
        %2503 = vmatpush.msra.mxu0 %v2376
        %2504 = vmatpush.msra.mxu0 %v2372
        %2505 = vmatpush.msra.mxu0 %v2368
        %2506 = vmatpush.msra.mxu0 %v2364
        %2507 = vmatpush.msra.mxu0 %v2360
        %2508 = vmatpush.msra.mxu0 %v2356
        %2509 = vmatpush.msra.mxu0 %v2352
        %2510 = vmatpush.msra.mxu0 %v2348
        %2511 = vmatpush.msra.mxu0 %v2344
        %2512 = vmatpush.msra.mxu0 %v2340
        %2513 = vmatpush.msra.mxu0 %v2336
        %2514 = vmatpush.msra.mxu0 %v2332
        %2515 = vmatpush.msra.mxu0 %v2328
        %2516 = vmatpush.msra.mxu0 %v2324
        %2517 = vmatpush.msra.mxu0 %v2320
        %2518 = vmatpush.msra.mxu0 %v2316
        %2519 = vmatmul.f32.gmra.mxu0 %v2085
        %v2520 = vpop.f32.mrf.mxu0
        %v2521 = vadd.f32 %v2498, %v2520
        %2522 = vmatmul.f32.gmra.mxu0 %v2087
        %v2523 = vpop.f32.mrf.mxu0
        %v2524 = vadd.f32 %v2501, %v2523
        %2525 = vdwg.mxu0
        %2526 = vmatpush.msra.mxu0 %v2313
        %2527 = vmatpush.msra.mxu0 %v2309
        %2528 = vmatpush.msra.mxu0 %v2305
        %2529 = vmatpush.msra.mxu0 %v2301
        %2530 = vmatpush.msra.mxu0 %v2297
        %2531 = vmatpush.msra.mxu0 %v2293
        %2532 = vmatpush.msra.mxu0 %v2289
        %2533 = vmatpush.msra.mxu0 %v2285
        %2534 = vmatpush.msra.mxu0 %v2281
        %2535 = vmatpush.msra.mxu0 %v2277
        %2536 = vmatpush.msra.mxu0 %v2273
        %2537 = vmatpush.msra.mxu0 %v2269
        %2538 = vmatpush.msra.mxu0 %v2265
        %2539 = vmatpush.msra.mxu0 %v2261
        %2540 = vmatpush.msra.mxu0 %v2257
        %2541 = vmatpush.msra.mxu0 %v2253
        %2542 = vmatmul.f32.gmra.mxu0 %v2084
        %v2543 = vpop.f32.mrf.mxu0
        %v2544 = vadd.f32 %v2383, %v2543
        %2545 = vmatmul.f32.gmra.mxu0 %v2086
        %v2546 = vpop.f32.mrf.mxu0
        %v2547 = vadd.f32 %v2383, %v2546
        %2548 = vdwg.mxu0
        %2549 = vmatpush.msra.mxu0 %v2377
        %2550 = vmatpush.msra.mxu0 %v2373
        %2551 = vmatpush.msra.mxu0 %v2369
        %2552 = vmatpush.msra.mxu0 %v2365
        %2553 = vmatpush.msra.mxu0 %v2361
        %2554 = vmatpush.msra.mxu0 %v2357
        %2555 = vmatpush.msra.mxu0 %v2353
        %2556 = vmatpush.msra.mxu0 %v2349
        %2557 = vmatpush.msra.mxu0 %v2345
        %2558 = vmatpush.msra.mxu0 %v2341
        %2559 = vmatpush.msra.mxu0 %v2337
        %2560 = vmatpush.msra.mxu0 %v2333
        %2561 = vmatpush.msra.mxu0 %v2329
        %2562 = vmatpush.msra.mxu0 %v2325
        %2563 = vmatpush.msra.mxu0 %v2321
        %2564 = vmatpush.msra.mxu0 %v2317
        %2565 = vmatmul.f32.gmra.mxu0 %v2085
        %v2566 = vpop.f32.mrf.mxu0
        %v2567 = vadd.f32 %v2544, %v2566
        %2568 = vmatmul.f32.gmra.mxu0 %v2087
        %v2569 = vpop.f32.mrf.mxu0
        %v2570 = vadd.f32 %v2547, %v2569
        %2571 = vdwg.mxu0
        %2572 = vmatpush.xpose.msra.mxu0 0.0
        %2573 = vmatpush.xpose.msra.mxu0 0.0
        %2574 = vmatpush.xpose.msra.mxu0 0.0
        %2575 = vmatpush.xpose.msra.mxu0 0.0
        %2576 = vmatpush.xpose.msra.mxu0 0.0
        %2577 = vmatpush.xpose.msra.mxu0 0.0
        %2578 = vmatpush.xpose.msra.mxu0 0.0
        %2579 = vmatpush.xpose.msra.mxu0 0.0
        %2580 = vmatpush.xpose.msra.mxu0 0.0
        %2581 = vmatpush.xpose.msra.mxu0 0.0
        %2582 = vmatpush.xpose.msra.mxu0 0.0
        %2583 = vmatpush.xpose.msra.mxu0 0.0
        %2584 = vmatpush.xpose.msra.mxu0 0.0
        %2585 = vmatpush.xpose.msra.mxu0 0.0
        %2586 = vmatpush.xpose.msra.mxu0 %v2432
        %2587 = vmatpush.xpose.msra.mxu0 %v2429
        %2588 = vmatmul.f32.gmra.mxu0 %v2199
        %v2589 = vpop.f32.mrf.mxu0
        %v2590 = vadd.f32 0.0, %v2589
        %2591 = vmatmul.f32.gmra.mxu0 %v2202
        %v2592 = vpop.f32.mrf.mxu0
        %v2593 = vadd.f32 0.0, %v2592
        %2594 = vdwg.mxu0
        %2595 = vmatpush.xpose.msra.mxu0 0.0
        %2596 = vmatpush.xpose.msra.mxu0 0.0
        %2597 = vmatpush.xpose.msra.mxu0 0.0
        %2598 = vmatpush.xpose.msra.mxu0 0.0
        %2599 = vmatpush.xpose.msra.mxu0 0.0
        %2600 = vmatpush.xpose.msra.mxu0 0.0
        %2601 = vmatpush.xpose.msra.mxu0 0.0
        %2602 = vmatpush.xpose.msra.mxu0 0.0
        %2603 = vmatpush.xpose.msra.mxu0 0.0
        %2604 = vmatpush.xpose.msra.mxu0 0.0
        %2605 = vmatpush.xpose.msra.mxu0 0.0
        %2606 = vmatpush.xpose.msra.mxu0 0.0
        %2607 = vmatpush.xpose.msra.mxu0 0.0
        %2608 = vmatpush.xpose.msra.mxu0 0.0
        %2609 = vmatpush.xpose.msra.mxu0 %v2478
        %2610 = vmatpush.xpose.msra.mxu0 %v2475
        %2611 = vmatmul.f32.gmra.mxu0 %v2245
        %v2612 = vpop.f32.mrf.mxu0
        %v2613 = vadd.f32 0.0, %v2612
        %2614 = vmatmul.f32.gmra.mxu0 %v2248
        %v2615 = vpop.f32.mrf.mxu0
        %v2616 = vadd.f32 0.0, %v2615
        %2617 = vdwg.mxu0
        %v2618 = vmul.f32 %v2590, 0.088388346
        %v2619 = vmul.f32 %v2593, 0.088388346
        %v2620 = vmul.f32 %v2613, 0.088388346
        %v2621 = vmul.f32 %v2616, 0.088388346
        %v2622 = vadd.f32 %v2618, %v2006
        %v2623 = vadd.f32 %v2619, %v2007
        %v2624 = vadd.f32 %v2620, %v2006
        %v2625 = vadd.f32 %v2621, %v2007
        %v2626 = vsel %vm1729, %v2622, -inf
        %2627 = vmax.xlane.f32.xlu0 %v2626
        %v2628 = vpop.xlane.xlu0 %2627
        %v2629 = vsel %vm1729, %v2623, -inf
        %2630 = vmax.xlane.f32.xlu0 %v2629
        %v2631 = vpop.xlane.xlu0 %2630
        %v2632 = vsel %vm1729, %v2624, -inf
        %2633 = vmax.xlane.f32.xlu0 %v2632
        %v2634 = vpop.xlane.xlu0 %2633
        %v2635 = vsel %vm1729, %v2625, -inf
        %2636 = vmax.xlane.f32.xlu0 %v2635
        %v2637 = vpop.xlane.xlu0 %2636
        %v2638 = vsub.f32 %v2622, %v2628
        %v2639 = vsub.f32 %v2623, %v2631
        %v2640 = vsub.f32 %v2624, %v2634
        %v2641 = vsub.f32 %v2625, %v2637
        %v2642 = vmul.f32 %v2638, 1.442695
        %v2643 = vpow.pop %v2642
        %v2644 = vmul.f32 %v2639, 1.442695
        %v2645 = vpow.pop %v2644
        %v2646 = vmul.f32 %v2640, 1.442695
        %v2647 = vpow.pop %v2646
        %v2648 = vmul.f32 %v2641, 1.442695
        %v2649 = vpow.pop %v2648
        %v2650 = vsel %vm1729, %v2643, 0.0
        %2651 = vadd.xlane.f32.xlu0 %v2650
        %v2652 = vpop.xlane.xlu0 %2651
        %v2653 = vsel %vm1729, %v2645, 0.0
        %2654 = vadd.xlane.f32.xlu0 %v2653
        %v2655 = vpop.xlane.xlu0 %2654
        %v2656 = vsel %vm1729, %v2647, 0.0
        %2657 = vadd.xlane.f32.xlu0 %v2656
        %v2658 = vpop.xlane.xlu0 %2657
        %v2659 = vsel %vm1729, %v2649, 0.0
        %2660 = vadd.xlane.f32.xlu0 %v2659
        %v2661 = vpop.xlane.xlu0 %2660
        %v2662 = vrcp.pop %v2652
        %v2663 = vrcp.pop %v2655
        %v2664 = vrcp.pop %v2658
        %v2665 = vrcp.pop %v2661
        %v2666 = vmul.f32 %v2643, %v2662
        %v2667 = vmul.f32 %v2645, %v2663
        %v2668 = vmul.f32 %v2647, %v2664
        %v2669 = vmul.f32 %v2649, %v2665
        %v2671 = vsel %vm1729, %v2666, 0
        %v2674 = vsel %vm1729, %v2667, 0
        %2676 = vmatpush.msra.mxu0 0.0
        %2677 = vmatpush.msra.mxu0 0.0
        %2678 = vmatpush.msra.mxu0 0.0
        %2679 = vmatpush.msra.mxu0 0.0
        %2680 = vmatpush.msra.mxu0 0.0
        %2681 = vmatpush.msra.mxu0 0.0
        %2682 = vmatpush.msra.mxu0 0.0
        %2683 = vmatpush.msra.mxu0 0.0
        %2684 = vmatpush.msra.mxu0 0.0
        %2685 = vmatpush.msra.mxu0 0.0
        %2686 = vmatpush.msra.mxu0 0.0
        %2687 = vmatpush.msra.mxu0 0.0
        %2688 = vmatpush.msra.mxu0 0.0
        %2689 = vmatpush.msra.mxu0 0.0
        %2690 = vmatpush.msra.mxu0 %v2524
        %2691 = vmatpush.msra.mxu0 %v2521
        %2692 = vmatmul.f32.gmra.mxu0 %v2671
        %v2693 = vpop.f32.mrf.mxu0
        %v2694 = vadd.f32 0.0, %v2693
        %2695 = vmatmul.f32.gmra.mxu0 %v2674
        %v2696 = vpop.f32.mrf.mxu0
        %v2697 = vadd.f32 0.0, %v2696
        %2698 = vdwg.mxu0
        %v2700 = vsel %vm1729, %v2668, 0
        %v2703 = vsel %vm1729, %v2669, 0
        %2705 = vmatpush.msra.mxu0 0.0
        %2706 = vmatpush.msra.mxu0 0.0
        %2707 = vmatpush.msra.mxu0 0.0
        %2708 = vmatpush.msra.mxu0 0.0
        %2709 = vmatpush.msra.mxu0 0.0
        %2710 = vmatpush.msra.mxu0 0.0
        %2711 = vmatpush.msra.mxu0 0.0
        %2712 = vmatpush.msra.mxu0 0.0
        %2713 = vmatpush.msra.mxu0 0.0
        %2714 = vmatpush.msra.mxu0 0.0
        %2715 = vmatpush.msra.mxu0 0.0
        %2716 = vmatpush.msra.mxu0 0.0
        %2717 = vmatpush.msra.mxu0 0.0
        %2718 = vmatpush.msra.mxu0 0.0
        %2719 = vmatpush.msra.mxu0 %v2570
        %2720 = vmatpush.msra.mxu0 %v2567
        %2721 = vmatmul.f32.gmra.mxu0 %v2700
        %v2722 = vpop.f32.mrf.mxu0
        %v2723 = vadd.f32 0.0, %v2722
        %2724 = vmatmul.f32.gmra.mxu0 %v2703
        %v2725 = vpop.f32.mrf.mxu0
        %v2726 = vadd.f32 0.0, %v2725
        %2727 = vdwg.mxu0
        %v2728 = vld [vmem:[#allocation25] sm:$0xff]
        %v2729 = vld [vmem:[#allocation25 + $0x8] sm:$0xff]
        %v2730 = vld [vmem:[#allocation25 + $0x10] sm:$0xff]
        %v2731 = vld [vmem:[#allocation25 + $0x18] sm:$0xff]
        %v2732 = vld [vmem:[#allocation25 + $0x20] sm:$0xff]
        %v2733 = vld [vmem:[#allocation25 + $0x28] sm:$0xff]
        %v2734 = vld [vmem:[#allocation25 + $0x30] sm:$0xff]
        %v2735 = vld [vmem:[#allocation25 + $0x38] sm:$0xff]
        %v2736 = vld [vmem:[#allocation25 + $0x40] sm:$0xff]
        %v2737 = vld [vmem:[#allocation25 + $0x48] sm:$0xff]
        %v2738 = vld [vmem:[#allocation25 + $0x50] sm:$0xff]
        %v2739 = vld [vmem:[#allocation25 + $0x58] sm:$0xff]
        %v2740 = vld [vmem:[#allocation25 + $0x60] sm:$0xff]
        %v2741 = vld [vmem:[#allocation25 + $0x68] sm:$0xff]
        %v2742 = vld [vmem:[#allocation25 + $0x70] sm:$0xff]
        %v2743 = vld [vmem:[#allocation25 + $0x78] sm:$0xff]
        %v2744 = vld [vmem:[#allocation25 + $0x80] sm:$0xff]
        %v2745 = vld [vmem:[#allocation25 + $0x88] sm:$0xff]
        %v2746 = vld [vmem:[#allocation25 + $0x90] sm:$0xff]
        %v2747 = vld [vmem:[#allocation25 + $0x98] sm:$0xff]
        %v2748 = vld [vmem:[#allocation25 + $0xa0] sm:$0xff]
        %v2749 = vld [vmem:[#allocation25 + $0xa8] sm:$0xff]
        %v2750 = vld [vmem:[#allocation25 + $0xb0] sm:$0xff]
        %v2751 = vld [vmem:[#allocation25 + $0xb8] sm:$0xff]
        %v2752 = vld [vmem:[#allocation25 + $0xc0] sm:$0xff]
        %v2753 = vld [vmem:[#allocation25 + $0xc8] sm:$0xff]
        %v2754 = vld [vmem:[#allocation25 + $0xd0] sm:$0xff]
        %v2755 = vld [vmem:[#allocation25 + $0xd8] sm:$0xff]
        %v2756 = vld [vmem:[#allocation25 + $0xe0] sm:$0xff]
        %v2757 = vld [vmem:[#allocation25 + $0xe8] sm:$0xff]
        %v2758 = vld [vmem:[#allocation25 + $0xf0] sm:$0xff]
        %v2759 = vld [vmem:[#allocation25 + $0xf8] sm:$0xff]
        %v2760 = vld [vmem:[#allocation25 + $0x100] sm:$0xff]
        %v2761 = vld [vmem:[#allocation25 + $0x108] sm:$0xff]
        %v2762 = vld [vmem:[#allocation25 + $0x110] sm:$0xff]
        %v2763 = vld [vmem:[#allocation25 + $0x118] sm:$0xff]
        %v2764 = vld [vmem:[#allocation25 + $0x120] sm:$0xff]
        %v2765 = vld [vmem:[#allocation25 + $0x128] sm:$0xff]
        %v2766 = vld [vmem:[#allocation25 + $0x130] sm:$0xff]
        %v2767 = vld [vmem:[#allocation25 + $0x138] sm:$0xff]
        %v2768 = vld [vmem:[#allocation25 + $0x140] sm:$0xff]
        %v2769 = vld [vmem:[#allocation25 + $0x148] sm:$0xff]
        %v2770 = vld [vmem:[#allocation25 + $0x150] sm:$0xff]
        %v2771 = vld [vmem:[#allocation25 + $0x158] sm:$0xff]
        %v2772 = vld [vmem:[#allocation25 + $0x160] sm:$0xff]
        %v2773 = vld [vmem:[#allocation25 + $0x168] sm:$0xff]
        %v2774 = vld [vmem:[#allocation25 + $0x170] sm:$0xff]
        %v2775 = vld [vmem:[#allocation25 + $0x178] sm:$0xff]
        %v2776 = vld [vmem:[#allocation25 + $0x180] sm:$0xff]
        %v2777 = vld [vmem:[#allocation25 + $0x188] sm:$0xff]
        %v2778 = vld [vmem:[#allocation25 + $0x190] sm:$0xff]
        %v2779 = vld [vmem:[#allocation25 + $0x198] sm:$0xff]
        %v2780 = vld [vmem:[#allocation25 + $0x1a0] sm:$0xff]
        %v2781 = vld [vmem:[#allocation25 + $0x1a8] sm:$0xff]
        %v2782 = vld [vmem:[#allocation25 + $0x1b0] sm:$0xff]
        %v2783 = vld [vmem:[#allocation25 + $0x1b8] sm:$0xff]
        %v2784 = vld [vmem:[#allocation25 + $0x1c0] sm:$0xff]
        %v2785 = vld [vmem:[#allocation25 + $0x1c8] sm:$0xff]
        %v2786 = vld [vmem:[#allocation25 + $0x1d0] sm:$0xff]
        %v2787 = vld [vmem:[#allocation25 + $0x1d8] sm:$0xff]
        %v2788 = vld [vmem:[#allocation25 + $0x1e0] sm:$0xff]
        %v2789 = vld [vmem:[#allocation25 + $0x1e8] sm:$0xff]
        %v2790 = vld [vmem:[#allocation25 + $0x1f0] sm:$0xff]
        %v2791 = vld [vmem:[#allocation25 + $0x1f8] sm:$0xff]
        %v2792 = vld [vmem:[#allocation26] sm:$0x3]
        %v2794 = vperm.slane %v2792, 0
        %v2795 = vperm.slane %v2792, 1
        %2798 = vmatpush.msra.mxu0 %v2758
        %2799 = vmatpush.msra.mxu0 %v2756
        %2800 = vmatpush.msra.mxu0 %v2754
        %2801 = vmatpush.msra.mxu0 %v2752
        %2802 = vmatpush.msra.mxu0 %v2750
        %2803 = vmatpush.msra.mxu0 %v2748
        %2804 = vmatpush.msra.mxu0 %v2746
        %2805 = vmatpush.msra.mxu0 %v2744
        %2806 = vmatpush.msra.mxu0 %v2742
        %2807 = vmatpush.msra.mxu0 %v2740
        %2808 = vmatpush.msra.mxu0 %v2738
        %2809 = vmatpush.msra.mxu0 %v2736
        %2810 = vmatpush.msra.mxu0 %v2734
        %2811 = vmatpush.msra.mxu0 %v2732
        %2812 = vmatpush.msra.mxu0 %v2730
        %2813 = vmatpush.msra.mxu0 %v2728
        %2814 = vmatmul.f32.gmra.mxu0 %v2694
        %v2815 = vpop.f32.mrf.mxu0
        %v2816 = vadd.f32 %v2794, %v2815
        %2817 = vmatmul.f32.gmra.mxu0 %v2697
        %v2818 = vpop.f32.mrf.mxu0
        %v2819 = vadd.f32 %v2794, %v2818
        %2820 = vdwg.mxu0
        %2821 = vmatpush.msra.mxu0 %v2790
        %2822 = vmatpush.msra.mxu0 %v2788
        %2823 = vmatpush.msra.mxu0 %v2786
        %2824 = vmatpush.msra.mxu0 %v2784
        %2825 = vmatpush.msra.mxu0 %v2782
        %2826 = vmatpush.msra.mxu0 %v2780
        %2827 = vmatpush.msra.mxu0 %v2778
        %2828 = vmatpush.msra.mxu0 %v2776
        %2829 = vmatpush.msra.mxu0 %v2774
        %2830 = vmatpush.msra.mxu0 %v2772
        %2831 = vmatpush.msra.mxu0 %v2770
        %2832 = vmatpush.msra.mxu0 %v2768
        %2833 = vmatpush.msra.mxu0 %v2766
        %2834 = vmatpush.msra.mxu0 %v2764
        %2835 = vmatpush.msra.mxu0 %v2762
        %2836 = vmatpush.msra.mxu0 %v2760
        %2837 = vmatmul.f32.gmra.mxu0 %v2723
        %v2838 = vpop.f32.mrf.mxu0
        %v2839 = vadd.f32 %v2816, %v2838
        %2840 = vmatmul.f32.gmra.mxu0 %v2726
        %v2841 = vpop.f32.mrf.mxu0
        %v2842 = vadd.f32 %v2819, %v2841
        %2843 = vdwg.mxu0
        %2844 = vmatpush.msra.mxu0 %v2759
        %2845 = vmatpush.msra.mxu0 %v2757
        %2846 = vmatpush.msra.mxu0 %v2755
        %2847 = vmatpush.msra.mxu0 %v2753
        %2848 = vmatpush.msra.mxu0 %v2751
        %2849 = vmatpush.msra.mxu0 %v2749
        %2850 = vmatpush.msra.mxu0 %v2747
        %2851 = vmatpush.msra.mxu0 %v2745
        %2852 = vmatpush.msra.mxu0 %v2743
        %2853 = vmatpush.msra.mxu0 %v2741
        %2854 = vmatpush.msra.mxu0 %v2739
        %2855 = vmatpush.msra.mxu0 %v2737
        %2856 = vmatpush.msra.mxu0 %v2735
        %2857 = vmatpush.msra.mxu0 %v2733
        %2858 = vmatpush.msra.mxu0 %v2731
        %2859 = vmatpush.msra.mxu0 %v2729
        %2860 = vmatmul.f32.gmra.mxu0 %v2694
        %v2861 = vpop.f32.mrf.mxu0
        %v2862 = vadd.f32 %v2795, %v2861
        %2863 = vmatmul.f32.gmra.mxu0 %v2697
        %v2864 = vpop.f32.mrf.mxu0
        %v2865 = vadd.f32 %v2795, %v2864
        %2866 = vdwg.mxu0
        %2867 = vmatpush.msra.mxu0 %v2791
        %2868 = vmatpush.msra.mxu0 %v2789
        %2869 = vmatpush.msra.mxu0 %v2787
        %2870 = vmatpush.msra.mxu0 %v2785
        %2871 = vmatpush.msra.mxu0 %v2783
        %2872 = vmatpush.msra.mxu0 %v2781
        %2873 = vmatpush.msra.mxu0 %v2779
        %2874 = vmatpush.msra.mxu0 %v2777
        %2875 = vmatpush.msra.mxu0 %v2775
        %2876 = vmatpush.msra.mxu0 %v2773
        %2877 = vmatpush.msra.mxu0 %v2771
        %2878 = vmatpush.msra.mxu0 %v2769
        %2879 = vmatpush.msra.mxu0 %v2767
        %2880 = vmatpush.msra.mxu0 %v2765
        %2881 = vmatpush.msra.mxu0 %v2763
        %2882 = vmatpush.msra.mxu0 %v2761
        %2883 = vmatmul.f32.gmra.mxu0 %v2723
        %v2884 = vpop.f32.mrf.mxu0
        %v2885 = vadd.f32 %v2862, %v2884
        %2886 = vmatmul.f32.gmra.mxu0 %v2726
        %v2887 = vpop.f32.mrf.mxu0
        %v2888 = vadd.f32 %v2865, %v2887
        %2889 = vdwg.mxu0
        %v2890 = vadd.f32 %v1994, %v2839
        %v2891 = vadd.f32 %v1995, %v2885
        %v2892 = vadd.f32 %v1996, %v2842
        %v2893 = vadd.f32 %v1997, %v2888
        %2894 = vst [vmem:[%s1095] sm:$0xff] %v2890
        %2895 = vst [vmem:[%s1095 + $0x8] sm:$0xff] %v2891
        %2896 = vst [vmem:[%s1095 + $0x10] sm:$0xff] %v2892
        %2897 = vst [vmem:[%s1095 + $0x18] sm:$0xff] %v2893
        loop: start=0, step=1, limit=2
        $region189: #{tpu_custom_call.1} parent=115 // loop_pre_header
          _
        $region190: #{tpu_custom_call.1} parent=115 // loop_header
          %s2899 = sphi 0, %s2903
          %p2900 = scmp.ge.s32.totalorder %s2899, 2
        $region191: #{tpu_custom_call.1} parent=115 // loop_header_branch
          %2902 = sbr.rel (%p2900) target = $region195
        $region192: #{tpu_custom_call.1} parent=115 // loop_body
          %s2904 = smul.u32 %s2899, 8
          %s2905 = sshra.s32 %s2904, 3
          %s2906 = sand.u32 %s2904, 7
          %s2907 = smul.u32 %s2905, 2
          %s2908 = smul.addr %s2907, 8
          %s2909 = scalar_lea.vmem %s1095, %s2908 [#allocation31]
          %v2910 = vld [vmem:[%s2909] sm:$0xff]
          %v2911 = vld [vmem:[%s2909 + $0x8] sm:$0xff]
          %v2912 = vadd.f32 %v2910, %v2911
          %2913 = vadd.xlane.f32.xlu0 %v2912
          %v2914 = vpop.xlane.xlu0 %2913
          %v2915 = vmul.f32 %v2914, %v1122
          %v2916 = vsub.f32 %v2910, %v2915
          %v2917 = vsub.f32 %v2911, %v2915
          %v2918 = vmul.f32 %v2916, %v2916
          %v2919 = vmul.f32 %v2917, %v2917
          %v2920 = vadd.f32 %v2918, %v2919
          %2921 = vadd.xlane.f32.xlu0 %v2920
          %v2922 = vpop.xlane.xlu0 %2921
          %v2923 = vmul.f32 %v2922, 0.003921569
          %v2924 = vrsqrt.pop %v2923
          %v2925 = vmul.f32 %v2924, %v2923
          %v2926 = vmul.f32 %v2925, %v2924
          %v2927 = vmul.f32 0.5, %v2926
          %v2928 = vsub.f32 1.5, %v2927
          %v2929 = vmul.f32 %v2924, %v2928
          %v2930 = vmul.f32 %v2923, %v2929
          %vm2931 = vcmp.eq.f32.partialorder %v2923, inf
          %v2932 = vsel %vm2931, %v2923, %v2930
          %vm2933 = vcmp.eq.f32.partialorder %v2923, 0.0
          %v2934 = vand.u32 %v2923, 2147483648
          %v2935 = vsel %vm2933, %v2934, %v2932
          %v2936 = vadd.f32 %v2935, 1e-06
          %v2937 = vrcp.pop %v2936
          %v2938 = vld [vmem:[#allocation16] sm:$0x3]
          %v2939 = vmul.f32 %v2916, %v2937
          %v2940 = vmul.f32 %v2917, %v2937
          %v2942 = vperm.slane %v2938, 0
          %v2943 = vperm.slane %v2938, 1
          %v2946 = vmul.f32 %v2942, %v2939
          %v2947 = vmul.f32 %v2943, %v2940
          %v2948 = vld [vmem:[#allocation17] sm:$0x3]
          %v2950 = vperm.slane %v2948, 0
          %v2951 = vperm.slane %v2948, 1
          %v2954 = vadd.f32 %v2946, %v2950
          %v2955 = vadd.f32 %v2947, %v2951
          %v2956 = vld [vmem:[#allocation28] sm:$0xff]
          %v2957 = vld [vmem:[#allocation28 + $0x8] sm:$0xff]
          %v2958 = vld [vmem:[#allocation28 + $0x10] sm:$0xff]
          %v2959 = vld [vmem:[#allocation28 + $0x18] sm:$0xff]
          %v2960 = vld [vmem:[#allocation28 + $0x20] sm:$0xff]
          %v2961 = vld [vmem:[#allocation28 + $0x28] sm:$0xff]
          %v2962 = vld [vmem:[#allocation28 + $0x30] sm:$0xff]
          %v2963 = vld [vmem:[#allocation28 + $0x38] sm:$0xff]
          %v2964 = vld [vmem:[#allocation28 + $0x40] sm:$0xff]
          %v2965 = vld [vmem:[#allocation28 + $0x48] sm:$0xff]
          %v2966 = vld [vmem:[#allocation28 + $0x50] sm:$0xff]
          %v2967 = vld [vmem:[#allocation28 + $0x58] sm:$0xff]
          %v2968 = vld [vmem:[#allocation28 + $0x60] sm:$0xff]
          %v2969 = vld [vmem:[#allocation28 + $0x68] sm:$0xff]
          %v2970 = vld [vmem:[#allocation28 + $0x70] sm:$0xff]
          %v2971 = vld [vmem:[#allocation28 + $0x78] sm:$0xff]
          %v2972 = vld [vmem:[#allocation28 + $0x80] sm:$0xff]
          %v2973 = vld [vmem:[#allocation28 + $0x88] sm:$0xff]
          %v2974 = vld [vmem:[#allocation28 + $0x90] sm:$0xff]
          %v2975 = vld [vmem:[#allocation28 + $0x98] sm:$0xff]
          %v2976 = vld [vmem:[#allocation28 + $0xa0] sm:$0xff]
          %v2977 = vld [vmem:[#allocation28 + $0xa8] sm:$0xff]
          %v2978 = vld [vmem:[#allocation28 + $0xb0] sm:$0xff]
          %v2979 = vld [vmem:[#allocation28 + $0xb8] sm:$0xff]
          %v2980 = vld [vmem:[#allocation28 + $0xc0] sm:$0xff]
          %v2981 = vld [vmem:[#allocation28 + $0xc8] sm:$0xff]
          %v2982 = vld [vmem:[#allocation28 + $0xd0] sm:$0xff]
          %v2983 = vld [vmem:[#allocation28 + $0xd8] sm:$0xff]
          %v2984 = vld [vmem:[#allocation28 + $0xe0] sm:$0xff]
          %v2985 = vld [vmem:[#allocation28 + $0xe8] sm:$0xff]
          %v2986 = vld [vmem:[#allocation28 + $0xf0] sm:$0xff]
          %v2987 = vld [vmem:[#allocation28 + $0xf8] sm:$0xff]
          %v2988 = vld [vmem:[#allocation28 + $0x100] sm:$0xff]
          %v2989 = vld [vmem:[#allocation28 + $0x108] sm:$0xff]
          %v2990 = vld [vmem:[#allocation28 + $0x110] sm:$0xff]
          %v2991 = vld [vmem:[#allocation28 + $0x118] sm:$0xff]
          %v2992 = vld [vmem:[#allocation28 + $0x120] sm:$0xff]
          %v2993 = vld [vmem:[#allocation28 + $0x128] sm:$0xff]
          %v2994 = vld [vmem:[#allocation28 + $0x130] sm:$0xff]
          %v2995 = vld [vmem:[#allocation28 + $0x138] sm:$0xff]
          %v2996 = vld [vmem:[#allocation28 + $0x140] sm:$0xff]
          %v2997 = vld [vmem:[#allocation28 + $0x148] sm:$0xff]
          %v2998 = vld [vmem:[#allocation28 + $0x150] sm:$0xff]
          %v2999 = vld [vmem:[#allocation28 + $0x158] sm:$0xff]
          %v3000 = vld [vmem:[#allocation28 + $0x160] sm:$0xff]
          %v3001 = vld [vmem:[#allocation28 + $0x168] sm:$0xff]
          %v3002 = vld [vmem:[#allocation28 + $0x170] sm:$0xff]
          %v3003 = vld [vmem:[#allocation28 + $0x178] sm:$0xff]
          %v3004 = vld [vmem:[#allocation28 + $0x180] sm:$0xff]
          %v3005 = vld [vmem:[#allocation28 + $0x188] sm:$0xff]
          %v3006 = vld [vmem:[#allocation28 + $0x190] sm:$0xff]
          %v3007 = vld [vmem:[#allocation28 + $0x198] sm:$0xff]
          %v3008 = vld [vmem:[#allocation28 + $0x1a0] sm:$0xff]
          %v3009 = vld [vmem:[#allocation28 + $0x1a8] sm:$0xff]
          %v3010 = vld [vmem:[#allocation28 + $0x1b0] sm:$0xff]
          %v3011 = vld [vmem:[#allocation28 + $0x1b8] sm:$0xff]
          %v3012 = vld [vmem:[#allocation28 + $0x1c0] sm:$0xff]
          %v3013 = vld [vmem:[#allocation28 + $0x1c8] sm:$0xff]
          %v3014 = vld [vmem:[#allocation28 + $0x1d0] sm:$0xff]
          %v3015 = vld [vmem:[#allocation28 + $0x1d8] sm:$0xff]
          %v3016 = vld [vmem:[#allocation28 + $0x1e0] sm:$0xff]
          %v3017 = vld [vmem:[#allocation28 + $0x1e8] sm:$0xff]
          %v3018 = vld [vmem:[#allocation28 + $0x1f0] sm:$0xff]
          %v3019 = vld [vmem:[#allocation28 + $0x1f8] sm:$0xff]
          %v3020 = vld [vmem:[#allocation28 + $0x200] sm:$0xff]
          %v3021 = vld [vmem:[#allocation28 + $0x208] sm:$0xff]
          %v3022 = vld [vmem:[#allocation28 + $0x210] sm:$0xff]
          %v3023 = vld [vmem:[#allocation28 + $0x218] sm:$0xff]
          %v3024 = vld [vmem:[#allocation28 + $0x220] sm:$0xff]
          %v3025 = vld [vmem:[#allocation28 + $0x228] sm:$0xff]
          %v3026 = vld [vmem:[#allocation28 + $0x230] sm:$0xff]
          %v3027 = vld [vmem:[#allocation28 + $0x238] sm:$0xff]
          %v3028 = vld [vmem:[#allocation28 + $0x240] sm:$0xff]
          %v3029 = vld [vmem:[#allocation28 + $0x248] sm:$0xff]
          %v3030 = vld [vmem:[#allocation28 + $0x250] sm:$0xff]
          %v3031 = vld [vmem:[#allocation28 + $0x258] sm:$0xff]
          %v3032 = vld [vmem:[#allocation28 + $0x260] sm:$0xff]
          %v3033 = vld [vmem:[#allocation28 + $0x268] sm:$0xff]
          %v3034 = vld [vmem:[#allocation28 + $0x270] sm:$0xff]
          %v3035 = vld [vmem:[#allocation28 + $0x278] sm:$0xff]
          %v3036 = vld [vmem:[#allocation28 + $0x280] sm:$0xff]
          %v3037 = vld [vmem:[#allocation28 + $0x288] sm:$0xff]
          %v3038 = vld [vmem:[#allocation28 + $0x290] sm:$0xff]
          %v3039 = vld [vmem:[#allocation28 + $0x298] sm:$0xff]
          %v3040 = vld [vmem:[#allocation28 + $0x2a0] sm:$0xff]
          %v3041 = vld [vmem:[#allocation28 + $0x2a8] sm:$0xff]
          %v3042 = vld [vmem:[#allocation28 + $0x2b0] sm:$0xff]
          %v3043 = vld [vmem:[#allocation28 + $0x2b8] sm:$0xff]
          %v3044 = vld [vmem:[#allocation28 + $0x2c0] sm:$0xff]
          %v3045 = vld [vmem:[#allocation28 + $0x2c8] sm:$0xff]
          %v3046 = vld [vmem:[#allocation28 + $0x2d0] sm:$0xff]
          %v3047 = vld [vmem:[#allocation28 + $0x2d8] sm:$0xff]
          %v3048 = vld [vmem:[#allocation28 + $0x2e0] sm:$0xff]
          %v3049 = vld [vmem:[#allocation28 + $0x2e8] sm:$0xff]
          %v3050 = vld [vmem:[#allocation28 + $0x2f0] sm:$0xff]
          %v3051 = vld [vmem:[#allocation28 + $0x2f8] sm:$0xff]
          %v3052 = vld [vmem:[#allocation28 + $0x300] sm:$0xff]
          %v3053 = vld [vmem:[#allocation28 + $0x308] sm:$0xff]
          %v3054 = vld [vmem:[#allocation28 + $0x310] sm:$0xff]
          %v3055 = vld [vmem:[#allocation28 + $0x318] sm:$0xff]
          %v3056 = vld [vmem:[#allocation28 + $0x320] sm:$0xff]
          %v3057 = vld [vmem:[#allocation28 + $0x328] sm:$0xff]
          %v3058 = vld [vmem:[#allocation28 + $0x330] sm:$0xff]
          %v3059 = vld [vmem:[#allocation28 + $0x338] sm:$0xff]
          %v3060 = vld [vmem:[#allocation28 + $0x340] sm:$0xff]
          %v3061 = vld [vmem:[#allocation28 + $0x348] sm:$0xff]
          %v3062 = vld [vmem:[#allocation28 + $0x350] sm:$0xff]
          %v3063 = vld [vmem:[#allocation28 + $0x358] sm:$0xff]
          %v3064 = vld [vmem:[#allocation28 + $0x360] sm:$0xff]
          %v3065 = vld [vmem:[#allocation28 + $0x368] sm:$0xff]
          %v3066 = vld [vmem:[#allocation28 + $0x370] sm:$0xff]
          %v3067 = vld [vmem:[#allocation28 + $0x378] sm:$0xff]
          %v3068 = vld [vmem:[#allocation28 + $0x380] sm:$0xff]
          %v3069 = vld [vmem:[#allocation28 + $0x388] sm:$0xff]
          %v3070 = vld [vmem:[#allocation28 + $0x390] sm:$0xff]
          %v3071 = vld [vmem:[#allocation28 + $0x398] sm:$0xff]
          %v3072 = vld [vmem:[#allocation28 + $0x3a0] sm:$0xff]
          %v3073 = vld [vmem:[#allocation28 + $0x3a8] sm:$0xff]
          %v3074 = vld [vmem:[#allocation28 + $0x3b0] sm:$0xff]
          %v3075 = vld [vmem:[#allocation28 + $0x3b8] sm:$0xff]
          %v3076 = vld [vmem:[#allocation28 + $0x3c0] sm:$0xff]
          %v3077 = vld [vmem:[#allocation28 + $0x3c8] sm:$0xff]
          %v3078 = vld [vmem:[#allocation28 + $0x3d0] sm:$0xff]
          %v3079 = vld [vmem:[#allocation28 + $0x3d8] sm:$0xff]
          %v3080 = vld [vmem:[#allocation28 + $0x3e0] sm:$0xff]
          %v3081 = vld [vmem:[#allocation28 + $0x3e8] sm:$0xff]
          %v3082 = vld [vmem:[#allocation28 + $0x3f0] sm:$0xff]
          %v3083 = vld [vmem:[#allocation28 + $0x3f8] sm:$0xff]
          %v3084 = vld [vmem:[%s19] sm:$0xf]
          %v3086 = vperm.slane %v3084, 0
          %v3087 = vperm.slane %v3084, 1
          %v3088 = vperm.slane %v3084, 2
          %v3089 = vperm.slane %v3084, 3
          %3094 = vmatpush.msra.mxu0 %v3016
          %3095 = vmatpush.msra.mxu0 %v3012
          %3096 = vmatpush.msra.mxu0 %v3008
          %3097 = vmatpush.msra.mxu0 %v3004
          %3098 = vmatpush.msra.mxu0 %v3000
          %3099 = vmatpush.msra.mxu0 %v2996
          %3100 = vmatpush.msra.mxu0 %v2992
          %3101 = vmatpush.msra.mxu0 %v2988
          %3102 = vmatpush.msra.mxu0 %v2984
          %3103 = vmatpush.msra.mxu0 %v2980
          %3104 = vmatpush.msra.mxu0 %v2976
          %3105 = vmatpush.msra.mxu0 %v2972
          %3106 = vmatpush.msra.mxu0 %v2968
          %3107 = vmatpush.msra.mxu0 %v2964
          %3108 = vmatpush.msra.mxu0 %v2960
          %3109 = vmatpush.msra.mxu0 %v2956
          %3110 = vmatmul.f32.gmra.mxu0 %v2954
          %v3111 = vpop.f32.mrf.mxu0
          %v3112 = vadd.f32 %v3086, %v3111
          %3113 = vdwg.mxu0
          %3114 = vmatpush.msra.mxu0 %v3080
          %3115 = vmatpush.msra.mxu0 %v3076
          %3116 = vmatpush.msra.mxu0 %v3072
          %3117 = vmatpush.msra.mxu0 %v3068
          %3118 = vmatpush.msra.mxu0 %v3064
          %3119 = vmatpush.msra.mxu0 %v3060
          %3120 = vmatpush.msra.mxu0 %v3056
          %3121 = vmatpush.msra.mxu0 %v3052
          %3122 = vmatpush.msra.mxu0 %v3048
          %3123 = vmatpush.msra.mxu0 %v3044
          %3124 = vmatpush.msra.mxu0 %v3040
          %3125 = vmatpush.msra.mxu0 %v3036
          %3126 = vmatpush.msra.mxu0 %v3032
          %3127 = vmatpush.msra.mxu0 %v3028
          %3128 = vmatpush.msra.mxu0 %v3024
          %3129 = vmatpush.msra.mxu0 %v3020
          %3130 = vmatmul.f32.gmra.mxu0 %v2955
          %v3131 = vpop.f32.mrf.mxu0
          %v3132 = vadd.f32 %v3112, %v3131
          %3133 = vdwg.mxu0
          %3134 = vmatpush.msra.mxu0 %v3017
          %3135 = vmatpush.msra.mxu0 %v3013
          %3136 = vmatpush.msra.mxu0 %v3009
          %3137 = vmatpush.msra.mxu0 %v3005
          %3138 = vmatpush.msra.mxu0 %v3001
          %3139 = vmatpush.msra.mxu0 %v2997
          %3140 = vmatpush.msra.mxu0 %v2993
          %3141 = vmatpush.msra.mxu0 %v2989
          %3142 = vmatpush.msra.mxu0 %v2985
          %3143 = vmatpush.msra.mxu0 %v2981
          %3144 = vmatpush.msra.mxu0 %v2977
          %3145 = vmatpush.msra.mxu0 %v2973
          %3146 = vmatpush.msra.mxu0 %v2969
          %3147 = vmatpush.msra.mxu0 %v2965
          %3148 = vmatpush.msra.mxu0 %v2961
          %3149 = vmatpush.msra.mxu0 %v2957
          %3150 = vmatmul.f32.gmra.mxu0 %v2954
          %v3151 = vpop.f32.mrf.mxu0
          %v3152 = vadd.f32 %v3087, %v3151
          %3153 = vdwg.mxu0
          %3154 = vmatpush.msra.mxu0 %v3081
          %3155 = vmatpush.msra.mxu0 %v3077
          %3156 = vmatpush.msra.mxu0 %v3073
          %3157 = vmatpush.msra.mxu0 %v3069
          %3158 = vmatpush.msra.mxu0 %v3065
          %3159 = vmatpush.msra.mxu0 %v3061
          %3160 = vmatpush.msra.mxu0 %v3057
          %3161 = vmatpush.msra.mxu0 %v3053
          %3162 = vmatpush.msra.mxu0 %v3049
          %3163 = vmatpush.msra.mxu0 %v3045
          %3164 = vmatpush.msra.mxu0 %v3041
          %3165 = vmatpush.msra.mxu0 %v3037
          %3166 = vmatpush.msra.mxu0 %v3033
          %3167 = vmatpush.msra.mxu0 %v3029
          %3168 = vmatpush.msra.mxu0 %v3025
          %3169 = vmatpush.msra.mxu0 %v3021
          %3170 = vmatmul.f32.gmra.mxu0 %v2955
          %v3171 = vpop.f32.mrf.mxu0
          %v3172 = vadd.f32 %v3152, %v3171
          %3173 = vdwg.mxu0
          %3174 = vmatpush.msra.mxu0 %v3018
          %3175 = vmatpush.msra.mxu0 %v3014
          %3176 = vmatpush.msra.mxu0 %v3010
          %3177 = vmatpush.msra.mxu0 %v3006
          %3178 = vmatpush.msra.mxu0 %v3002
          %3179 = vmatpush.msra.mxu0 %v2998
          %3180 = vmatpush.msra.mxu0 %v2994
          %3181 = vmatpush.msra.mxu0 %v2990
          %3182 = vmatpush.msra.mxu0 %v2986
          %3183 = vmatpush.msra.mxu0 %v2982
          %3184 = vmatpush.msra.mxu0 %v2978
          %3185 = vmatpush.msra.mxu0 %v2974
          %3186 = vmatpush.msra.mxu0 %v2970
          %3187 = vmatpush.msra.mxu0 %v2966
          %3188 = vmatpush.msra.mxu0 %v2962
          %3189 = vmatpush.msra.mxu0 %v2958
          %3190 = vmatmul.f32.gmra.mxu0 %v2954
          %v3191 = vpop.f32.mrf.mxu0
          %v3192 = vadd.f32 %v3088, %v3191
          %3193 = vdwg.mxu0
          %3194 = vmatpush.msra.mxu0 %v3082
          %3195 = vmatpush.msra.mxu0 %v3078
          %3196 = vmatpush.msra.mxu0 %v3074
          %3197 = vmatpush.msra.mxu0 %v3070
          %3198 = vmatpush.msra.mxu0 %v3066
          %3199 = vmatpush.msra.mxu0 %v3062
          %3200 = vmatpush.msra.mxu0 %v3058
          %3201 = vmatpush.msra.mxu0 %v3054
          %3202 = vmatpush.msra.mxu0 %v3050
          %3203 = vmatpush.msra.mxu0 %v3046
          %3204 = vmatpush.msra.mxu0 %v3042
          %3205 = vmatpush.msra.mxu0 %v3038
          %3206 = vmatpush.msra.mxu0 %v3034
          %3207 = vmatpush.msra.mxu0 %v3030
          %3208 = vmatpush.msra.mxu0 %v3026
          %3209 = vmatpush.msra.mxu0 %v3022
          %3210 = vmatmul.f32.gmra.mxu0 %v2955
          %v3211 = vpop.f32.mrf.mxu0
          %v3212 = vadd.f32 %v3192, %v3211
          %3213 = vdwg.mxu0
          %3214 = vmatpush.msra.mxu0 %v3019
          %3215 = vmatpush.msra.mxu0 %v3015
          %3216 = vmatpush.msra.mxu0 %v3011
          %3217 = vmatpush.msra.mxu0 %v3007
          %3218 = vmatpush.msra.mxu0 %v3003
          %3219 = vmatpush.msra.mxu0 %v2999
          %3220 = vmatpush.msra.mxu0 %v2995
          %3221 = vmatpush.msra.mxu0 %v2991
          %3222 = vmatpush.msra.mxu0 %v2987
          %3223 = vmatpush.msra.mxu0 %v2983
          %3224 = vmatpush.msra.mxu0 %v2979
          %3225 = vmatpush.msra.mxu0 %v2975
          %3226 = vmatpush.msra.mxu0 %v2971
          %3227 = vmatpush.msra.mxu0 %v2967
          %3228 = vmatpush.msra.mxu0 %v2963
          %3229 = vmatpush.msra.mxu0 %v2959
          %3230 = vmatmul.f32.gmra.mxu0 %v2954
          %v3231 = vpop.f32.mrf.mxu0
          %v3232 = vadd.f32 %v3089, %v3231
          %3233 = vdwg.mxu0
          %3234 = vmatpush.msra.mxu0 %v3083
          %3235 = vmatpush.msra.mxu0 %v3079
          %3236 = vmatpush.msra.mxu0 %v3075
          %3237 = vmatpush.msra.mxu0 %v3071
          %3238 = vmatpush.msra.mxu0 %v3067
          %3239 = vmatpush.msra.mxu0 %v3063
          %3240 = vmatpush.msra.mxu0 %v3059
          %3241 = vmatpush.msra.mxu0 %v3055
          %3242 = vmatpush.msra.mxu0 %v3051
          %3243 = vmatpush.msra.mxu0 %v3047
          %3244 = vmatpush.msra.mxu0 %v3043
          %3245 = vmatpush.msra.mxu0 %v3039
          %3246 = vmatpush.msra.mxu0 %v3035
          %3247 = vmatpush.msra.mxu0 %v3031
          %3248 = vmatpush.msra.mxu0 %v3027
          %3249 = vmatpush.msra.mxu0 %v3023
          %3250 = vmatmul.f32.gmra.mxu0 %v2955
          %v3251 = vpop.f32.mrf.mxu0
          %v3252 = vadd.f32 %v3232, %v3251
          %3253 = vdwg.mxu0
          %v3254 = vmax.f32 %v3132, 0.0
          %v3255 = vmax.f32 %v3172, 0.0
          %v3256 = vmax.f32 %v3212, 0.0
          %v3257 = vmax.f32 %v3252, 0.0
          %v3258 = vld [vmem:[#allocation29] sm:$0xff]
          %v3259 = vld [vmem:[#allocation29 + $0x8] sm:$0xff]
          %v3260 = vld [vmem:[#allocation29 + $0x10] sm:$0xff]
          %v3261 = vld [vmem:[#allocation29 + $0x18] sm:$0xff]
          %v3262 = vld [vmem:[#allocation29 + $0x20] sm:$0xff]
          %v3263 = vld [vmem:[#allocation29 + $0x28] sm:$0xff]
          %v3264 = vld [vmem:[#allocation29 + $0x30] sm:$0xff]
          %v3265 = vld [vmem:[#allocation29 + $0x38] sm:$0xff]
          %v3266 = vld [vmem:[#allocation29 + $0x40] sm:$0xff]
          %v3267 = vld [vmem:[#allocation29 + $0x48] sm:$0xff]
          %v3268 = vld [vmem:[#allocation29 + $0x50] sm:$0xff]
          %v3269 = vld [vmem:[#allocation29 + $0x58] sm:$0xff]
          %v3270 = vld [vmem:[#allocation29 + $0x60] sm:$0xff]
          %v3271 = vld [vmem:[#allocation29 + $0x68] sm:$0xff]
          %v3272 = vld [vmem:[#allocation29 + $0x70] sm:$0xff]
          %v3273 = vld [vmem:[#allocation29 + $0x78] sm:$0xff]
          %v3274 = vld [vmem:[#allocation29 + $0x80] sm:$0xff]
          %v3275 = vld [vmem:[#allocation29 + $0x88] sm:$0xff]
          %v3276 = vld [vmem:[#allocation29 + $0x90] sm:$0xff]
          %v3277 = vld [vmem:[#allocation29 + $0x98] sm:$0xff]
          %v3278 = vld [vmem:[#allocation29 + $0xa0] sm:$0xff]
          %v3279 = vld [vmem:[#allocation29 + $0xa8] sm:$0xff]
          %v3280 = vld [vmem:[#allocation29 + $0xb0] sm:$0xff]
          %v3281 = vld [vmem:[#allocation29 + $0xb8] sm:$0xff]
          %v3282 = vld [vmem:[#allocation29 + $0xc0] sm:$0xff]
          %v3283 = vld [vmem:[#allocation29 + $0xc8] sm:$0xff]
          %v3284 = vld [vmem:[#allocation29 + $0xd0] sm:$0xff]
          %v3285 = vld [vmem:[#allocation29 + $0xd8] sm:$0xff]
          %v3286 = vld [vmem:[#allocation29 + $0xe0] sm:$0xff]
          %v3287 = vld [vmem:[#allocation29 + $0xe8] sm:$0xff]
          %v3288 = vld [vmem:[#allocation29 + $0xf0] sm:$0xff]
          %v3289 = vld [vmem:[#allocation29 + $0xf8] sm:$0xff]
          %v3290 = vld [vmem:[#allocation29 + $0x100] sm:$0xff]
          %v3291 = vld [vmem:[#allocation29 + $0x108] sm:$0xff]
          %v3292 = vld [vmem:[#allocation29 + $0x110] sm:$0xff]
          %v3293 = vld [vmem:[#allocation29 + $0x118] sm:$0xff]
          %v3294 = vld [vmem:[#allocation29 + $0x120] sm:$0xff]
          %v3295 = vld [vmem:[#allocation29 + $0x128] sm:$0xff]
          %v3296 = vld [vmem:[#allocation29 + $0x130] sm:$0xff]
          %v3297 = vld [vmem:[#allocation29 + $0x138] sm:$0xff]
          %v3298 = vld [vmem:[#allocation29 + $0x140] sm:$0xff]
          %v3299 = vld [vmem:[#allocation29 + $0x148] sm:$0xff]
          %v3300 = vld [vmem:[#allocation29 + $0x150] sm:$0xff]
          %v3301 = vld [vmem:[#allocation29 + $0x158] sm:$0xff]
          %v3302 = vld [vmem:[#allocation29 + $0x160] sm:$0xff]
          %v3303 = vld [vmem:[#allocation29 + $0x168] sm:$0xff]
          %v3304 = vld [vmem:[#allocation29 + $0x170] sm:$0xff]
          %v3305 = vld [vmem:[#allocation29 + $0x178] sm:$0xff]
          %v3306 = vld [vmem:[#allocation29 + $0x180] sm:$0xff]
          %v3307 = vld [vmem:[#allocation29 + $0x188] sm:$0xff]
          %v3308 = vld [vmem:[#allocation29 + $0x190] sm:$0xff]
          %v3309 = vld [vmem:[#allocation29 + $0x198] sm:$0xff]
          %v3310 = vld [vmem:[#allocation29 + $0x1a0] sm:$0xff]
          %v3311 = vld [vmem:[#allocation29 + $0x1a8] sm:$0xff]
          %v3312 = vld [vmem:[#allocation29 + $0x1b0] sm:$0xff]
          %v3313 = vld [vmem:[#allocation29 + $0x1b8] sm:$0xff]
          %v3314 = vld [vmem:[#allocation29 + $0x1c0] sm:$0xff]
          %v3315 = vld [vmem:[#allocation29 + $0x1c8] sm:$0xff]
          %v3316 = vld [vmem:[#allocation29 + $0x1d0] sm:$0xff]
          %v3317 = vld [vmem:[#allocation29 + $0x1d8] sm:$0xff]
          %v3318 = vld [vmem:[#allocation29 + $0x1e0] sm:$0xff]
          %v3319 = vld [vmem:[#allocation29 + $0x1e8] sm:$0xff]
          %v3320 = vld [vmem:[#allocation29 + $0x1f0] sm:$0xff]
          %v3321 = vld [vmem:[#allocation29 + $0x1f8] sm:$0xff]
          %v3322 = vld [vmem:[#allocation29 + $0x200] sm:$0xff]
          %v3323 = vld [vmem:[#allocation29 + $0x208] sm:$0xff]
          %v3324 = vld [vmem:[#allocation29 + $0x210] sm:$0xff]
          %v3325 = vld [vmem:[#allocation29 + $0x218] sm:$0xff]
          %v3326 = vld [vmem:[#allocation29 + $0x220] sm:$0xff]
          %v3327 = vld [vmem:[#allocation29 + $0x228] sm:$0xff]
          %v3328 = vld [vmem:[#allocation29 + $0x230] sm:$0xff]
          %v3329 = vld [vmem:[#allocation29 + $0x238] sm:$0xff]
          %v3330 = vld [vmem:[#allocation29 + $0x240] sm:$0xff]
          %v3331 = vld [vmem:[#allocation29 + $0x248] sm:$0xff]
          %v3332 = vld [vmem:[#allocation29 + $0x250] sm:$0xff]
          %v3333 = vld [vmem:[#allocation29 + $0x258] sm:$0xff]
          %v3334 = vld [vmem:[#allocation29 + $0x260] sm:$0xff]
          %v3335 = vld [vmem:[#allocation29 + $0x268] sm:$0xff]
          %v3336 = vld [vmem:[#allocation29 + $0x270] sm:$0xff]
          %v3337 = vld [vmem:[#allocation29 + $0x278] sm:$0xff]
          %v3338 = vld [vmem:[#allocation29 + $0x280] sm:$0xff]
          %v3339 = vld [vmem:[#allocation29 + $0x288] sm:$0xff]
          %v3340 = vld [vmem:[#allocation29 + $0x290] sm:$0xff]
          %v3341 = vld [vmem:[#allocation29 + $0x298] sm:$0xff]
          %v3342 = vld [vmem:[#allocation29 + $0x2a0] sm:$0xff]
          %v3343 = vld [vmem:[#allocation29 + $0x2a8] sm:$0xff]
          %v3344 = vld [vmem:[#allocation29 + $0x2b0] sm:$0xff]
          %v3345 = vld [vmem:[#allocation29 + $0x2b8] sm:$0xff]
          %v3346 = vld [vmem:[#allocation29 + $0x2c0] sm:$0xff]
          %v3347 = vld [vmem:[#allocation29 + $0x2c8] sm:$0xff]
          %v3348 = vld [vmem:[#allocation29 + $0x2d0] sm:$0xff]
          %v3349 = vld [vmem:[#allocation29 + $0x2d8] sm:$0xff]
          %v3350 = vld [vmem:[#allocation29 + $0x2e0] sm:$0xff]
          %v3351 = vld [vmem:[#allocation29 + $0x2e8] sm:$0xff]
          %v3352 = vld [vmem:[#allocation29 + $0x2f0] sm:$0xff]
          %v3353 = vld [vmem:[#allocation29 + $0x2f8] sm:$0xff]
          %v3354 = vld [vmem:[#allocation29 + $0x300] sm:$0xff]
          %v3355 = vld [vmem:[#allocation29 + $0x308] sm:$0xff]
          %v3356 = vld [vmem:[#allocation29 + $0x310] sm:$0xff]
          %v3357 = vld [vmem:[#allocation29 + $0x318] sm:$0xff]
          %v3358 = vld [vmem:[#allocation29 + $0x320] sm:$0xff]
          %v3359 = vld [vmem:[#allocation29 + $0x328] sm:$0xff]
          %v3360 = vld [vmem:[#allocation29 + $0x330] sm:$0xff]
          %v3361 = vld [vmem:[#allocation29 + $0x338] sm:$0xff]
          %v3362 = vld [vmem:[#allocation29 + $0x340] sm:$0xff]
          %v3363 = vld [vmem:[#allocation29 + $0x348] sm:$0xff]
          %v3364 = vld [vmem:[#allocation29 + $0x350] sm:$0xff]
          %v3365 = vld [vmem:[#allocation29 + $0x358] sm:$0xff]
          %v3366 = vld [vmem:[#allocation29 + $0x360] sm:$0xff]
          %v3367 = vld [vmem:[#allocation29 + $0x368] sm:$0xff]
          %v3368 = vld [vmem:[#allocation29 + $0x370] sm:$0xff]
          %v3369 = vld [vmem:[#allocation29 + $0x378] sm:$0xff]
          %v3370 = vld [vmem:[#allocation29 + $0x380] sm:$0xff]
          %v3371 = vld [vmem:[#allocation29 + $0x388] sm:$0xff]
          %v3372 = vld [vmem:[#allocation29 + $0x390] sm:$0xff]
          %v3373 = vld [vmem:[#allocation29 + $0x398] sm:$0xff]
          %v3374 = vld [vmem:[#allocation29 + $0x3a0] sm:$0xff]
          %v3375 = vld [vmem:[#allocation29 + $0x3a8] sm:$0xff]
          %v3376 = vld [vmem:[#allocation29 + $0x3b0] sm:$0xff]
          %v3377 = vld [vmem:[#allocation29 + $0x3b8] sm:$0xff]
          %v3378 = vld [vmem:[#allocation29 + $0x3c0] sm:$0xff]
          %v3379 = vld [vmem:[#allocation29 + $0x3c8] sm:$0xff]
          %v3380 = vld [vmem:[#allocation29 + $0x3d0] sm:$0xff]
          %v3381 = vld [vmem:[#allocation29 + $0x3d8] sm:$0xff]
          %v3382 = vld [vmem:[#allocation29 + $0x3e0] sm:$0xff]
          %v3383 = vld [vmem:[#allocation29 + $0x3e8] sm:$0xff]
          %v3384 = vld [vmem:[#allocation29 + $0x3f0] sm:$0xff]
          %v3385 = vld [vmem:[#allocation29 + $0x3f8] sm:$0xff]
          %v3386 = vld [vmem:[%s21] sm:$0x3]
          %v3388 = vperm.slane %v3386, 0
          %v3389 = vperm.slane %v3386, 1
          %3392 = vmatpush.msra.mxu0 %v3288
          %3393 = vmatpush.msra.mxu0 %v3286
          %3394 = vmatpush.msra.mxu0 %v3284
          %3395 = vmatpush.msra.mxu0 %v3282
          %3396 = vmatpush.msra.mxu0 %v3280
          %3397 = vmatpush.msra.mxu0 %v3278
          %3398 = vmatpush.msra.mxu0 %v3276
          %3399 = vmatpush.msra.mxu0 %v3274
          %3400 = vmatpush.msra.mxu0 %v3272
          %3401 = vmatpush.msra.mxu0 %v3270
          %3402 = vmatpush.msra.mxu0 %v3268
          %3403 = vmatpush.msra.mxu0 %v3266
          %3404 = vmatpush.msra.mxu0 %v3264
          %3405 = vmatpush.msra.mxu0 %v3262
          %3406 = vmatpush.msra.mxu0 %v3260
          %3407 = vmatpush.msra.mxu0 %v3258
          %3408 = vmatmul.f32.gmra.mxu0 %v3254
          %v3409 = vpop.f32.mrf.mxu0
          %v3410 = vadd.f32 %v3388, %v3409
          %3411 = vdwg.mxu0
          %3412 = vmatpush.msra.mxu0 %v3320
          %3413 = vmatpush.msra.mxu0 %v3318
          %3414 = vmatpush.msra.mxu0 %v3316
          %3415 = vmatpush.msra.mxu0 %v3314
          %3416 = vmatpush.msra.mxu0 %v3312
          %3417 = vmatpush.msra.mxu0 %v3310
          %3418 = vmatpush.msra.mxu0 %v3308
          %3419 = vmatpush.msra.mxu0 %v3306
          %3420 = vmatpush.msra.mxu0 %v3304
          %3421 = vmatpush.msra.mxu0 %v3302
          %3422 = vmatpush.msra.mxu0 %v3300
          %3423 = vmatpush.msra.mxu0 %v3298
          %3424 = vmatpush.msra.mxu0 %v3296
          %3425 = vmatpush.msra.mxu0 %v3294
          %3426 = vmatpush.msra.mxu0 %v3292
          %3427 = vmatpush.msra.mxu0 %v3290
          %3428 = vmatmul.f32.gmra.mxu0 %v3255
          %v3429 = vpop.f32.mrf.mxu0
          %v3430 = vadd.f32 %v3410, %v3429
          %3431 = vdwg.mxu0
          %3432 = vmatpush.msra.mxu0 %v3352
          %3433 = vmatpush.msra.mxu0 %v3350
          %3434 = vmatpush.msra.mxu0 %v3348
          %3435 = vmatpush.msra.mxu0 %v3346
          %3436 = vmatpush.msra.mxu0 %v3344
          %3437 = vmatpush.msra.mxu0 %v3342
          %3438 = vmatpush.msra.mxu0 %v3340
          %3439 = vmatpush.msra.mxu0 %v3338
          %3440 = vmatpush.msra.mxu0 %v3336
          %3441 = vmatpush.msra.mxu0 %v3334
          %3442 = vmatpush.msra.mxu0 %v3332
          %3443 = vmatpush.msra.mxu0 %v3330
          %3444 = vmatpush.msra.mxu0 %v3328
          %3445 = vmatpush.msra.mxu0 %v3326
          %3446 = vmatpush.msra.mxu0 %v3324
          %3447 = vmatpush.msra.mxu0 %v3322
          %3448 = vmatmul.f32.gmra.mxu0 %v3256
          %v3449 = vpop.f32.mrf.mxu0
          %v3450 = vadd.f32 %v3430, %v3449
          %3451 = vdwg.mxu0
          %3452 = vmatpush.msra.mxu0 %v3384
          %3453 = vmatpush.msra.mxu0 %v3382
          %3454 = vmatpush.msra.mxu0 %v3380
          %3455 = vmatpush.msra.mxu0 %v3378
          %3456 = vmatpush.msra.mxu0 %v3376
          %3457 = vmatpush.msra.mxu0 %v3374
          %3458 = vmatpush.msra.mxu0 %v3372
          %3459 = vmatpush.msra.mxu0 %v3370
          %3460 = vmatpush.msra.mxu0 %v3368
          %3461 = vmatpush.msra.mxu0 %v3366
          %3462 = vmatpush.msra.mxu0 %v3364
          %3463 = vmatpush.msra.mxu0 %v3362
          %3464 = vmatpush.msra.mxu0 %v3360
          %3465 = vmatpush.msra.mxu0 %v3358
          %3466 = vmatpush.msra.mxu0 %v3356
          %3467 = vmatpush.msra.mxu0 %v3354
          %3468 = vmatmul.f32.gmra.mxu0 %v3257
          %v3469 = vpop.f32.mrf.mxu0
          %v3470 = vadd.f32 %v3450, %v3469
          %3471 = vdwg.mxu0
          %3472 = vmatpush.msra.mxu0 %v3289
          %3473 = vmatpush.msra.mxu0 %v3287
          %3474 = vmatpush.msra.mxu0 %v3285
          %3475 = vmatpush.msra.mxu0 %v3283
          %3476 = vmatpush.msra.mxu0 %v3281
          %3477 = vmatpush.msra.mxu0 %v3279
          %3478 = vmatpush.msra.mxu0 %v3277
          %3479 = vmatpush.msra.mxu0 %v3275
          %3480 = vmatpush.msra.mxu0 %v3273
          %3481 = vmatpush.msra.mxu0 %v3271
          %3482 = vmatpush.msra.mxu0 %v3269
          %3483 = vmatpush.msra.mxu0 %v3267
          %3484 = vmatpush.msra.mxu0 %v3265
          %3485 = vmatpush.msra.mxu0 %v3263
          %3486 = vmatpush.msra.mxu0 %v3261
          %3487 = vmatpush.msra.mxu0 %v3259
          %3488 = vmatmul.f32.gmra.mxu0 %v3254
          %v3489 = vpop.f32.mrf.mxu0
          %v3490 = vadd.f32 %v3389, %v3489
          %3491 = vdwg.mxu0
          %3492 = vmatpush.msra.mxu0 %v3321
          %3493 = vmatpush.msra.mxu0 %v3319
          %3494 = vmatpush.msra.mxu0 %v3317
          %3495 = vmatpush.msra.mxu0 %v3315
          %3496 = vmatpush.msra.mxu0 %v3313
          %3497 = vmatpush.msra.mxu0 %v3311
          %3498 = vmatpush.msra.mxu0 %v3309
          %3499 = vmatpush.msra.mxu0 %v3307
          %3500 = vmatpush.msra.mxu0 %v3305
          %3501 = vmatpush.msra.mxu0 %v3303
          %3502 = vmatpush.msra.mxu0 %v3301
          %3503 = vmatpush.msra.mxu0 %v3299
          %3504 = vmatpush.msra.mxu0 %v3297
          %3505 = vmatpush.msra.mxu0 %v3295
          %3506 = vmatpush.msra.mxu0 %v3293
          %3507 = vmatpush.msra.mxu0 %v3291
          %3508 = vmatmul.f32.gmra.mxu0 %v3255
          %v3509 = vpop.f32.mrf.mxu0
          %v3510 = vadd.f32 %v3490, %v3509
          %3511 = vdwg.mxu0
          %3512 = vmatpush.msra.mxu0 %v3353
          %3513 = vmatpush.msra.mxu0 %v3351
          %3514 = vmatpush.msra.mxu0 %v3349
          %3515 = vmatpush.msra.mxu0 %v3347
          %3516 = vmatpush.msra.mxu0 %v3345
          %3517 = vmatpush.msra.mxu0 %v3343
          %3518 = vmatpush.msra.mxu0 %v3341
          %3519 = vmatpush.msra.mxu0 %v3339
          %3520 = vmatpush.msra.mxu0 %v3337
          %3521 = vmatpush.msra.mxu0 %v3335
          %3522 = vmatpush.msra.mxu0 %v3333
          %3523 = vmatpush.msra.mxu0 %v3331
          %3524 = vmatpush.msra.mxu0 %v3329
          %3525 = vmatpush.msra.mxu0 %v3327
          %3526 = vmatpush.msra.mxu0 %v3325
          %3527 = vmatpush.msra.mxu0 %v3323
          %3528 = vmatmul.f32.gmra.mxu0 %v3256
          %v3529 = vpop.f32.mrf.mxu0
          %v3530 = vadd.f32 %v3510, %v3529
          %3531 = vdwg.mxu0
          %3532 = vmatpush.msra.mxu0 %v3385
          %3533 = vmatpush.msra.mxu0 %v3383
          %3534 = vmatpush.msra.mxu0 %v3381
          %3535 = vmatpush.msra.mxu0 %v3379
          %3536 = vmatpush.msra.mxu0 %v3377
          %3537 = vmatpush.msra.mxu0 %v3375
          %3538 = vmatpush.msra.mxu0 %v3373
          %3539 = vmatpush.msra.mxu0 %v3371
          %3540 = vmatpush.msra.mxu0 %v3369
          %3541 = vmatpush.msra.mxu0 %v3367
          %3542 = vmatpush.msra.mxu0 %v3365
          %3543 = vmatpush.msra.mxu0 %v3363
          %3544 = vmatpush.msra.mxu0 %v3361
          %3545 = vmatpush.msra.mxu0 %v3359
          %3546 = vmatpush.msra.mxu0 %v3357
          %3547 = vmatpush.msra.mxu0 %v3355
          %3548 = vmatmul.f32.gmra.mxu0 %v3257
          %v3549 = vpop.f32.mrf.mxu0
          %v3550 = vadd.f32 %v3530, %v3549
          %3551 = vdwg.mxu0
          %v3552 = vadd.f32 %v2910, %v3470
          %v3553 = vadd.f32 %v2911, %v3550
          %3554 = vst [vmem:[%s2909] sm:$0xff] %v3552
          %3555 = vst [vmem:[%s2909 + $0x8] sm:$0xff] %v3553
        $region193: #{tpu_custom_call.1} parent=115 // loop_footer
          %s2903 = sadd.s32 1, %s2899
        $region194: #{tpu_custom_call.1} parent=115 // loop_footer_branch
          %2898 = sbr.rel target = $region190
        $region195: #{tpu_custom_call.1} parent=115 // loop_exit
          _
        %s3556 = sand.u32 %s586, 1
        %s3557 = scalar_lea.sflag [#allocation4], %s3556
        %s3558 = sand.u32 %s586, 1
        %s3559 = smul.addr %s3558, 32
        %s3560 = scalar_lea.vmem [#allocation31], %s3559
        // Predicated region
        $region196: #{tpu_custom_call.1} parent=115 // pred_check
          %p3561 = pneg %p596
        $region197: #{tpu_custom_call.1} parent=115 // pred_check_branch
          %3563 = sbr.rel (%p3561) target = $region199
        $region198: #{tpu_custom_call.1} parent=115 // pred_region
          %3565 = vsyncadd %s3557, 0
          %s3566 = smul.addr %s54, 4
          %s3567 = smul.addr %s3566, 8
          %s3568 = scalar_lea.hbm %s24, %s3567
          %s3569 = sshll.u32 %s3560, 4
          %s3570 = int_to_ptr.vmem [resolvable:$true] %s3569
          %s3571 = sshll.u32 %s3568, 4
          %s3572 = int_to_ptr.hbm [resolvable:$true] %s3571
          %3577 = dma.vmem_to_hbm [thread:$0]  %s3570, 512, %s3572, %s3557, 256, 256, 16
        $region199: #{tpu_custom_call.1} parent=115 // pred_fallthru
          _
      $region116: #{tpu_custom_call.1} parent=5 // pred_fallthru
        _
      %p3578 = scmp.le.s32.totalorder 2, %s49
      // Predicated region
      $region200: #{tpu_custom_call.1} parent=5 // pred_check
        %p3579 = pneg %p3578
      $region201: #{tpu_custom_call.1} parent=5 // pred_check_branch
        %3581 = sbr.rel (%p3579) target = $region203
      $region202: #{tpu_custom_call.1} parent=5 // pred_region
        %s3582 = ssub.s32 %s49, 2
        // Predicated region
        $region204: #{tpu_custom_call.1} parent=202 // pred_check
          %p3583 = pneg %p602
        $region205: #{tpu_custom_call.1} parent=202 // pred_check_branch
          %3585 = sbr.rel (%p3583) target = $region207
        $region206: #{tpu_custom_call.1} parent=202 // pred_region
          %s3586 = sand.u32 %s587, 1
          %s3587 = scalar_lea.sflag [#allocation4], %s3586
          %s3588 = sand.u32 %s587, 1
          %s3589 = smul.addr %s3588, 32
          %s3590 = scalar_lea.vmem [#allocation31], %s3589
          %3592 = dma.done %s3587, 512
        $region207: #{tpu_custom_call.1} parent=202 // pred_fallthru
          _
      $region203: #{tpu_custom_call.1} parent=5 // pred_fallthru
        _
    $region6: #{tpu_custom_call.1} parent=1 // loop_footer
      %s53 = sadd.s32 1, %s49
    $region7: #{tpu_custom_call.1} parent=1 // loop_footer_branch
      %48 = sbr.rel target = $region3
    $region8: #{tpu_custom_call.1} parent=1 // loop_exit
      _
    %3593 = vsyncpa [#allocation3], 1
    %s3594 = scalar_lea.sflag [#allocation3], 1
    %3595 = vsyncpa %s3594, 1
    %3596 = vsyncpa [#allocation6], 1
    %s3597 = scalar_lea.sflag [#allocation6], 1
    %3598 = vsyncpa %s3597, 1
    %3599 = vsyncpa [#allocation9], 1
    %s3600 = scalar_lea.sflag [#allocation9], 1
    %3601 = vsyncpa %s3600, 1
    %3602 = vsyncpa [#allocation12], 1
    %3603 = vsyncpa [#allocation15], 1
    %3604 = vsyncpa [#allocation18], 1
    %3605 = vsyncpa [#allocation21], 1
    %3606 = vsyncpa [#allocation24], 1
    %3607 = vsyncpa [#allocation27], 1
    %3608 = vsyncpa [#allocation30], 1
    %3609 = vsyncpa [#allocation4], 1
    %s3610 = scalar_lea.sflag [#allocation4], 1
    %3611 = vsyncpa %s3610, 1

</llo_original>
